<compile_context>
chip_gen: v6e
topology: v6e:2x2x1
jax: 0.10.0
libtpu: 0.0.40
codegen_flags: <defaults>
</compile_context>

<pallas_src>
import functools
import math

import numpy as np
import jax
import jax.numpy as jnp
from jax import lax
from jax.experimental import pallas as pl
from jax.experimental.pallas import tpu as pltpu

# ---------------- synthetic hparams (small, consistent with the module) ----------------
TOKEN_EMBEDDING_SIZE = 32          # E
TOKEN_NUM = 8                      # number of style tokens
NUM_HEADS = 4
N_UNITS = 128                      # MultiHeadAttention n_units
SPLIT_SIZE = N_UNITS // NUM_HEADS  # 32
REF_ENC_FILTERS = [8, 8, 16]       # channels = [1, 8, 8, 16, E] -> 4 convs (3x3, stride 2, pad 1)
N_FRAMES_PER_STEP = 1
BN_EPS = 1e-5
N_MEL = 32                         # n_mel_channels of the reference spectrogram
N_TIME = 32                        # frames; 32 -> 2 after 4 stride-2 convs => GRU input = 2E

# per-conv-layer (H_in, W_in, C_in, C_out); H = n_mel axis, W = time axis.
CONV_CHANNELS = [N_FRAMES_PER_STEP] + REF_ENC_FILTERS + [TOKEN_EMBEDDING_SIZE]
CONV_DIMS = []
_hh, _ww = N_MEL, N_TIME
for _c in range(len(CONV_CHANNELS) - 1):
    CONV_DIMS.append((_hh, _ww, CONV_CHANNELS[_c], CONV_CHANNELS[_c + 1]))
    _hh //= 2
    _ww //= 2

# row offsets inside the packed "misc" weight operand (width 128)
_MISC_FC = 0
_MISC_WQ = _MISC_FC + TOKEN_EMBEDDING_SIZE
_MISC_KS = _MISC_WQ + TOKEN_EMBEDDING_SIZE
_MISC_VW = _MISC_KS + TOKEN_NUM
_MISC_TOK = _MISC_VW + NUM_HEADS * TOKEN_NUM
_MISC_ROWS = _MISC_TOK + TOKEN_NUM


# ======================= fused Pallas kernel =======================

def _gst_kernel(x_ref, r_ref, f1_ref, f2_ref, f3_ref, f4_ref,
                gw_ref, b_ref, m_ref, o_ref, *, batch):
    """Entire GST forward in VMEM.

    x_ref : (B*n_mel, T)           conv input, rows (b, h), cols (w, c) with C=1
    r_ref : (sum_l 3*B*Ho_l, 64)   stacked 0/1 row-selection matrices (zero padded cols)
    f*_ref: (3, W*Cin, Wo*Cout)    per-layer column-select + 3x3 weight + BN fold
    gw_ref: (3E, 3E*?)             rows [0:2E) = W_ih^T (rows permuted to conv col order),
                                   rows [2E:3E) = W_hh^T
    b_ref : (5, 128)               rows: b_ih, b_hh, fc_b, bQ' (convQ folded), fcA_b
    m_ref : (_MISC_ROWS, 128)      rows: fc_w | WQ' | K/sqrt(split) | vstack_h(V@W_A[h]) | tokens
    o_ref : (B, E)                 style embedding
    """
    B = batch
    E = TOKEN_EMBEDDING_SIZE
    U = N_UNITS
    T = TOKEN_NUM
    NH = NUM_HEADS
    SP = SPLIT_SIZE
    f_refs = (f1_ref, f2_ref, f3_ref, f4_ref)

    # ---- conv stack: out = relu(sum_kh R_kh @ A @ F_kh), pure MXU matmuls ----
    a = x_ref[...]
    roff = 0
    for l, (H, W, Cin, Cout) in enumerate(CONV_DIMS):
        Ho, Wo = H // 2, W // 2
        rsel = r_ref[roff:roff + 3 * B * Ho, :B * H]
        roff += 3 * B * Ho
        ball = jnp.dot(rsel, a, preferred_element_type=jnp.float32)   # (3*B*Ho, W*Cin)
        acc = jnp.dot(ball[0:B * Ho, :], f_refs[l][0],
                      preferred_element_type=jnp.float32)
        for kh in range(1, 3):
            acc = acc + jnp.dot(ball[kh * B * Ho:(kh + 1) * B * Ho, :], f_refs[l][kh],
                                preferred_element_type=jnp.float32)
        a = jnp.maximum(acc, 0.0)                                      # (B*Ho, Wo*Cout)
    # last layer's R emits rows in (step, batch) order -> a: (S*B, Wp*E), cols (w, c)
    S = CONV_DIMS[-1][0] // 2

    # ---- GRU (1 layer, batch_first, h0 = 0); input matmul hoisted over time ----
    wih = gw_ref[0:2 * E, :]
    whh = gw_ref[2 * E:3 * E, :]
    b_ih = b_ref[0:1, :3 * E]
    b_hh = b_ref[1:2, :3 * E]
    gi_all = jnp.dot(a, wih, preferred_element_type=jnp.float32) + b_ih   # (S*B, 3E)
    h = jnp.zeros((B, E), jnp.float32)
    for s in range(S):                                   # S = 2: static unroll
        gi = gi_all[s * B:(s + 1) * B, :]
        gh = jnp.dot(h, whh, preferred_element_type=jnp.float32) + b_hh
        r = jax.nn.sigmoid(gi[:, :E] + gh[:, :E])
        z = jax.nn.sigmoid(gi[:, E:2 * E] + gh[:, E:2 * E])
        n = jnp.tanh(gi[:, 2 * E:] + r * gh[:, 2 * E:])
        h = (1.0 - z) * n + z * h

    # ---- ReferenceEncoder fc + tanh ----
    ref_emb = jnp.tanh(jnp.dot(h, m_ref[_MISC_FC:_MISC_FC + E, :E],
                               preferred_element_type=jnp.float32) + b_ref[2:3, :E])

    # ---- MultiHeadAttention: Q (conv_Q folded into fc_Q), K/V precomputed ----
    q = jnp.tanh(jnp.dot(ref_emb, m_ref[_MISC_WQ:_MISC_WQ + E, :U],
                         preferred_element_type=jnp.float32) + b_ref[3:4, :U])   # (B, U)
    k_s = m_ref[_MISC_KS:_MISC_KS + T, :U]               # (T, U), pre-scaled by 1/sqrt(split)
    # batched (heads*B, T) score block -> ONE max/exp/sum softmax
    scores = jnp.concatenate(
        [lax.dot_general(q[:, hh * SP:(hh + 1) * SP], k_s[:, hh * SP:(hh + 1) * SP],
                         (((1,), (1,)), ((), ())), preferred_element_type=jnp.float32)
         for hh in range(NH)], axis=0)                    # (NH*B, T)
    mx = jnp.max(scores, axis=-1, keepdims=True)
    ex = jnp.exp(scores - mx)
    attn = ex * pl.reciprocal(jnp.sum(ex, axis=-1, keepdims=True), approx=True)

    # logits = tanh(sum_h attn_h @ (V @ W_A[h]) + b_A)  -- V@W_A pre-folded per head
    vw = m_ref[_MISC_VW:_MISC_VW + NH * T, :T]            # (NH*T, T)
    logits = jnp.dot(attn[0:B, :], vw[0:T, :], preferred_element_type=jnp.float32)
    for hhd in range(1, NH):
        logits = logits + jnp.dot(attn[hhd * B:(hhd + 1) * B, :],
                                  vw[hhd * T:(hhd + 1) * T, :],
                                  preferred_element_type=jnp.float32)
    logits = jnp.tanh(logits + b_ref[4:5, :T])            # (B, token_num)

    # ---- GST: token softmax -> weighted token sum -> tanh ----
    tok = m_ref[_MISC_TOK:_MISC_TOK + T, :E]              # (token_num, E)
    mx2 = jnp.max(logits, axis=-1, keepdims=True)
    ex2 = jnp.exp(logits - mx2)
    wtok = ex2 * pl.reciprocal(jnp.sum(ex2, axis=-1, keepdims=True), approx=True)
    o_ref[...] = jnp.tanh(jnp.dot(wtok, tok, preferred_element_type=jnp.float32))


# ======================= wrapper =======================

@jax.jit
def gst_forward(packed, ref):
    """GST forward, eval mode, ref_mode=1.  ref:(B, T, n_mel) -> (B, 1, E)."""
    B, Tin, M = ref.shape
    assert M == N_MEL and Tin == N_TIME, (M, Tin)
    # PyTorch: x.transpose(1,2).unsqueeze(1) == NCHW (B,1,n_mel,T); our 2-D layout is
    # rows=(b, h=n_mel), cols=(w=t, c) with C=1 -> a single transpose+reshape of the input.
    x2d = jnp.transpose(ref, (0, 2, 1)).reshape(B * M, Tin).astype(jnp.float32)
    kernel = functools.partial(_gst_kernel, batch=B)
    out = pl.pallas_call(
        kernel,
        out_shape=jax.ShapeDtypeStruct((B, TOKEN_EMBEDDING_SIZE), jnp.float32),
        in_specs=[pl.BlockSpec(memory_space=pltpu.MemorySpace.VMEM)] * 9,
        out_specs=pl.BlockSpec(memory_space=pltpu.MemorySpace.VMEM),
    )(x2d, packed["rpack"], packed["f"][0], packed["f"][1], packed["f"][2], packed["f"][3],
      packed["gru_w"], packed["bias"], packed["misc"])
    return out[:, None, :]


# ======================= parameter prep (one-time, host side) =======================

def init_params(key):
    """PyTorch-layout parameters (deterministic)."""
    E = TOKEN_EMBEDDING_SIZE
    keys = iter(jax.random.split(key, 32))

    def nrm(shape, std):
        return std * jax.random.normal(next(keys), shape, jnp.float32)

    p = {}
    conv_w = []
    for c in range(len(CONV_CHANNELS) - 1):
        cin, cout = CONV_CHANNELS[c], CONV_CHANNELS[c + 1]
        conv_w.append(nrm((cout, cin, 3, 3), 1.0 / math.sqrt(cin * 9)))   # OIHW, bias=False
    p["conv_w"] = conv_w
    I = 2 * E
    p["gru_wih_t"] = nrm((I, 3 * E), 1.0 / math.sqrt(I))       # rows = PyTorch feature order (c*W'+w)
    p["gru_whh_t"] = nrm((E, 3 * E), 1.0 / math.sqrt(E))
    p["gru_b_ih"] = nrm((1, 3 * E), 0.05)
    p["gru_b_hh"] = nrm((1, 3 * E), 0.05)
    p["fc_w_t"] = nrm((E, E), 1.0 / math.sqrt(E))
    p["fc_b"] = nrm((1, E), 0.05)
    p["convQ_w_t"] = nrm((E, N_UNITS), 1.0 / math.sqrt(E))
    p["convQ_b"] = nrm((1, N_UNITS), 0.05)
    p["convK_w_t"] = nrm((E, N_UNITS), 1.0 / math.sqrt(E))
    p["convK_b"] = nrm((1, N_UNITS), 0.05)
    p["fcQ_w_t"] = nrm((N_UNITS, N_UNITS), 1.0 / math.sqrt(N_UNITS))
    p["fcQ_b"] = nrm((1, N_UNITS), 0.05)
    p["fcK_w_t"] = nrm((N_UNITS, N_UNITS), 1.0 / math.sqrt(N_UNITS))
    p["fcK_b"] = nrm((1, N_UNITS), 0.05)
    p["fcV_w_t"] = nrm((E, SPLIT_SIZE), 1.0 / math.sqrt(E))
    p["fcV_b"] = nrm((1, SPLIT_SIZE), 0.05)
    p["fcA_w_t"] = nrm((N_UNITS, TOKEN_NUM), 1.0 / math.sqrt(N_UNITS))
    p["fcA_b"] = nrm((1, TOKEN_NUM), 0.05)
    p["token_embedding"] = nrm((TOKEN_NUM, E), 0.5)
    return p


def pack_params(params, batch):
    """Fold/precompute everything the kernel needs into 8 packed operands."""
    E = TOKEN_EMBEDDING_SIZE
    B = batch
    bn_scale = 1.0 / math.sqrt(1.0 + BN_EPS)   # fresh-init eval-mode BN fold, conv bias=False

    # ---- conv row-selection (R) and column/weight (F) matrices ----
    n_layers = len(CONV_DIMS)
    r_rows = sum(3 * B * (H // 2) for H, _, _, _ in CONV_DIMS)
    max_bh = max(B * H for H, _, _, _ in CONV_DIMS)
    rpack = np.zeros((r_rows, max_bh), np.float32)
    fpacks = []
    roff = 0
    for l, (H, W, Cin, Cout) in enumerate(CONV_DIMS):
        Ho, Wo = H // 2, W // 2
        last = (l == n_layers - 1)
        for kh in range(3):
            for b in range(B):
                for i in range(Ho):
                    hsrc = 2 * i + kh - 1
                    if 0 <= hsrc < H:
                        # last layer emits rows in (step, batch) order for the GRU
                        row = i * B + b if last else b * Ho + i
                        rpack[roff + kh * B * Ho + row, b * H + hsrc] = 1.0
        roff += 3 * B * Ho
        w = np.asarray(params["conv_w"][l])                 # (Cout, Cin, 3, 3) OIHW
        f = np.zeros((3, W * Cin, Wo * Cout), np.float32)
        for kh in range(3):
            for kw in range(3):
                for j in range(Wo):
                    wsrc = 2 * j + kw - 1
                    if 0 <= wsrc < W:
                        f[kh, wsrc * Cin:(wsrc + 1) * Cin, j * Cout:(j + 1) * Cout] = \
                            w[:, :, kh, kw].T * bn_scale
        fpacks.append(jnp.asarray(f))

    # ---- GRU weights: permute W_ih rows from PyTorch (c*W'+w) to conv-output (w*E+c) order
    Wp = CONV_DIMS[-1][1] // 2
    assert Wp * E == 2 * E and CONV_DIMS[-1][3] == E
    perm = np.array([(i % E) * Wp + (i // E) for i in range(Wp * E)], np.int64)
    wih_ours = np.asarray(params["gru_wih_t"])[perm, :]
    gru_w = np.concatenate([wih_ours, np.asarray(params["gru_whh_t"])], axis=0)   # (3E, 3E)

    # ---- attention folds: conv_Q into fc_Q; K (pre-scaled) and V@W_A precomputed ----
    wq = np.asarray(params["convQ_w_t"]) @ np.asarray(params["fcQ_w_t"])           # (E, U)
    bq = np.asarray(params["convQ_b"]) @ np.asarray(params["fcQ_w_t"]) + np.asarray(params["fcQ_b"])
    tok = np.asarray(params["token_embedding"])
    k_full = np.tanh((tok @ np.asarray(params["convK_w_t"]) + np.asarray(params["convK_b"]))
                     @ np.asarray(params["fcK_w_t"]) + np.asarray(params["fcK_b"]))
    k_s = (k_full / math.sqrt(SPLIT_SIZE)).astype(np.float32)                      # (T, U)
    v_pre = np.tanh(tok @ np.asarray(params["fcV_w_t"]) + np.asarray(params["fcV_b"]))  # (T, split)
    faw = np.asarray(params["fcA_w_t"])                                            # (U, token_num)
    vw = np.concatenate([v_pre @ faw[h * SPLIT_SIZE:(h + 1) * SPLIT_SIZE, :]
                         for h in range(NUM_HEADS)], axis=0)                       # (NH*T, token_num)

    bias = np.zeros((5, 128), np.float32)
    bias[0, :3 * E] = np.asarray(params["gru_b_ih"]).reshape(-1)
    bias[1, :3 * E] = np.asarray(params["gru_b_hh"]).reshape(-1)
    bias[2, :E] = np.asarray(params["fc_b"]).reshape(-1)
    bias[3, :N_UNITS] = bq.reshape(-1)
    bias[4, :TOKEN_NUM] = np.asarray(params["fcA_b"]).reshape(-1)

    misc = np.zeros((_MISC_ROWS, 128), np.float32)
    misc[_MISC_FC:_MISC_FC + E, :E] = np.asarray(params["fc_w_t"])
    misc[_MISC_WQ:_MISC_WQ + E, :N_UNITS] = wq
    misc[_MISC_KS:_MISC_KS + TOKEN_NUM, :N_UNITS] = k_s
    misc[_MISC_VW:_MISC_VW + NUM_HEADS * TOKEN_NUM, :TOKEN_NUM] = vw
    misc[_MISC_TOK:_MISC_TOK + TOKEN_NUM, :E] = tok

    return {"rpack": jnp.asarray(rpack), "f": tuple(fpacks),
            "gru_w": jnp.asarray(gru_w), "bias": jnp.asarray(bias),
            "misc": jnp.asarray(misc)}


# ======================= pure-JAX reference (PyTorch math, no Pallas) =======================

def gst_forward_ref(params, ref):
    E = TOKEN_EMBEDDING_SIZE
    bn_scale = 1.0 / math.sqrt(1.0 + BN_EPS)
    B = ref.shape[0]
    x = jnp.transpose(ref, (0, 2, 1))[:, None, :, :].astype(jnp.float32)   # (B,1,n_mel,T) NCHW
    for w in params["conv_w"]:
        x = lax.conv_general_dilated(x, w, (2, 2), ((1, 1), (1, 1)),
                                     dimension_numbers=("NCHW", "OIHW", "NCHW"))
        x = jnp.maximum(x * bn_scale, 0.0)
    Bq, C, Hp, Wp = x.shape
    y = jnp.transpose(x, (0, 2, 1, 3)).reshape(Bq, Hp, C * Wp)             # (B, S, E*W')
    h = jnp.zeros((B, E), jnp.float32)
    for s in range(Hp):
        gi = y[:, s, :] @ params["gru_wih_t"] + params["gru_b_ih"]
        gh = h @ params["gru_whh_t"] + params["gru_b_hh"]
        r = jax.nn.sigmoid(gi[:, :E] + gh[:, :E])
        z = jax.nn.sigmoid(gi[:, E:2 * E] + gh[:, E:2 * E])
        n = jnp.tanh(gi[:, 2 * E:] + r * gh[:, 2 * E:])
        h = (1.0 - z) * n + z * h
    ref_emb = jnp.tanh(h @ params["fc_w_t"] + params["fc_b"])
    tok = params["token_embedding"]
    q = jnp.tanh((ref_emb @ params["convQ_w_t"] + params["convQ_b"])
                 @ params["fcQ_w_t"] + params["fcQ_b"])
    k = jnp.tanh((tok @ params["convK_w_t"] + params["convK_b"])
                 @ params["fcK_w_t"] + params["fcK_b"])
    v = jnp.tanh(tok @ params["fcV_w_t"] + params["fcV_b"])
    scale = 1.0 / math.sqrt(SPLIT_SIZE)
    outs = []
    for hh in range(NUM_HEADS):
        qh = q[:, hh * SPLIT_SIZE:(hh + 1) * SPLIT_SIZE]
        kh = k[:, hh * SPLIT_SIZE:(hh + 1) * SPLIT_SIZE]
        a = jax.nn.softmax((qh @ kh.T) * scale, axis=-1)
        outs.append(a @ v)
    yv = jnp.concatenate(outs, axis=-1)
    logits = jnp.tanh(yv @ params["fcA_w_t"] + params["fcA_b"])
    wtok = jax.nn.softmax(logits, axis=-1)
    return jnp.tanh(wtok @ tok)[:, None, :]


# ======================= main =======================

if __name__ == "__main__":
    key = jax.random.PRNGKey(0)
    pkey, xkey = jax.random.split(key)
    params = init_params(pkey)

    B = 2
    # ref: (Batch, Time, n_mel); T=n_mel=32 so the GRU input size is 2*E after 4 stride-2 convs.
    ref = jax.random.normal(xkey, (B, N_TIME, N_MEL), jnp.float32)

    packed = pack_params(params, B)                       # one-time parameter prep
    out = jax.block_until_ready(gst_forward(packed, ref))

    assert out.shape == (B, 1, TOKEN_EMBEDDING_SIZE), out.shape
    assert bool(jnp.all(jnp.isfinite(out)))

    # numerical sanity check vs an independent pure-JAX/XLA implementation
    with jax.default_matmul_precision("highest"):
        expect = jax.jit(gst_forward_ref)(params, ref)
    expect = jax.block_until_ready(expect)
    max_err = float(jnp.max(jnp.abs(out - expect)))
    assert max_err < 5e-3, f"mismatch vs reference: {max_err}"

    print("KERNEL_OK")
</pallas_src>

<mosaic_0001>
module attributes {stable_mosaic.version = 11 : i64} {
  func.func @_gst_kernel(%arg0: memref<64x32xf32, #tpu.memory_space<vmem>>, %arg1: memref<180x64xf32, #tpu.memory_space<vmem>>, %arg2: memref<3x32x128xf32, #tpu.memory_space<vmem>>, %arg3: memref<3x128x64xf32, #tpu.memory_space<vmem>>, %arg4: memref<3x64x64xf32, #tpu.memory_space<vmem>>, %arg5: memref<3x64x64xf32, #tpu.memory_space<vmem>>, %arg6: memref<96x96xf32, #tpu.memory_space<vmem>>, %arg7: memref<5x128xf32, #tpu.memory_space<vmem>>, %arg8: memref<112x128xf32, #tpu.memory_space<vmem>>, %arg9: memref<2x32xf32, #tpu.memory_space<vmem>>) attributes {dimension_semantics = [], scalar_prefetch = 0 : i64, scratch_operands = 0 : i64, tpu.core_type = #tpu.core_type<tc>} {
    %c0 = arith.constant 0 : index
    %c0_0 = arith.constant 0 : index
    %0 = vector.load %arg0[%c0, %c0_0] : memref<64x32xf32, #tpu.memory_space<vmem>>, vector<64x32xf32>
    %c0_1 = arith.constant 0 : index
    %c0_2 = arith.constant 0 : index
    %1 = vector.load %arg1[%c0_1, %c0_2] : memref<180x64xf32, #tpu.memory_space<vmem>>, vector<96x64xf32>
    %cst = arith.constant dense<0.000000e+00> : vector<96x32xf32>
    %2 = tpu.matmul %1, %0, %cst {dimension_numbers = #tpu.dot_dimension_numbers<[1], [0], [0], [1], [0, 0, 1, 1], [], []>} : vector<96x64xf32>, vector<64x32xf32>, vector<96x32xf32> -> vector<96x32xf32>
    %3 = vector.extract_strided_slice %2 {offsets = [0, 0], sizes = [32, 32], strides = [1, 1]} : vector<96x32xf32> to vector<32x32xf32>
    %c0_3 = arith.constant 0 : index
    %c0_4 = arith.constant 0 : index
    %c0_5 = arith.constant 0 : index
    %4 = vector.load %arg2[%c0_3, %c0_4, %c0_5] : memref<3x32x128xf32, #tpu.memory_space<vmem>>, vector<1x32x128xf32>
    %5 = vector.shape_cast %4 : vector<1x32x128xf32> to vector<32x128xf32>
    %cst_6 = arith.constant dense<0.000000e+00> : vector<32x128xf32>
    %6 = tpu.matmul %3, %5, %cst_6 {dimension_numbers = #tpu.dot_dimension_numbers<[1], [0], [0], [1], [0, 0, 1, 1], [], []>} : vector<32x32xf32>, vector<32x128xf32>, vector<32x128xf32> -> vector<32x128xf32>
    %7 = vector.extract_strided_slice %2 {offsets = [32, 0], sizes = [32, 32], strides = [1, 1]} : vector<96x32xf32> to vector<32x32xf32>
    %c1 = arith.constant 1 : index
    %c0_7 = arith.constant 0 : index
    %c0_8 = arith.constant 0 : index
    %8 = vector.load %arg2[%c1, %c0_7, %c0_8] : memref<3x32x128xf32, #tpu.memory_space<vmem>>, vector<1x32x128xf32>
    %9 = vector.shape_cast %8 : vector<1x32x128xf32> to vector<32x128xf32>
    %cst_9 = arith.constant dense<0.000000e+00> : vector<32x128xf32>
    %10 = tpu.matmul %7, %9, %cst_9 {dimension_numbers = #tpu.dot_dimension_numbers<[1], [0], [0], [1], [0, 0, 1, 1], [], []>} : vector<32x32xf32>, vector<32x128xf32>, vector<32x128xf32> -> vector<32x128xf32>
    %11 = arith.addf %6, %10 : vector<32x128xf32>
    %12 = vector.extract_strided_slice %2 {offsets = [64, 0], sizes = [32, 32], strides = [1, 1]} : vector<96x32xf32> to vector<32x32xf32>
    %c2 = arith.constant 2 : index
    %c0_10 = arith.constant 0 : index
    %c0_11 = arith.constant 0 : index
    %13 = vector.load %arg2[%c2, %c0_10, %c0_11] : memref<3x32x128xf32, #tpu.memory_space<vmem>>, vector<1x32x128xf32>
    %14 = vector.shape_cast %13 : vector<1x32x128xf32> to vector<32x128xf32>
    %cst_12 = arith.constant dense<0.000000e+00> : vector<32x128xf32>
    %15 = tpu.matmul %12, %14, %cst_12 {dimension_numbers = #tpu.dot_dimension_numbers<[1], [0], [0], [1], [0, 0, 1, 1], [], []>} : vector<32x32xf32>, vector<32x128xf32>, vector<32x128xf32> -> vector<32x128xf32>
    %16 = arith.addf %11, %15 : vector<32x128xf32>
    %cst_13 = arith.constant 0.000000e+00 : f32
    %17 = vector.broadcast %cst_13 : f32 to vector<32x128xf32>
    %18 = arith.maximumf %16, %17 : vector<32x128xf32>
    %c96 = arith.constant 96 : index
    %c0_14 = arith.constant 0 : index
    %19 = vector.load %arg1[%c96, %c0_14] : memref<180x64xf32, #tpu.memory_space<vmem>>, vector<48x32xf32>
    %cst_15 = arith.constant dense<0.000000e+00> : vector<48x128xf32>
    %20 = tpu.matmul %19, %18, %cst_15 {dimension_numbers = #tpu.dot_dimension_numbers<[1], [0], [0], [1], [0, 0, 1, 1], [], []>} : vector<48x32xf32>, vector<32x128xf32>, vector<48x128xf32> -> vector<48x128xf32>
    %21 = vector.extract_strided_slice %20 {offsets = [0, 0], sizes = [16, 128], strides = [1, 1]} : vector<48x128xf32> to vector<16x128xf32>
    %c0_16 = arith.constant 0 : index
    %c0_17 = arith.constant 0 : index
    %c0_18 = arith.constant 0 : index
    %22 = vector.load %arg3[%c0_16, %c0_17, %c0_18] : memref<3x128x64xf32, #tpu.memory_space<vmem>>, vector<1x128x64xf32>
    %23 = vector.shape_cast %22 : vector<1x128x64xf32> to vector<128x64xf32>
    %cst_19 = arith.constant dense<0.000000e+00> : vector<16x64xf32>
    %24 = tpu.matmul %21, %23, %cst_19 {dimension_numbers = #tpu.dot_dimension_numbers<[1], [0], [0], [1], [0, 0, 1, 1], [], []>} : vector<16x128xf32>, vector<128x64xf32>, vector<16x64xf32> -> vector<16x64xf32>
    %25 = vector.extract_strided_slice %20 {offsets = [16, 0], sizes = [16, 128], strides = [1, 1]} : vector<48x128xf32> to vector<16x128xf32>
    %c1_20 = arith.constant 1 : index
    %c0_21 = arith.constant 0 : index
    %c0_22 = arith.constant 0 : index
    %26 = vector.load %arg3[%c1_20, %c0_21, %c0_22] : memref<3x128x64xf32, #tpu.memory_space<vmem>>, vector<1x128x64xf32>
    %27 = vector.shape_cast %26 : vector<1x128x64xf32> to vector<128x64xf32>
    %cst_23 = arith.constant dense<0.000000e+00> : vector<16x64xf32>
    %28 = tpu.matmul %25, %27, %cst_23 {dimension_numbers = #tpu.dot_dimension_numbers<[1], [0], [0], [1], [0, 0, 1, 1], [], []>} : vector<16x128xf32>, vector<128x64xf32>, vector<16x64xf32> -> vector<16x64xf32>
    %29 = arith.addf %24, %28 : vector<16x64xf32>
    %30 = vector.extract_strided_slice %20 {offsets = [32, 0], sizes = [16, 128], strides = [1, 1]} : vector<48x128xf32> to vector<16x128xf32>
    %c2_24 = arith.constant 2 : index
    %c0_25 = arith.constant 0 : index
    %c0_26 = arith.constant 0 : index
    %31 = vector.load %arg3[%c2_24, %c0_25, %c0_26] : memref<3x128x64xf32, #tpu.memory_space<vmem>>, vector<1x128x64xf32>
    %32 = vector.shape_cast %31 : vector<1x128x64xf32> to vector<128x64xf32>
    %cst_27 = arith.constant dense<0.000000e+00> : vector<16x64xf32>
    %33 = tpu.matmul %30, %32, %cst_27 {dimension_numbers = #tpu.dot_dimension_numbers<[1], [0], [0], [1], [0, 0, 1, 1], [], []>} : vector<16x128xf32>, vector<128x64xf32>, vector<16x64xf32> -> vector<16x64xf32>
    %34 = arith.addf %29, %33 : vector<16x64xf32>
    %cst_28 = arith.constant 0.000000e+00 : f32
    %35 = vector.broadcast %cst_28 : f32 to vector<16x64xf32>
    %36 = arith.maximumf %34, %35 : vector<16x64xf32>
    %c144 = arith.constant 144 : index
    %c0_29 = arith.constant 0 : index
    %37 = vector.load %arg1[%c144, %c0_29] : memref<180x64xf32, #tpu.memory_space<vmem>>, vector<24x16xf32>
    %cst_30 = arith.constant dense<0.000000e+00> : vector<24x64xf32>
    %38 = tpu.matmul %37, %36, %cst_30 {dimension_numbers = #tpu.dot_dimension_numbers<[1], [0], [0], [1], [0, 0, 1, 1], [], []>} : vector<24x16xf32>, vector<16x64xf32>, vector<24x64xf32> -> vector<24x64xf32>
    %39 = vector.extract_strided_slice %38 {offsets = [0, 0], sizes = [8, 64], strides = [1, 1]} : vector<24x64xf32> to vector<8x64xf32>
    %c0_31 = arith.constant 0 : index
    %c0_32 = arith.constant 0 : index
    %c0_33 = arith.constant 0 : index
    %40 = vector.load %arg4[%c0_31, %c0_32, %c0_33] : memref<3x64x64xf32, #tpu.memory_space<vmem>>, vector<1x64x64xf32>
    %41 = vector.shape_cast %40 : vector<1x64x64xf32> to vector<64x64xf32>
    %cst_34 = arith.constant dense<0.000000e+00> : vector<8x64xf32>
    %42 = tpu.matmul %39, %41, %cst_34 {dimension_numbers = #tpu.dot_dimension_numbers<[1], [0], [0], [1], [0, 0, 1, 1], [], []>} : vector<8x64xf32>, vector<64x64xf32>, vector<8x64xf32> -> vector<8x64xf32>
    %43 = vector.extract_strided_slice %38 {offsets = [8, 0], sizes = [8, 64], strides = [1, 1]} : vector<24x64xf32> to vector<8x64xf32>
    %c1_35 = arith.constant 1 : index
    %c0_36 = arith.constant 0 : index
    %c0_37 = arith.constant 0 : index
    %44 = vector.load %arg4[%c1_35, %c0_36, %c0_37] : memref<3x64x64xf32, #tpu.memory_space<vmem>>, vector<1x64x64xf32>
    %45 = vector.shape_cast %44 : vector<1x64x64xf32> to vector<64x64xf32>
    %cst_38 = arith.constant dense<0.000000e+00> : vector<8x64xf32>
    %46 = tpu.matmul %43, %45, %cst_38 {dimension_numbers = #tpu.dot_dimension_numbers<[1], [0], [0], [1], [0, 0, 1, 1], [], []>} : vector<8x64xf32>, vector<64x64xf32>, vector<8x64xf32> -> vector<8x64xf32>
    %47 = arith.addf %42, %46 : vector<8x64xf32>
    %48 = vector.extract_strided_slice %38 {offsets = [16, 0], sizes = [8, 64], strides = [1, 1]} : vector<24x64xf32> to vector<8x64xf32>
    %c2_39 = arith.constant 2 : index
    %c0_40 = arith.constant 0 : index
    %c0_41 = arith.constant 0 : index
    %49 = vector.load %arg4[%c2_39, %c0_40, %c0_41] : memref<3x64x64xf32, #tpu.memory_space<vmem>>, vector<1x64x64xf32>
    %50 = vector.shape_cast %49 : vector<1x64x64xf32> to vector<64x64xf32>
    %cst_42 = arith.constant dense<0.000000e+00> : vector<8x64xf32>
    %51 = tpu.matmul %48, %50, %cst_42 {dimension_numbers = #tpu.dot_dimension_numbers<[1], [0], [0], [1], [0, 0, 1, 1], [], []>} : vector<8x64xf32>, vector<64x64xf32>, vector<8x64xf32> -> vector<8x64xf32>
    %52 = arith.addf %47, %51 : vector<8x64xf32>
    %cst_43 = arith.constant 0.000000e+00 : f32
    %53 = vector.broadcast %cst_43 : f32 to vector<8x64xf32>
    %54 = arith.maximumf %52, %53 : vector<8x64xf32>
    %c168 = arith.constant 168 : index
    %c0_44 = arith.constant 0 : index
    %55 = vector.load %arg1[%c168, %c0_44] : memref<180x64xf32, #tpu.memory_space<vmem>>, vector<12x8xf32>
    %cst_45 = arith.constant dense<0.000000e+00> : vector<12x64xf32>
    %56 = tpu.matmul %55, %54, %cst_45 {dimension_numbers = #tpu.dot_dimension_numbers<[1], [0], [0], [1], [0, 0, 1, 1], [], []>} : vector<12x8xf32>, vector<8x64xf32>, vector<12x64xf32> -> vector<12x64xf32>
    %57 = vector.extract_strided_slice %56 {offsets = [0, 0], sizes = [4, 64], strides = [1, 1]} : vector<12x64xf32> to vector<4x64xf32>
    %c0_46 = arith.constant 0 : index
    %c0_47 = arith.constant 0 : index
    %c0_48 = arith.constant 0 : index
    %58 = vector.load %arg5[%c0_46, %c0_47, %c0_48] : memref<3x64x64xf32, #tpu.memory_space<vmem>>, vector<1x64x64xf32>
    %59 = vector.shape_cast %58 : vector<1x64x64xf32> to vector<64x64xf32>
    %cst_49 = arith.constant dense<0.000000e+00> : vector<4x64xf32>
    %60 = tpu.matmul %57, %59, %cst_49 {dimension_numbers = #tpu.dot_dimension_numbers<[1], [0], [0], [1], [0, 0, 1, 1], [], []>} : vector<4x64xf32>, vector<64x64xf32>, vector<4x64xf32> -> vector<4x64xf32>
    %61 = vector.extract_strided_slice %56 {offsets = [4, 0], sizes = [4, 64], strides = [1, 1]} : vector<12x64xf32> to vector<4x64xf32>
    %c1_50 = arith.constant 1 : index
    %c0_51 = arith.constant 0 : index
    %c0_52 = arith.constant 0 : index
    %62 = vector.load %arg5[%c1_50, %c0_51, %c0_52] : memref<3x64x64xf32, #tpu.memory_space<vmem>>, vector<1x64x64xf32>
    %63 = vector.shape_cast %62 : vector<1x64x64xf32> to vector<64x64xf32>
    %cst_53 = arith.constant dense<0.000000e+00> : vector<4x64xf32>
    %64 = tpu.matmul %61, %63, %cst_53 {dimension_numbers = #tpu.dot_dimension_numbers<[1], [0], [0], [1], [0, 0, 1, 1], [], []>} : vector<4x64xf32>, vector<64x64xf32>, vector<4x64xf32> -> vector<4x64xf32>
    %65 = arith.addf %60, %64 : vector<4x64xf32>
    %66 = vector.extract_strided_slice %56 {offsets = [8, 0], sizes = [4, 64], strides = [1, 1]} : vector<12x64xf32> to vector<4x64xf32>
    %c2_54 = arith.constant 2 : index
    %c0_55 = arith.constant 0 : index
    %c0_56 = arith.constant 0 : index
    %67 = vector.load %arg5[%c2_54, %c0_55, %c0_56] : memref<3x64x64xf32, #tpu.memory_space<vmem>>, vector<1x64x64xf32>
    %68 = vector.shape_cast %67 : vector<1x64x64xf32> to vector<64x64xf32>
    %cst_57 = arith.constant dense<0.000000e+00> : vector<4x64xf32>
    %69 = tpu.matmul %66, %68, %cst_57 {dimension_numbers = #tpu.dot_dimension_numbers<[1], [0], [0], [1], [0, 0, 1, 1], [], []>} : vector<4x64xf32>, vector<64x64xf32>, vector<4x64xf32> -> vector<4x64xf32>
    %70 = arith.addf %65, %69 : vector<4x64xf32>
    %cst_58 = arith.constant 0.000000e+00 : f32
    %71 = vector.broadcast %cst_58 : f32 to vector<4x64xf32>
    %72 = arith.maximumf %70, %71 : vector<4x64xf32>
    %c0_59 = arith.constant 0 : index
    %c0_60 = arith.constant 0 : index
    %73 = vector.load %arg6[%c0_59, %c0_60] : memref<96x96xf32, #tpu.memory_space<vmem>>, vector<64x96xf32>
    %c64 = arith.constant 64 : index
    %c0_61 = arith.constant 0 : index
    %74 = vector.load %arg6[%c64, %c0_61] : memref<96x96xf32, #tpu.memory_space<vmem>>, vector<32x96xf32>
    %c0_62 = arith.constant 0 : index
    %c0_63 = arith.constant 0 : index
    %75 = vector.load %arg7[%c0_62, %c0_63] : memref<5x128xf32, #tpu.memory_space<vmem>>, vector<1x96xf32>
    %c1_64 = arith.constant 1 : index
    %c0_65 = arith.constant 0 : index
    %76 = vector.load %arg7[%c1_64, %c0_65] : memref<5x128xf32, #tpu.memory_space<vmem>>, vector<1x96xf32>
    %cst_66 = arith.constant dense<0.000000e+00> : vector<4x96xf32>
    %77 = tpu.matmul %72, %73, %cst_66 {dimension_numbers = #tpu.dot_dimension_numbers<[1], [0], [0], [1], [0, 0, 1, 1], [], []>} : vector<4x64xf32>, vector<64x96xf32>, vector<4x96xf32> -> vector<4x96xf32>
    %78 = vector.broadcast %75 : vector<1x96xf32> to vector<4x96xf32>
    %79 = arith.addf %77, %78 : vector<4x96xf32>
    %cst_67 = arith.constant 0.000000e+00 : f32
    %80 = vector.broadcast %cst_67 : f32 to vector<2x32xf32>
    %81 = vector.extract_strided_slice %79 {offsets = [0, 0], sizes = [2, 96], strides = [1, 1]} : vector<4x96xf32> to vector<2x96xf32>
    %cst_68 = arith.constant dense<0.000000e+00> : vector<2x96xf32>
    %82 = tpu.matmul %80, %74, %cst_68 {dimension_numbers = #tpu.dot_dimension_numbers<[1], [0], [0], [1], [0, 0, 1, 1], [], []>} : vector<2x32xf32>, vector<32x96xf32>, vector<2x96xf32> -> vector<2x96xf32>
    %83 = vector.broadcast %76 : vector<1x96xf32> to vector<2x96xf32>
    %84 = arith.addf %82, %83 : vector<2x96xf32>
    %85 = vector.extract_strided_slice %81 {offsets = [0, 0], sizes = [2, 32], strides = [1, 1]} : vector<2x96xf32> to vector<2x32xf32>
    %86 = vector.extract_strided_slice %84 {offsets = [0, 0], sizes = [2, 32], strides = [1, 1]} : vector<2x96xf32> to vector<2x32xf32>
    %87 = arith.addf %85, %86 : vector<2x32xf32>
    %88 = arith.negf %87 : vector<2x32xf32>
    %89 = math.exp %88 : vector<2x32xf32>
    %cst_69 = arith.constant 1.000000e+00 : f32
    %90 = vector.broadcast %cst_69 : f32 to vector<2x32xf32>
    %91 = arith.addf %90, %89 : vector<2x32xf32>
    %92 = arith.divf %90, %91 : vector<2x32xf32>
    %93 = vector.extract_strided_slice %81 {offsets = [0, 32], sizes = [2, 32], strides = [1, 1]} : vector<2x96xf32> to vector<2x32xf32>
    %94 = vector.extract_strided_slice %84 {offsets = [0, 32], sizes = [2, 32], strides = [1, 1]} : vector<2x96xf32> to vector<2x32xf32>
    %95 = arith.addf %93, %94 : vector<2x32xf32>
    %96 = arith.negf %95 : vector<2x32xf32>
    %97 = math.exp %96 : vector<2x32xf32>
    %cst_70 = arith.constant 1.000000e+00 : f32
    %98 = vector.broadcast %cst_70 : f32 to vector<2x32xf32>
    %99 = arith.addf %98, %97 : vector<2x32xf32>
    %100 = arith.divf %98, %99 : vector<2x32xf32>
    %101 = vector.extract_strided_slice %81 {offsets = [0, 64], sizes = [2, 32], strides = [1, 1]} : vector<2x96xf32> to vector<2x32xf32>
    %102 = vector.extract_strided_slice %84 {offsets = [0, 64], sizes = [2, 32], strides = [1, 1]} : vector<2x96xf32> to vector<2x32xf32>
    %103 = arith.mulf %92, %102 : vector<2x32xf32>
    %104 = arith.addf %101, %103 : vector<2x32xf32>
    %105 = math.tanh %104 : vector<2x32xf32>
    %cst_71 = arith.constant 1.000000e+00 : f32
    %106 = vector.broadcast %cst_71 : f32 to vector<2x32xf32>
    %107 = arith.subf %106, %100 : vector<2x32xf32>
    %108 = arith.mulf %107, %105 : vector<2x32xf32>
    %109 = arith.mulf %100, %80 : vector<2x32xf32>
    %110 = arith.addf %108, %109 : vector<2x32xf32>
    %111 = vector.extract_strided_slice %79 {offsets = [2, 0], sizes = [2, 96], strides = [1, 1]} : vector<4x96xf32> to vector<2x96xf32>
    %cst_72 = arith.constant dense<0.000000e+00> : vector<2x96xf32>
    %112 = tpu.matmul %110, %74, %cst_72 {dimension_numbers = #tpu.dot_dimension_numbers<[1], [0], [0], [1], [0, 0, 1, 1], [], []>} : vector<2x32xf32>, vector<32x96xf32>, vector<2x96xf32> -> vector<2x96xf32>
    %113 = vector.broadcast %76 : vector<1x96xf32> to vector<2x96xf32>
    %114 = arith.addf %112, %113 : vector<2x96xf32>
    %115 = vector.extract_strided_slice %111 {offsets = [0, 0], sizes = [2, 32], strides = [1, 1]} : vector<2x96xf32> to vector<2x32xf32>
    %116 = vector.extract_strided_slice %114 {offsets = [0, 0], sizes = [2, 32], strides = [1, 1]} : vector<2x96xf32> to vector<2x32xf32>
    %117 = arith.addf %115, %116 : vector<2x32xf32>
    %118 = arith.negf %117 : vector<2x32xf32>
    %119 = math.exp %118 : vector<2x32xf32>
    %cst_73 = arith.constant 1.000000e+00 : f32
    %120 = vector.broadcast %cst_73 : f32 to vector<2x32xf32>
    %121 = arith.addf %120, %119 : vector<2x32xf32>
    %122 = arith.divf %120, %121 : vector<2x32xf32>
    %123 = vector.extract_strided_slice %111 {offsets = [0, 32], sizes = [2, 32], strides = [1, 1]} : vector<2x96xf32> to vector<2x32xf32>
    %124 = vector.extract_strided_slice %114 {offsets = [0, 32], sizes = [2, 32], strides = [1, 1]} : vector<2x96xf32> to vector<2x32xf32>
    %125 = arith.addf %123, %124 : vector<2x32xf32>
    %126 = arith.negf %125 : vector<2x32xf32>
    %127 = math.exp %126 : vector<2x32xf32>
    %cst_74 = arith.constant 1.000000e+00 : f32
    %128 = vector.broadcast %cst_74 : f32 to vector<2x32xf32>
    %129 = arith.addf %128, %127 : vector<2x32xf32>
    %130 = arith.divf %128, %129 : vector<2x32xf32>
    %131 = vector.extract_strided_slice %111 {offsets = [0, 64], sizes = [2, 32], strides = [1, 1]} : vector<2x96xf32> to vector<2x32xf32>
    %132 = vector.extract_strided_slice %114 {offsets = [0, 64], sizes = [2, 32], strides = [1, 1]} : vector<2x96xf32> to vector<2x32xf32>
    %133 = arith.mulf %122, %132 : vector<2x32xf32>
    %134 = arith.addf %131, %133 : vector<2x32xf32>
    %135 = math.tanh %134 : vector<2x32xf32>
    %cst_75 = arith.constant 1.000000e+00 : f32
    %136 = vector.broadcast %cst_75 : f32 to vector<2x32xf32>
    %137 = arith.subf %136, %130 : vector<2x32xf32>
    %138 = arith.mulf %137, %135 : vector<2x32xf32>
    %139 = arith.mulf %130, %110 : vector<2x32xf32>
    %140 = arith.addf %138, %139 : vector<2x32xf32>
    %c0_76 = arith.constant 0 : index
    %c0_77 = arith.constant 0 : index
    %141 = vector.load %arg8[%c0_76, %c0_77] : memref<112x128xf32, #tpu.memory_space<vmem>>, vector<32x32xf32>
    %cst_78 = arith.constant dense<0.000000e+00> : vector<2x32xf32>
    %142 = tpu.matmul %140, %141, %cst_78 {dimension_numbers = #tpu.dot_dimension_numbers<[1], [0], [0], [1], [0, 0, 1, 1], [], []>} : vector<2x32xf32>, vector<32x32xf32>, vector<2x32xf32> -> vector<2x32xf32>
    %c2_79 = arith.constant 2 : index
    %c0_80 = arith.constant 0 : index
    %143 = vector.load %arg7[%c2_79, %c0_80] : memref<5x128xf32, #tpu.memory_space<vmem>>, vector<1x32xf32>
    %144 = vector.broadcast %143 : vector<1x32xf32> to vector<2x32xf32>
    %145 = arith.addf %142, %144 : vector<2x32xf32>
    %146 = math.tanh %145 : vector<2x32xf32>
    %c32 = arith.constant 32 : index
    %c0_81 = arith.constant 0 : index
    %147 = vector.load %arg8[%c32, %c0_81] : memref<112x128xf32, #tpu.memory_space<vmem>>, vector<32x128xf32>
    %cst_82 = arith.constant dense<0.000000e+00> : vector<2x128xf32>
    %148 = tpu.matmul %146, %147, %cst_82 {dimension_numbers = #tpu.dot_dimension_numbers<[1], [0], [0], [1], [0, 0, 1, 1], [], []>} : vector<2x32xf32>, vector<32x128xf32>, vector<2x128xf32> -> vector<2x128xf32>
    %c3 = arith.constant 3 : index
    %c0_83 = arith.constant 0 : index
    %149 = vector.load %arg7[%c3, %c0_83] : memref<5x128xf32, #tpu.memory_space<vmem>>, vector<1x128xf32>
    %150 = vector.broadcast %149 : vector<1x128xf32> to vector<2x128xf32>
    %151 = arith.addf %148, %150 : vector<2x128xf32>
    %152 = math.tanh %151 : vector<2x128xf32>
    %c64_84 = arith.constant 64 : index
    %c0_85 = arith.constant 0 : index
    %153 = vector.load %arg8[%c64_84, %c0_85] : memref<112x128xf32, #tpu.memory_space<vmem>>, vector<8x128xf32>
    %154 = vector.extract_strided_slice %152 {offsets = [0, 0], sizes = [2, 32], strides = [1, 1]} : vector<2x128xf32> to vector<2x32xf32>
    %155 = vector.extract_strided_slice %153 {offsets = [0, 0], sizes = [8, 32], strides = [1, 1]} : vector<8x128xf32> to vector<8x32xf32>
    %cst_86 = arith.constant dense<0.000000e+00> : vector<2x8xf32>
    %156 = tpu.matmul %154, %155, %cst_86 {dimension_numbers = #tpu.dot_dimension_numbers<[1], [1], [0], [0], [0, 0, 1, 0], [], []>} : vector<2x32xf32>, vector<8x32xf32>, vector<2x8xf32> -> vector<2x8xf32>
    %157 = vector.extract_strided_slice %152 {offsets = [0, 32], sizes = [2, 32], strides = [1, 1]} : vector<2x128xf32> to vector<2x32xf32>
    %158 = vector.extract_strided_slice %153 {offsets = [0, 32], sizes = [8, 32], strides = [1, 1]} : vector<8x128xf32> to vector<8x32xf32>
    %cst_87 = arith.constant dense<0.000000e+00> : vector<2x8xf32>
    %159 = tpu.matmul %157, %158, %cst_87 {dimension_numbers = #tpu.dot_dimension_numbers<[1], [1], [0], [0], [0, 0, 1, 0], [], []>} : vector<2x32xf32>, vector<8x32xf32>, vector<2x8xf32> -> vector<2x8xf32>
    %160 = vector.extract_strided_slice %152 {offsets = [0, 64], sizes = [2, 32], strides = [1, 1]} : vector<2x128xf32> to vector<2x32xf32>
    %161 = vector.extract_strided_slice %153 {offsets = [0, 64], sizes = [8, 32], strides = [1, 1]} : vector<8x128xf32> to vector<8x32xf32>
    %cst_88 = arith.constant dense<0.000000e+00> : vector<2x8xf32>
    %162 = tpu.matmul %160, %161, %cst_88 {dimension_numbers = #tpu.dot_dimension_numbers<[1], [1], [0], [0], [0, 0, 1, 0], [], []>} : vector<2x32xf32>, vector<8x32xf32>, vector<2x8xf32> -> vector<2x8xf32>
    %163 = vector.extract_strided_slice %152 {offsets = [0, 96], sizes = [2, 32], strides = [1, 1]} : vector<2x128xf32> to vector<2x32xf32>
    %164 = vector.extract_strided_slice %153 {offsets = [0, 96], sizes = [8, 32], strides = [1, 1]} : vector<8x128xf32> to vector<8x32xf32>
    %cst_89 = arith.constant dense<0.000000e+00> : vector<2x8xf32>
    %165 = tpu.matmul %163, %164, %cst_89 {dimension_numbers = #tpu.dot_dimension_numbers<[1], [1], [0], [0], [0, 0, 1, 0], [], []>} : vector<2x32xf32>, vector<8x32xf32>, vector<2x8xf32> -> vector<2x8xf32>
    %166 = tpu.concatenate %156, %159, %162, %165 in 0 : vector<2x8xf32>, vector<2x8xf32>, vector<2x8xf32>, vector<2x8xf32> -> vector<8x8xf32>
    %cst_90 = arith.constant dense<0xFF800000> : vector<8xf32>
    %167 = vector.multi_reduction <maximumf>, %166, %cst_90 [1] : vector<8x8xf32> to vector<8xf32>
    %168 = vector.shape_cast %167 : vector<8xf32> to vector<8x1xf32>
    %169 = vector.broadcast %168 : vector<8x1xf32> to vector<8x8xf32>
    %170 = arith.subf %166, %169 : vector<8x8xf32>
    %171 = math.exp %170 : vector<8x8xf32>
    %cst_91 = arith.constant dense<0.000000e+00> : vector<8xf32>
    %172 = vector.multi_reduction <add>, %171, %cst_91 [1] : vector<8x8xf32> to vector<8xf32>
    %173 = vector.shape_cast %172 : vector<8xf32> to vector<8x1xf32>
    %174 = tpu.reciprocal %173 {approx = true} : vector<8x1xf32> -> vector<8x1xf32>
    %175 = vector.broadcast %174 : vector<8x1xf32> to vector<8x8xf32>
    %176 = arith.mulf %171, %175 : vector<8x8xf32>
    %c72 = arith.constant 72 : index
    %c0_92 = arith.constant 0 : index
    %177 = vector.load %arg8[%c72, %c0_92] : memref<112x128xf32, #tpu.memory_space<vmem>>, vector<32x8xf32>
    %178 = vector.extract_strided_slice %176 {offsets = [0, 0], sizes = [2, 8], strides = [1, 1]} : vector<8x8xf32> to vector<2x8xf32>
    %179 = vector.extract_strided_slice %177 {offsets = [0, 0], sizes = [8, 8], strides = [1, 1]} : vector<32x8xf32> to vector<8x8xf32>
    %cst_93 = arith.constant dense<0.000000e+00> : vector<2x8xf32>
    %180 = tpu.matmul %178, %179, %cst_93 {dimension_numbers = #tpu.dot_dimension_numbers<[1], [0], [0], [1], [0, 0, 1, 1], [], []>} : vector<2x8xf32>, vector<8x8xf32>, vector<2x8xf32> -> vector<2x8xf32>
    %181 = vector.extract_strided_slice %176 {offsets = [2, 0], sizes = [2, 8], strides = [1, 1]} : vector<8x8xf32> to vector<2x8xf32>
    %182 = vector.extract_strided_slice %177 {offsets = [8, 0], sizes = [8, 8], strides = [1, 1]} : vector<32x8xf32> to vector<8x8xf32>
    %cst_94 = arith.constant dense<0.000000e+00> : vector<2x8xf32>
    %183 = tpu.matmul %181, %182, %cst_94 {dimension_numbers = #tpu.dot_dimension_numbers<[1], [0], [0], [1], [0, 0, 1, 1], [], []>} : vector<2x8xf32>, vector<8x8xf32>, vector<2x8xf32> -> vector<2x8xf32>
    %184 = arith.addf %180, %183 : vector<2x8xf32>
    %185 = vector.extract_strided_slice %176 {offsets = [4, 0], sizes = [2, 8], strides = [1, 1]} : vector<8x8xf32> to vector<2x8xf32>
    %186 = vector.extract_strided_slice %177 {offsets = [16, 0], sizes = [8, 8], strides = [1, 1]} : vector<32x8xf32> to vector<8x8xf32>
    %cst_95 = arith.constant dense<0.000000e+00> : vector<2x8xf32>
    %187 = tpu.matmul %185, %186, %cst_95 {dimension_numbers = #tpu.dot_dimension_numbers<[1], [0], [0], [1], [0, 0, 1, 1], [], []>} : vector<2x8xf32>, vector<8x8xf32>, vector<2x8xf32> -> vector<2x8xf32>
    %188 = arith.addf %184, %187 : vector<2x8xf32>
    %189 = vector.extract_strided_slice %176 {offsets = [6, 0], sizes = [2, 8], strides = [1, 1]} : vector<8x8xf32> to vector<2x8xf32>
    %190 = vector.extract_strided_slice %177 {offsets = [24, 0], sizes = [8, 8], strides = [1, 1]} : vector<32x8xf32> to vector<8x8xf32>
    %cst_96 = arith.constant dense<0.000000e+00> : vector<2x8xf32>
    %191 = tpu.matmul %189, %190, %cst_96 {dimension_numbers = #tpu.dot_dimension_numbers<[1], [0], [0], [1], [0, 0, 1, 1], [], []>} : vector<2x8xf32>, vector<8x8xf32>, vector<2x8xf32> -> vector<2x8xf32>
    %192 = arith.addf %188, %191 : vector<2x8xf32>
    %c4 = arith.constant 4 : index
    %c0_97 = arith.constant 0 : index
    %193 = vector.load %arg7[%c4, %c0_97] : memref<5x128xf32, #tpu.memory_space<vmem>>, vector<1x8xf32>
    %194 = vector.broadcast %193 : vector<1x8xf32> to vector<2x8xf32>
    %195 = arith.addf %192, %194 : vector<2x8xf32>
    %196 = math.tanh %195 : vector<2x8xf32>
    %c104 = arith.constant 104 : index
    %c0_98 = arith.constant 0 : index
    %197 = vector.load %arg8[%c104, %c0_98] : memref<112x128xf32, #tpu.memory_space<vmem>>, vector<8x32xf32>
    %cst_99 = arith.constant dense<0xFF800000> : vector<2xf32>
    %198 = vector.multi_reduction <maximumf>, %196, %cst_99 [1] : vector<2x8xf32> to vector<2xf32>
    %199 = vector.shape_cast %198 : vector<2xf32> to vector<2x1xf32>
    %200 = vector.broadcast %199 : vector<2x1xf32> to vector<2x8xf32>
    %201 = arith.subf %196, %200 : vector<2x8xf32>
    %202 = math.exp %201 : vector<2x8xf32>
    %cst_100 = arith.constant dense<0.000000e+00> : vector<2xf32>
    %203 = vector.multi_reduction <add>, %202, %cst_100 [1] : vector<2x8xf32> to vector<2xf32>
    %204 = vector.shape_cast %203 : vector<2xf32> to vector<2x1xf32>
    %205 = tpu.reciprocal %204 {approx = true} : vector<2x1xf32> -> vector<2x1xf32>
    %206 = vector.broadcast %205 : vector<2x1xf32> to vector<2x8xf32>
    %207 = arith.mulf %202, %206 : vector<2x8xf32>
    %cst_101 = arith.constant dense<0.000000e+00> : vector<2x32xf32>
    %208 = tpu.matmul %207, %197, %cst_101 {dimension_numbers = #tpu.dot_dimension_numbers<[1], [0], [0], [1], [0, 0, 1, 1], [], []>} : vector<2x8xf32>, vector<8x32xf32>, vector<2x32xf32> -> vector<2x32xf32>
    %209 = math.tanh %208 : vector<2x32xf32>
    %c0_102 = arith.constant 0 : index
    %c0_103 = arith.constant 0 : index
    %210 = vector.load %arg9[%c0_102, %c0_103] : memref<2x32xf32, #tpu.memory_space<vmem>>, vector<2x32xf32>
    tpu.vector_store %arg9[%c0_102, %c0_103], %209 {strides = array<i32>} : memref<2x32xf32, #tpu.memory_space<vmem>>, vector<2x32xf32>,
    return
  }
}

</mosaic_0001>

<llo_original>
// kernel: gst_forward.1
$region0: #{gst_forward.1}
  #allocation0 [shape = 'u32[]', space=smem, size = 0x4, offset = 0x4, fixed_abs, tag = 'smem constant byte address 0x4 - core index']
  #allocation1 [shape = 'u32[144,128]{1,0:T(1,128)}', space=vmem, size = 0x12000, scoped, tag = 'internal scratch']
  %s0 = inlined_call_operand.vmem [shape: f32[64,32], index: 0, kind: input, shape index: {}]
  %s1 = inlined_call_operand.vmem [shape: f32[180,64], index: 1, kind: input, shape index: {}]
  %s2 = inlined_call_operand.vmem [shape: f32[3,32,128], index: 2, kind: input, shape index: {}]
  %s3 = inlined_call_operand.vmem [shape: f32[3,128,64], index: 3, kind: input, shape index: {}]
  %s4 = inlined_call_operand.vmem [shape: f32[3,64,64], index: 4, kind: input, shape index: {}]
  %s5 = inlined_call_operand.vmem [shape: f32[3,64,64], index: 5, kind: input, shape index: {}]
  %s6 = inlined_call_operand.vmem [shape: f32[96,96], index: 6, kind: input, shape index: {}]
  %s7 = inlined_call_operand.vmem [shape: f32[5,128], index: 7, kind: input, shape index: {}]
  %s8 = inlined_call_operand.vmem [shape: f32[112,128], index: 8, kind: input, shape index: {}]
  %s9 = inlined_call_operand.hbm [shape: f32[2,32], index: 9, kind: output, shape index: {}]
  %s10 = sld [smem:[#allocation0]]
  $region46: #{gst_forward.1} parent=0
    _
  %s12 = ssub.s32 1, %s10
  %s13 = scalar_select 0, %s12, %s10
  $region1: #{gst_forward.1} parent=0
    #allocation2 [shape = 'u8[1024]{0}', space=vmem, size = 0x400, scoped, tag = 'output window, operand 0, single buffered']
    #allocation3 [shape = 's32[1]{0}', space=sflag, size = 0x4, scoped, tag = 'scoped memory for gst_forward.1']
    %14 = vsyncpa [#allocation3], 0
    // Predicated region
    $region2: #{gst_forward.1} parent=1 // pred_check
      _
    $region3: #{gst_forward.1} parent=1 // pred_check_branch
      %16 = sbr.rel (0) target = $region5
    $region4: #{gst_forward.1} parent=1 // pred_region
      _
    $region5: #{gst_forward.1} parent=1 // pred_fallthru
      _
    // Predicated region
    $region6: #{gst_forward.1} parent=1 // pred_check
      _
    $region7: #{gst_forward.1} parent=1 // pred_check_branch
      %18 = sbr.rel (0) target = $region9
    $region8: #{gst_forward.1} parent=1 // pred_region
      _
    $region9: #{gst_forward.1} parent=1 // pred_fallthru
      _
    // Predicated region
    $region10: #{gst_forward.1} parent=1 // pred_check
      _
    $region11: #{gst_forward.1} parent=1 // pred_check_branch
      %20 = sbr.rel (0) target = $region13
    $region12: #{gst_forward.1} parent=1 // pred_region
      _
    $region13: #{gst_forward.1} parent=1 // pred_fallthru
      _
    // Predicated region
    $region14: #{gst_forward.1} parent=1 // pred_check
      _
    $region15: #{gst_forward.1} parent=1 // pred_check_branch
      %22 = sbr.rel (0) target = $region17
    $region16: #{gst_forward.1} parent=1 // pred_region
      _
    $region17: #{gst_forward.1} parent=1 // pred_fallthru
      _
    // Predicated region
    $region18: #{gst_forward.1} parent=1 // pred_check
      _
    $region19: #{gst_forward.1} parent=1 // pred_check_branch
      %24 = sbr.rel (0) target = $region21
    $region20: #{gst_forward.1} parent=1 // pred_region
      _
    $region21: #{gst_forward.1} parent=1 // pred_fallthru
      _
    // Predicated region
    $region22: #{gst_forward.1} parent=1 // pred_check
      _
    $region23: #{gst_forward.1} parent=1 // pred_check_branch
      %26 = sbr.rel (0) target = $region25
    $region24: #{gst_forward.1} parent=1 // pred_region
      _
    $region25: #{gst_forward.1} parent=1 // pred_fallthru
      _
    // Predicated region
    $region26: #{gst_forward.1} parent=1 // pred_check
      _
    $region27: #{gst_forward.1} parent=1 // pred_check_branch
      %28 = sbr.rel (0) target = $region29
    $region28: #{gst_forward.1} parent=1 // pred_region
      _
    $region29: #{gst_forward.1} parent=1 // pred_fallthru
      _
    // Predicated region
    $region30: #{gst_forward.1} parent=1 // pred_check
      _
    $region31: #{gst_forward.1} parent=1 // pred_check_branch
      %30 = sbr.rel (0) target = $region33
    $region32: #{gst_forward.1} parent=1 // pred_region
      _
    $region33: #{gst_forward.1} parent=1 // pred_fallthru
      _
    // Predicated region
    $region34: #{gst_forward.1} parent=1 // pred_check
      _
    $region35: #{gst_forward.1} parent=1 // pred_check_branch
      %32 = sbr.rel (0) target = $region37
    $region36: #{gst_forward.1} parent=1 // pred_region
      _
    $region37: #{gst_forward.1} parent=1 // pred_fallthru
      _
    %v33 = vld [vmem:[%s0] sm:$0xff]
    %v34 = vld [vmem:[%s0 + $0x8] sm:$0xff]
    %v35 = vld [vmem:[%s0 + $0x10] sm:$0xff]
    %v36 = vld [vmem:[%s0 + $0x18] sm:$0xff]
    %v37 = vld [vmem:[%s0 + $0x20] sm:$0xff]
    %v38 = vld [vmem:[%s0 + $0x28] sm:$0xff]
    %v39 = vld [vmem:[%s0 + $0x30] sm:$0xff]
    %v40 = vld [vmem:[%s0 + $0x38] sm:$0xff]
    %v41 = vld [vmem:[%s1] sm:$0xff]
    %v42 = vld [vmem:[%s1 + $0x8] sm:$0xff]
    %v43 = vld [vmem:[%s1 + $0x10] sm:$0xff]
    %v44 = vld [vmem:[%s1 + $0x18] sm:$0xff]
    %v45 = vld [vmem:[%s1 + $0x20] sm:$0xff]
    %v46 = vld [vmem:[%s1 + $0x28] sm:$0xff]
    %v47 = vld [vmem:[%s1 + $0x30] sm:$0xff]
    %v48 = vld [vmem:[%s1 + $0x38] sm:$0xff]
    %v49 = vld [vmem:[%s1 + $0x40] sm:$0xff]
    %v50 = vld [vmem:[%s1 + $0x48] sm:$0xff]
    %v51 = vld [vmem:[%s1 + $0x50] sm:$0xff]
    %v52 = vld [vmem:[%s1 + $0x58] sm:$0xff]
    %vm53 = vcmask 523264
    %v55 = vsel %vm53, %v41, 0
    %v58 = vsel %vm53, %v42, 0
    %v61 = vsel %vm53, %v43, 0
    %v64 = vsel %vm53, %v44, 0
    %v67 = vsel %vm53, %v45, 0
    %v70 = vsel %vm53, %v46, 0
    %v73 = vsel %vm53, %v47, 0
    %v76 = vsel %vm53, %v48, 0
    %v79 = vsel %vm53, %v49, 0
    %v82 = vsel %vm53, %v50, 0
    %v85 = vsel %vm53, %v51, 0
    %v88 = vsel %vm53, %v52, 0
    %90 = vmatprep.subr.mxu0 0.0
    %91 = vmatpush1.msra.mxu0 0.0
    %92 = vmatprep.subr.mxu0 0.0
    %93 = vmatpush1.msra.mxu0 0.0
    %94 = vmatprep.subr.mxu0 0.0
    %95 = vmatpush1.msra.mxu0 0.0
    %96 = vmatprep.subr.mxu0 0.0
    %97 = vmatpush1.msra.mxu0 0.0
    %98 = vmatprep.subr.mxu0 0.0
    %99 = vmatpush1.msra.mxu0 0.0
    %100 = vmatprep.subr.mxu0 0.0
    %101 = vmatpush1.msra.mxu0 0.0
    %102 = vmatprep.subr.mxu0 0.0
    %103 = vmatpush1.msra.mxu0 0.0
    %104 = vmatprep.subr.mxu0 0.0
    %105 = vmatpush1.msra.mxu0 0.0
    %106 = vmatprep.subr.mxu0 0.0
    %107 = vmatpush1.msra.mxu0 %v40
    %108 = vmatprep.subr.mxu0 0.0
    %109 = vmatpush1.msra.mxu0 %v39
    %110 = vmatprep.subr.mxu0 0.0
    %111 = vmatpush1.msra.mxu0 %v38
    %112 = vmatprep.subr.mxu0 0.0
    %113 = vmatpush1.msra.mxu0 %v37
    %114 = vmatprep.subr.mxu0 0.0
    %115 = vmatpush1.msra.mxu0 %v36
    %116 = vmatprep.subr.mxu0 0.0
    %117 = vmatpush1.msra.mxu0 %v35
    %118 = vmatprep.subr.mxu0 0.0
    %119 = vmatpush1.msra.mxu0 %v34
    %120 = vmatprep.subr.mxu0 0.0
    %121 = vmatpush1.msra.mxu0 %v33
    %122 = vmatprep.subr.mxu0 0.0
    %123 = vmatpush2.msra.mxu0 0.0
    %124 = vmatprep.subr.mxu0 0.0
    %125 = vmatpush2.msra.mxu0 0.0
    %126 = vmatprep.subr.mxu0 0.0
    %127 = vmatpush2.msra.mxu0 0.0
    %128 = vmatprep.subr.mxu0 0.0
    %129 = vmatpush2.msra.mxu0 0.0
    %130 = vmatprep.subr.mxu0 0.0
    %131 = vmatpush2.msra.mxu0 0.0
    %132 = vmatprep.subr.mxu0 0.0
    %133 = vmatpush2.msra.mxu0 0.0
    %134 = vmatprep.subr.mxu0 0.0
    %135 = vmatpush2.msra.mxu0 0.0
    %136 = vmatprep.subr.mxu0 0.0
    %137 = vmatpush2.msra.mxu0 0.0
    %138 = vmatprep.subr.mxu0 0.0
    %139 = vmatpush2.msra.mxu0 0.0
    %140 = vmatprep.subr.mxu0 0.0
    %141 = vmatpush2.msra.mxu0 0.0
    %142 = vmatprep.subr.mxu0 0.0
    %143 = vmatpush2.msra.mxu0 0.0
    %144 = vmatprep.subr.mxu0 0.0
    %145 = vmatpush2.msra.mxu0 0.0
    %146 = vmatprep.subr.mxu0 0.0
    %147 = vmatpush2.msra.mxu0 0.0
    %148 = vmatprep.subr.mxu0 0.0
    %149 = vmatpush2.msra.mxu0 0.0
    %150 = vmatprep.subr.mxu0 0.0
    %151 = vmatpush2.msra.mxu0 0.0
    %152 = vmatprep.subr.mxu0 0.0
    %153 = vmatpush2.msra.mxu0 0.0
    %154 = vmatprep.mubr.f32.mxu0 0.0
    %155 = vmatmul.mubr.f32.gmra.mxu0 %v55
    %v156 = vpop.f32.mrf.mxu0
    %v157 = vadd.f32 0.0, %v156
    %v158 = vpop.f32.mrf.mxu0
    %159 = vmatprep.mubr.f32.mxu0 0.0
    %160 = vmatmul.mubr.f32.gmra.mxu0 %v58
    %v161 = vpop.f32.mrf.mxu0
    %v162 = vadd.f32 0.0, %v161
    %v163 = vpop.f32.mrf.mxu0
    %164 = vmatprep.mubr.f32.mxu0 0.0
    %165 = vmatmul.mubr.f32.gmra.mxu0 %v61
    %v166 = vpop.f32.mrf.mxu0
    %v167 = vadd.f32 0.0, %v166
    %v168 = vpop.f32.mrf.mxu0
    %169 = vmatprep.mubr.f32.mxu0 0.0
    %170 = vmatmul.mubr.f32.gmra.mxu0 %v64
    %v171 = vpop.f32.mrf.mxu0
    %v172 = vadd.f32 0.0, %v171
    %v173 = vpop.f32.mrf.mxu0
    %174 = vmatprep.mubr.f32.mxu0 0.0
    %175 = vmatmul.mubr.f32.gmra.mxu0 %v67
    %v176 = vpop.f32.mrf.mxu0
    %v177 = vadd.f32 0.0, %v176
    %v178 = vpop.f32.mrf.mxu0
    %179 = vmatprep.mubr.f32.mxu0 0.0
    %180 = vmatmul.mubr.f32.gmra.mxu0 %v70
    %v181 = vpop.f32.mrf.mxu0
    %v182 = vadd.f32 0.0, %v181
    %v183 = vpop.f32.mrf.mxu0
    %184 = vmatprep.mubr.f32.mxu0 0.0
    %185 = vmatmul.mubr.f32.gmra.mxu0 %v73
    %v186 = vpop.f32.mrf.mxu0
    %v187 = vadd.f32 0.0, %v186
    %v188 = vpop.f32.mrf.mxu0
    %189 = vmatprep.mubr.f32.mxu0 0.0
    %190 = vmatmul.mubr.f32.gmra.mxu0 %v76
    %v191 = vpop.f32.mrf.mxu0
    %v192 = vadd.f32 0.0, %v191
    %v193 = vpop.f32.mrf.mxu0
    %194 = vmatprep.mubr.f32.mxu0 0.0
    %195 = vmatmul.mubr.f32.gmra.mxu0 %v79
    %v196 = vpop.f32.mrf.mxu0
    %v197 = vadd.f32 0.0, %v196
    %v198 = vpop.f32.mrf.mxu0
    %199 = vmatprep.mubr.f32.mxu0 0.0
    %200 = vmatmul.mubr.f32.gmra.mxu0 %v82
    %v201 = vpop.f32.mrf.mxu0
    %v202 = vadd.f32 0.0, %v201
    %v203 = vpop.f32.mrf.mxu0
    %204 = vmatprep.mubr.f32.mxu0 0.0
    %205 = vmatmul.mubr.f32.gmra.mxu0 %v85
    %v206 = vpop.f32.mrf.mxu0
    %v207 = vadd.f32 0.0, %v206
    %v208 = vpop.f32.mrf.mxu0
    %209 = vmatprep.mubr.f32.mxu0 0.0
    %210 = vmatmul.mubr.f32.gmra.mxu0 %v88
    %v211 = vpop.f32.mrf.mxu0
    %v212 = vadd.f32 0.0, %v211
    %v213 = vpop.f32.mrf.mxu0
    %214 = vdwg.mxu0
    %v215 = vld [vmem:[%s2] sm:$0xff]
    %v216 = vld [vmem:[%s2 + $0x8] sm:$0xff]
    %v217 = vld [vmem:[%s2 + $0x10] sm:$0xff]
    %v218 = vld [vmem:[%s2 + $0x18] sm:$0xff]
    %s219 = scalar_lea.vmem %s2, 32
    %v220 = vld [vmem:[%s219] sm:$0xff]
    %v221 = vld [vmem:[%s219 + $0x8] sm:$0xff]
    %v222 = vld [vmem:[%s219 + $0x10] sm:$0xff]
    %v223 = vld [vmem:[%s219 + $0x18] sm:$0xff]
    %vm224 = vcmask 261120
    %v226 = vsel %vm224, %v177, 0
    %v229 = vsel %vm224, %v182, 0
    %v232 = vsel %vm224, %v187, 0
    %v235 = vsel %vm224, %v192, 0
    %237 = vmatprep.subr.mxu0 0.0
    %238 = vmatpush1.msra.mxu0 0.0
    %239 = vmatprep.subr.mxu0 0.0
    %240 = vmatpush1.msra.mxu0 0.0
    %241 = vmatprep.subr.mxu0 0.0
    %242 = vmatpush1.msra.mxu0 0.0
    %243 = vmatprep.subr.mxu0 0.0
    %244 = vmatpush1.msra.mxu0 0.0
    %245 = vmatprep.subr.mxu0 0.0
    %246 = vmatpush1.msra.mxu0 0.0
    %247 = vmatprep.subr.mxu0 0.0
    %248 = vmatpush1.msra.mxu0 0.0
    %249 = vmatprep.subr.mxu0 0.0
    %250 = vmatpush1.msra.mxu0 0.0
    %251 = vmatprep.subr.mxu0 0.0
    %252 = vmatpush1.msra.mxu0 0.0
    %253 = vmatprep.subr.mxu0 0.0
    %254 = vmatpush1.msra.mxu0 0.0
    %255 = vmatprep.subr.mxu0 0.0
    %256 = vmatpush1.msra.mxu0 0.0
    %257 = vmatprep.subr.mxu0 0.0
    %258 = vmatpush1.msra.mxu0 0.0
    %259 = vmatprep.subr.mxu0 0.0
    %260 = vmatpush1.msra.mxu0 0.0
    %261 = vmatprep.subr.mxu0 0.0
    %262 = vmatpush1.msra.mxu0 %v223
    %263 = vmatprep.subr.mxu0 0.0
    %264 = vmatpush1.msra.mxu0 %v222
    %265 = vmatprep.subr.mxu0 0.0
    %266 = vmatpush1.msra.mxu0 %v221
    %267 = vmatprep.subr.mxu0 0.0
    %268 = vmatpush1.msra.mxu0 %v220
    %269 = vmatprep.subr.mxu0 0.0
    %270 = vmatpush2.msra.mxu0 0.0
    %271 = vmatprep.subr.mxu0 0.0
    %272 = vmatpush2.msra.mxu0 0.0
    %273 = vmatprep.subr.mxu0 0.0
    %274 = vmatpush2.msra.mxu0 0.0
    %275 = vmatprep.subr.mxu0 0.0
    %276 = vmatpush2.msra.mxu0 0.0
    %277 = vmatprep.subr.mxu0 0.0
    %278 = vmatpush2.msra.mxu0 0.0
    %279 = vmatprep.subr.mxu0 0.0
    %280 = vmatpush2.msra.mxu0 0.0
    %281 = vmatprep.subr.mxu0 0.0
    %282 = vmatpush2.msra.mxu0 0.0
    %283 = vmatprep.subr.mxu0 0.0
    %284 = vmatpush2.msra.mxu0 0.0
    %285 = vmatprep.subr.mxu0 0.0
    %286 = vmatpush2.msra.mxu0 0.0
    %287 = vmatprep.subr.mxu0 0.0
    %288 = vmatpush2.msra.mxu0 0.0
    %289 = vmatprep.subr.mxu0 0.0
    %290 = vmatpush2.msra.mxu0 0.0
    %291 = vmatprep.subr.mxu0 0.0
    %292 = vmatpush2.msra.mxu0 0.0
    %293 = vmatprep.subr.mxu0 0.0
    %294 = vmatpush2.msra.mxu0 0.0
    %295 = vmatprep.subr.mxu0 0.0
    %296 = vmatpush2.msra.mxu0 0.0
    %297 = vmatprep.subr.mxu0 0.0
    %298 = vmatpush2.msra.mxu0 0.0
    %299 = vmatprep.subr.mxu0 0.0
    %300 = vmatpush2.msra.mxu0 0.0
    %301 = vmatprep.mubr.f32.mxu0 0.0
    %302 = vmatmul.mubr.f32.gmra.mxu0 %v226
    %v303 = vpop.f32.mrf.mxu0
    %v304 = vadd.f32 0.0, %v303
    %v305 = vpop.f32.mrf.mxu0
    %306 = vmatprep.mubr.f32.mxu0 0.0
    %307 = vmatmul.mubr.f32.gmra.mxu0 %v229
    %v308 = vpop.f32.mrf.mxu0
    %v309 = vadd.f32 0.0, %v308
    %v310 = vpop.f32.mrf.mxu0
    %311 = vmatprep.mubr.f32.mxu0 0.0
    %312 = vmatmul.mubr.f32.gmra.mxu0 %v232
    %v313 = vpop.f32.mrf.mxu0
    %v314 = vadd.f32 0.0, %v313
    %v315 = vpop.f32.mrf.mxu0
    %316 = vmatprep.mubr.f32.mxu0 0.0
    %317 = vmatmul.mubr.f32.gmra.mxu0 %v235
    %v318 = vpop.f32.mrf.mxu0
    %v319 = vadd.f32 0.0, %v318
    %v320 = vpop.f32.mrf.mxu0
    %321 = vdwg.mxu0
    %v323 = vsel %vm224, %v157, 0
    %v326 = vsel %vm224, %v162, 0
    %v329 = vsel %vm224, %v167, 0
    %v332 = vsel %vm224, %v172, 0
    %334 = vmatprep.subr.mxu0 0.0
    %335 = vmatpush1.msra.mxu0 0.0
    %336 = vmatprep.subr.mxu0 0.0
    %337 = vmatpush1.msra.mxu0 0.0
    %338 = vmatprep.subr.mxu0 0.0
    %339 = vmatpush1.msra.mxu0 0.0
    %340 = vmatprep.subr.mxu0 0.0
    %341 = vmatpush1.msra.mxu0 0.0
    %342 = vmatprep.subr.mxu0 0.0
    %343 = vmatpush1.msra.mxu0 0.0
    %344 = vmatprep.subr.mxu0 0.0
    %345 = vmatpush1.msra.mxu0 0.0
    %346 = vmatprep.subr.mxu0 0.0
    %347 = vmatpush1.msra.mxu0 0.0
    %348 = vmatprep.subr.mxu0 0.0
    %349 = vmatpush1.msra.mxu0 0.0
    %350 = vmatprep.subr.mxu0 0.0
    %351 = vmatpush1.msra.mxu0 0.0
    %352 = vmatprep.subr.mxu0 0.0
    %353 = vmatpush1.msra.mxu0 0.0
    %354 = vmatprep.subr.mxu0 0.0
    %355 = vmatpush1.msra.mxu0 0.0
    %356 = vmatprep.subr.mxu0 0.0
    %357 = vmatpush1.msra.mxu0 0.0
    %358 = vmatprep.subr.mxu0 0.0
    %359 = vmatpush1.msra.mxu0 %v218
    %360 = vmatprep.subr.mxu0 0.0
    %361 = vmatpush1.msra.mxu0 %v217
    %362 = vmatprep.subr.mxu0 0.0
    %363 = vmatpush1.msra.mxu0 %v216
    %364 = vmatprep.subr.mxu0 0.0
    %365 = vmatpush1.msra.mxu0 %v215
    %366 = vmatprep.subr.mxu0 0.0
    %367 = vmatpush2.msra.mxu0 0.0
    %368 = vmatprep.subr.mxu0 0.0
    %369 = vmatpush2.msra.mxu0 0.0
    %370 = vmatprep.subr.mxu0 0.0
    %371 = vmatpush2.msra.mxu0 0.0
    %372 = vmatprep.subr.mxu0 0.0
    %373 = vmatpush2.msra.mxu0 0.0
    %374 = vmatprep.subr.mxu0 0.0
    %375 = vmatpush2.msra.mxu0 0.0
    %376 = vmatprep.subr.mxu0 0.0
    %377 = vmatpush2.msra.mxu0 0.0
    %378 = vmatprep.subr.mxu0 0.0
    %379 = vmatpush2.msra.mxu0 0.0
    %380 = vmatprep.subr.mxu0 0.0
    %381 = vmatpush2.msra.mxu0 0.0
    %382 = vmatprep.subr.mxu0 0.0
    %383 = vmatpush2.msra.mxu0 0.0
    %384 = vmatprep.subr.mxu0 0.0
    %385 = vmatpush2.msra.mxu0 0.0
    %386 = vmatprep.subr.mxu0 0.0
    %387 = vmatpush2.msra.mxu0 0.0
    %388 = vmatprep.subr.mxu0 0.0
    %389 = vmatpush2.msra.mxu0 0.0
    %390 = vmatprep.subr.mxu0 0.0
    %391 = vmatpush2.msra.mxu0 0.0
    %392 = vmatprep.subr.mxu0 0.0
    %393 = vmatpush2.msra.mxu0 0.0
    %394 = vmatprep.subr.mxu0 0.0
    %395 = vmatpush2.msra.mxu0 0.0
    %396 = vmatprep.subr.mxu0 0.0
    %397 = vmatpush2.msra.mxu0 0.0
    %398 = vmatprep.mubr.f32.mxu0 0.0
    %399 = vmatmul.mubr.f32.gmra.mxu0 %v323
    %v400 = vpop.f32.mrf.mxu0
    %v401 = vadd.f32 %v304, %v400
    %v402 = vpop.f32.mrf.mxu0
    %403 = vmatprep.mubr.f32.mxu0 0.0
    %404 = vmatmul.mubr.f32.gmra.mxu0 %v326
    %v405 = vpop.f32.mrf.mxu0
    %v406 = vadd.f32 %v309, %v405
    %v407 = vpop.f32.mrf.mxu0
    %408 = vmatprep.mubr.f32.mxu0 0.0
    %409 = vmatmul.mubr.f32.gmra.mxu0 %v329
    %v410 = vpop.f32.mrf.mxu0
    %v411 = vadd.f32 %v314, %v410
    %v412 = vpop.f32.mrf.mxu0
    %413 = vmatprep.mubr.f32.mxu0 0.0
    %414 = vmatmul.mubr.f32.gmra.mxu0 %v332
    %v415 = vpop.f32.mrf.mxu0
    %v416 = vadd.f32 %v319, %v415
    %v417 = vpop.f32.mrf.mxu0
    %418 = vdwg.mxu0
    %s419 = scalar_lea.vmem %s2, 64
    %v420 = vld [vmem:[%s419] sm:$0xff]
    %v421 = vld [vmem:[%s419 + $0x8] sm:$0xff]
    %v422 = vld [vmem:[%s419 + $0x10] sm:$0xff]
    %v423 = vld [vmem:[%s419 + $0x18] sm:$0xff]
    %v425 = vsel %vm224, %v197, 0
    %v428 = vsel %vm224, %v202, 0
    %v431 = vsel %vm224, %v207, 0
    %v434 = vsel %vm224, %v212, 0
    %436 = vmatprep.subr.mxu0 0.0
    %437 = vmatpush1.msra.mxu0 0.0
    %438 = vmatprep.subr.mxu0 0.0
    %439 = vmatpush1.msra.mxu0 0.0
    %440 = vmatprep.subr.mxu0 0.0
    %441 = vmatpush1.msra.mxu0 0.0
    %442 = vmatprep.subr.mxu0 0.0
    %443 = vmatpush1.msra.mxu0 0.0
    %444 = vmatprep.subr.mxu0 0.0
    %445 = vmatpush1.msra.mxu0 0.0
    %446 = vmatprep.subr.mxu0 0.0
    %447 = vmatpush1.msra.mxu0 0.0
    %448 = vmatprep.subr.mxu0 0.0
    %449 = vmatpush1.msra.mxu0 0.0
    %450 = vmatprep.subr.mxu0 0.0
    %451 = vmatpush1.msra.mxu0 0.0
    %452 = vmatprep.subr.mxu0 0.0
    %453 = vmatpush1.msra.mxu0 0.0
    %454 = vmatprep.subr.mxu0 0.0
    %455 = vmatpush1.msra.mxu0 0.0
    %456 = vmatprep.subr.mxu0 0.0
    %457 = vmatpush1.msra.mxu0 0.0
    %458 = vmatprep.subr.mxu0 0.0
    %459 = vmatpush1.msra.mxu0 0.0
    %460 = vmatprep.subr.mxu0 0.0
    %461 = vmatpush1.msra.mxu0 %v423
    %462 = vmatprep.subr.mxu0 0.0
    %463 = vmatpush1.msra.mxu0 %v422
    %464 = vmatprep.subr.mxu0 0.0
    %465 = vmatpush1.msra.mxu0 %v421
    %466 = vmatprep.subr.mxu0 0.0
    %467 = vmatpush1.msra.mxu0 %v420
    %468 = vmatprep.subr.mxu0 0.0
    %469 = vmatpush2.msra.mxu0 0.0
    %470 = vmatprep.subr.mxu0 0.0
    %471 = vmatpush2.msra.mxu0 0.0
    %472 = vmatprep.subr.mxu0 0.0
    %473 = vmatpush2.msra.mxu0 0.0
    %474 = vmatprep.subr.mxu0 0.0
    %475 = vmatpush2.msra.mxu0 0.0
    %476 = vmatprep.subr.mxu0 0.0
    %477 = vmatpush2.msra.mxu0 0.0
    %478 = vmatprep.subr.mxu0 0.0
    %479 = vmatpush2.msra.mxu0 0.0
    %480 = vmatprep.subr.mxu0 0.0
    %481 = vmatpush2.msra.mxu0 0.0
    %482 = vmatprep.subr.mxu0 0.0
    %483 = vmatpush2.msra.mxu0 0.0
    %484 = vmatprep.subr.mxu0 0.0
    %485 = vmatpush2.msra.mxu0 0.0
    %486 = vmatprep.subr.mxu0 0.0
    %487 = vmatpush2.msra.mxu0 0.0
    %488 = vmatprep.subr.mxu0 0.0
    %489 = vmatpush2.msra.mxu0 0.0
    %490 = vmatprep.subr.mxu0 0.0
    %491 = vmatpush2.msra.mxu0 0.0
    %492 = vmatprep.subr.mxu0 0.0
    %493 = vmatpush2.msra.mxu0 0.0
    %494 = vmatprep.subr.mxu0 0.0
    %495 = vmatpush2.msra.mxu0 0.0
    %496 = vmatprep.subr.mxu0 0.0
    %497 = vmatpush2.msra.mxu0 0.0
    %498 = vmatprep.subr.mxu0 0.0
    %499 = vmatpush2.msra.mxu0 0.0
    %500 = vmatprep.mubr.f32.mxu0 0.0
    %501 = vmatmul.mubr.f32.gmra.mxu0 %v425
    %v502 = vpop.f32.mrf.mxu0
    %v503 = vadd.f32 0.0, %v502
    %v504 = vpop.f32.mrf.mxu0
    %505 = vmatprep.mubr.f32.mxu0 0.0
    %506 = vmatmul.mubr.f32.gmra.mxu0 %v428
    %v507 = vpop.f32.mrf.mxu0
    %v508 = vadd.f32 0.0, %v507
    %v509 = vpop.f32.mrf.mxu0
    %510 = vmatprep.mubr.f32.mxu0 0.0
    %511 = vmatmul.mubr.f32.gmra.mxu0 %v431
    %v512 = vpop.f32.mrf.mxu0
    %v513 = vadd.f32 0.0, %v512
    %v514 = vpop.f32.mrf.mxu0
    %515 = vmatprep.mubr.f32.mxu0 0.0
    %516 = vmatmul.mubr.f32.gmra.mxu0 %v434
    %v517 = vpop.f32.mrf.mxu0
    %v518 = vadd.f32 0.0, %v517
    %v519 = vpop.f32.mrf.mxu0
    %520 = vdwg.mxu0
    %v521 = vadd.f32 %v401, %v503
    %v522 = vadd.f32 %v406, %v508
    %v523 = vadd.f32 %v411, %v513
    %v524 = vadd.f32 %v416, %v518
    %v525 = vmax.f32 %v521, 0.0
    %v526 = vmax.f32 %v522, 0.0
    %v527 = vmax.f32 %v523, 0.0
    %v528 = vmax.f32 %v524, 0.0
    %v529 = vld [vmem:[%s1 + $0x60] sm:$0xff]
    %v530 = vld [vmem:[%s1 + $0x68] sm:$0xff]
    %v531 = vld [vmem:[%s1 + $0x70] sm:$0xff]
    %v532 = vld [vmem:[%s1 + $0x78] sm:$0xff]
    %v533 = vld [vmem:[%s1 + $0x80] sm:$0xff]
    %v534 = vld [vmem:[%s1 + $0x88] sm:$0xff]
    %v536 = vsel %vm224, %v529, 0
    %v539 = vsel %vm224, %v530, 0
    %v542 = vsel %vm224, %v531, 0
    %v545 = vsel %vm224, %v532, 0
    %v548 = vsel %vm224, %v533, 0
    %v551 = vsel %vm224, %v534, 0
    %553 = vmatprep.subr.mxu0 0.0
    %554 = vmatpush1.msra.mxu0 0.0
    %555 = vmatprep.subr.mxu0 0.0
    %556 = vmatpush1.msra.mxu0 0.0
    %557 = vmatprep.subr.mxu0 0.0
    %558 = vmatpush1.msra.mxu0 0.0
    %559 = vmatprep.subr.mxu0 0.0
    %560 = vmatpush1.msra.mxu0 0.0
    %561 = vmatprep.subr.mxu0 0.0
    %562 = vmatpush1.msra.mxu0 0.0
    %563 = vmatprep.subr.mxu0 0.0
    %564 = vmatpush1.msra.mxu0 0.0
    %565 = vmatprep.subr.mxu0 0.0
    %566 = vmatpush1.msra.mxu0 0.0
    %567 = vmatprep.subr.mxu0 0.0
    %568 = vmatpush1.msra.mxu0 0.0
    %569 = vmatprep.subr.mxu0 0.0
    %570 = vmatpush1.msra.mxu0 0.0
    %571 = vmatprep.subr.mxu0 0.0
    %572 = vmatpush1.msra.mxu0 0.0
    %573 = vmatprep.subr.mxu0 0.0
    %574 = vmatpush1.msra.mxu0 0.0
    %575 = vmatprep.subr.mxu0 0.0
    %576 = vmatpush1.msra.mxu0 0.0
    %577 = vmatprep.subr.mxu0 0.0
    %578 = vmatpush1.msra.mxu0 %v528
    %579 = vmatprep.subr.mxu0 0.0
    %580 = vmatpush1.msra.mxu0 %v527
    %581 = vmatprep.subr.mxu0 0.0
    %582 = vmatpush1.msra.mxu0 %v526
    %583 = vmatprep.subr.mxu0 0.0
    %584 = vmatpush1.msra.mxu0 %v525
    %585 = vmatprep.subr.mxu0 0.0
    %586 = vmatpush2.msra.mxu0 0.0
    %587 = vmatprep.subr.mxu0 0.0
    %588 = vmatpush2.msra.mxu0 0.0
    %589 = vmatprep.subr.mxu0 0.0
    %590 = vmatpush2.msra.mxu0 0.0
    %591 = vmatprep.subr.mxu0 0.0
    %592 = vmatpush2.msra.mxu0 0.0
    %593 = vmatprep.subr.mxu0 0.0
    %594 = vmatpush2.msra.mxu0 0.0
    %595 = vmatprep.subr.mxu0 0.0
    %596 = vmatpush2.msra.mxu0 0.0
    %597 = vmatprep.subr.mxu0 0.0
    %598 = vmatpush2.msra.mxu0 0.0
    %599 = vmatprep.subr.mxu0 0.0
    %600 = vmatpush2.msra.mxu0 0.0
    %601 = vmatprep.subr.mxu0 0.0
    %602 = vmatpush2.msra.mxu0 0.0
    %603 = vmatprep.subr.mxu0 0.0
    %604 = vmatpush2.msra.mxu0 0.0
    %605 = vmatprep.subr.mxu0 0.0
    %606 = vmatpush2.msra.mxu0 0.0
    %607 = vmatprep.subr.mxu0 0.0
    %608 = vmatpush2.msra.mxu0 0.0
    %609 = vmatprep.subr.mxu0 0.0
    %610 = vmatpush2.msra.mxu0 0.0
    %611 = vmatprep.subr.mxu0 0.0
    %612 = vmatpush2.msra.mxu0 0.0
    %613 = vmatprep.subr.mxu0 0.0
    %614 = vmatpush2.msra.mxu0 0.0
    %615 = vmatprep.subr.mxu0 0.0
    %616 = vmatpush2.msra.mxu0 0.0
    %617 = vmatprep.mubr.f32.mxu0 0.0
    %618 = vmatmul.mubr.f32.gmra.mxu0 %v536
    %v619 = vpop.f32.mrf.mxu0
    %v620 = vadd.f32 0.0, %v619
    %v621 = vpop.f32.mrf.mxu0
    %622 = vmatprep.mubr.f32.mxu0 0.0
    %623 = vmatmul.mubr.f32.gmra.mxu0 %v539
    %v624 = vpop.f32.mrf.mxu0
    %v625 = vadd.f32 0.0, %v624
    %v626 = vpop.f32.mrf.mxu0
    %627 = vmatprep.mubr.f32.mxu0 0.0
    %628 = vmatmul.mubr.f32.gmra.mxu0 %v542
    %v629 = vpop.f32.mrf.mxu0
    %v630 = vadd.f32 0.0, %v629
    %v631 = vpop.f32.mrf.mxu0
    %632 = vmatprep.mubr.f32.mxu0 0.0
    %633 = vmatmul.mubr.f32.gmra.mxu0 %v545
    %v634 = vpop.f32.mrf.mxu0
    %v635 = vadd.f32 0.0, %v634
    %v636 = vpop.f32.mrf.mxu0
    %637 = vmatprep.mubr.f32.mxu0 0.0
    %638 = vmatmul.mubr.f32.gmra.mxu0 %v548
    %v639 = vpop.f32.mrf.mxu0
    %v640 = vadd.f32 0.0, %v639
    %v641 = vpop.f32.mrf.mxu0
    %642 = vmatprep.mubr.f32.mxu0 0.0
    %643 = vmatmul.mubr.f32.gmra.mxu0 %v551
    %v644 = vpop.f32.mrf.mxu0
    %v645 = vadd.f32 0.0, %v644
    %v646 = vpop.f32.mrf.mxu0
    %647 = vdwg.mxu0
    %v648 = vld [vmem:[%s3] sm:$0xff]
    %v649 = vld [vmem:[%s3 + $0x8] sm:$0xff]
    %v650 = vld [vmem:[%s3 + $0x10] sm:$0xff]
    %v651 = vld [vmem:[%s3 + $0x18] sm:$0xff]
    %v652 = vld [vmem:[%s3 + $0x20] sm:$0xff]
    %v653 = vld [vmem:[%s3 + $0x28] sm:$0xff]
    %v654 = vld [vmem:[%s3 + $0x30] sm:$0xff]
    %v655 = vld [vmem:[%s3 + $0x38] sm:$0xff]
    %v656 = vld [vmem:[%s3 + $0x40] sm:$0xff]
    %v657 = vld [vmem:[%s3 + $0x48] sm:$0xff]
    %v658 = vld [vmem:[%s3 + $0x50] sm:$0xff]
    %v659 = vld [vmem:[%s3 + $0x58] sm:$0xff]
    %v660 = vld [vmem:[%s3 + $0x60] sm:$0xff]
    %v661 = vld [vmem:[%s3 + $0x68] sm:$0xff]
    %v662 = vld [vmem:[%s3 + $0x70] sm:$0xff]
    %v663 = vld [vmem:[%s3 + $0x78] sm:$0xff]
    %s664 = scalar_lea.vmem %s3, 128
    %v665 = vld [vmem:[%s664] sm:$0xff]
    %v666 = vld [vmem:[%s664 + $0x8] sm:$0xff]
    %v667 = vld [vmem:[%s664 + $0x10] sm:$0xff]
    %v668 = vld [vmem:[%s664 + $0x18] sm:$0xff]
    %v669 = vld [vmem:[%s664 + $0x20] sm:$0xff]
    %v670 = vld [vmem:[%s664 + $0x28] sm:$0xff]
    %v671 = vld [vmem:[%s664 + $0x30] sm:$0xff]
    %v672 = vld [vmem:[%s664 + $0x38] sm:$0xff]
    %v673 = vld [vmem:[%s664 + $0x40] sm:$0xff]
    %v674 = vld [vmem:[%s664 + $0x48] sm:$0xff]
    %v675 = vld [vmem:[%s664 + $0x50] sm:$0xff]
    %v676 = vld [vmem:[%s664 + $0x58] sm:$0xff]
    %v677 = vld [vmem:[%s664 + $0x60] sm:$0xff]
    %v678 = vld [vmem:[%s664 + $0x68] sm:$0xff]
    %v679 = vld [vmem:[%s664 + $0x70] sm:$0xff]
    %v680 = vld [vmem:[%s664 + $0x78] sm:$0xff]
    %681 = vmatprep.subr.mxu0 0.0
    %682 = vmatpush1.msra.mxu0 %v680
    %683 = vmatprep.subr.mxu0 0.0
    %684 = vmatpush1.msra.mxu0 %v679
    %685 = vmatprep.subr.mxu0 0.0
    %686 = vmatpush1.msra.mxu0 %v678
    %687 = vmatprep.subr.mxu0 0.0
    %688 = vmatpush1.msra.mxu0 %v677
    %689 = vmatprep.subr.mxu0 0.0
    %690 = vmatpush1.msra.mxu0 %v676
    %691 = vmatprep.subr.mxu0 0.0
    %692 = vmatpush1.msra.mxu0 %v675
    %693 = vmatprep.subr.mxu0 0.0
    %694 = vmatpush1.msra.mxu0 %v674
    %695 = vmatprep.subr.mxu0 0.0
    %696 = vmatpush1.msra.mxu0 %v673
    %697 = vmatprep.subr.mxu0 0.0
    %698 = vmatpush1.msra.mxu0 %v672
    %699 = vmatprep.subr.mxu0 0.0
    %700 = vmatpush1.msra.mxu0 %v671
    %701 = vmatprep.subr.mxu0 0.0
    %702 = vmatpush1.msra.mxu0 %v670
    %703 = vmatprep.subr.mxu0 0.0
    %704 = vmatpush1.msra.mxu0 %v669
    %705 = vmatprep.subr.mxu0 0.0
    %706 = vmatpush1.msra.mxu0 %v668
    %707 = vmatprep.subr.mxu0 0.0
    %708 = vmatpush1.msra.mxu0 %v667
    %709 = vmatprep.subr.mxu0 0.0
    %710 = vmatpush1.msra.mxu0 %v666
    %711 = vmatprep.subr.mxu0 0.0
    %712 = vmatpush1.msra.mxu0 %v665
    %713 = vmatprep.subr.mxu0 0.0
    %714 = vmatpush2.msra.mxu0 0.0
    %715 = vmatprep.subr.mxu0 0.0
    %716 = vmatpush2.msra.mxu0 0.0
    %717 = vmatprep.subr.mxu0 0.0
    %718 = vmatpush2.msra.mxu0 0.0
    %719 = vmatprep.subr.mxu0 0.0
    %720 = vmatpush2.msra.mxu0 0.0
    %721 = vmatprep.subr.mxu0 0.0
    %722 = vmatpush2.msra.mxu0 0.0
    %723 = vmatprep.subr.mxu0 0.0
    %724 = vmatpush2.msra.mxu0 0.0
    %725 = vmatprep.subr.mxu0 0.0
    %726 = vmatpush2.msra.mxu0 0.0
    %727 = vmatprep.subr.mxu0 0.0
    %728 = vmatpush2.msra.mxu0 0.0
    %729 = vmatprep.subr.mxu0 0.0
    %730 = vmatpush2.msra.mxu0 0.0
    %731 = vmatprep.subr.mxu0 0.0
    %732 = vmatpush2.msra.mxu0 0.0
    %733 = vmatprep.subr.mxu0 0.0
    %734 = vmatpush2.msra.mxu0 0.0
    %735 = vmatprep.subr.mxu0 0.0
    %736 = vmatpush2.msra.mxu0 0.0
    %737 = vmatprep.subr.mxu0 0.0
    %738 = vmatpush2.msra.mxu0 0.0
    %739 = vmatprep.subr.mxu0 0.0
    %740 = vmatpush2.msra.mxu0 0.0
    %741 = vmatprep.subr.mxu0 0.0
    %742 = vmatpush2.msra.mxu0 0.0
    %743 = vmatprep.subr.mxu0 0.0
    %744 = vmatpush2.msra.mxu0 0.0
    %745 = vmatprep.mubr.f32.mxu0 0.0
    %746 = vmatmul.mubr.f32.gmra.mxu0 %v630
    %v747 = vpop.f32.mrf.mxu0
    %v748 = vadd.f32 0.0, %v747
    %v749 = vpop.f32.mrf.mxu0
    %750 = vmatprep.mubr.f32.mxu0 0.0
    %751 = vmatmul.mubr.f32.gmra.mxu0 %v635
    %v752 = vpop.f32.mrf.mxu0
    %v753 = vadd.f32 0.0, %v752
    %v754 = vpop.f32.mrf.mxu0
    %755 = vdwg.mxu0
    %756 = vmatprep.subr.mxu0 0.0
    %757 = vmatpush1.msra.mxu0 %v663
    %758 = vmatprep.subr.mxu0 0.0
    %759 = vmatpush1.msra.mxu0 %v662
    %760 = vmatprep.subr.mxu0 0.0
    %761 = vmatpush1.msra.mxu0 %v661
    %762 = vmatprep.subr.mxu0 0.0
    %763 = vmatpush1.msra.mxu0 %v660
    %764 = vmatprep.subr.mxu0 0.0
    %765 = vmatpush1.msra.mxu0 %v659
    %766 = vmatprep.subr.mxu0 0.0
    %767 = vmatpush1.msra.mxu0 %v658
    %768 = vmatprep.subr.mxu0 0.0
    %769 = vmatpush1.msra.mxu0 %v657
    %770 = vmatprep.subr.mxu0 0.0
    %771 = vmatpush1.msra.mxu0 %v656
    %772 = vmatprep.subr.mxu0 0.0
    %773 = vmatpush1.msra.mxu0 %v655
    %774 = vmatprep.subr.mxu0 0.0
    %775 = vmatpush1.msra.mxu0 %v654
    %776 = vmatprep.subr.mxu0 0.0
    %777 = vmatpush1.msra.mxu0 %v653
    %778 = vmatprep.subr.mxu0 0.0
    %779 = vmatpush1.msra.mxu0 %v652
    %780 = vmatprep.subr.mxu0 0.0
    %781 = vmatpush1.msra.mxu0 %v651
    %782 = vmatprep.subr.mxu0 0.0
    %783 = vmatpush1.msra.mxu0 %v650
    %784 = vmatprep.subr.mxu0 0.0
    %785 = vmatpush1.msra.mxu0 %v649
    %786 = vmatprep.subr.mxu0 0.0
    %787 = vmatpush1.msra.mxu0 %v648
    %788 = vmatprep.subr.mxu0 0.0
    %789 = vmatpush2.msra.mxu0 0.0
    %790 = vmatprep.subr.mxu0 0.0
    %791 = vmatpush2.msra.mxu0 0.0
    %792 = vmatprep.subr.mxu0 0.0
    %793 = vmatpush2.msra.mxu0 0.0
    %794 = vmatprep.subr.mxu0 0.0
    %795 = vmatpush2.msra.mxu0 0.0
    %796 = vmatprep.subr.mxu0 0.0
    %797 = vmatpush2.msra.mxu0 0.0
    %798 = vmatprep.subr.mxu0 0.0
    %799 = vmatpush2.msra.mxu0 0.0
    %800 = vmatprep.subr.mxu0 0.0
    %801 = vmatpush2.msra.mxu0 0.0
    %802 = vmatprep.subr.mxu0 0.0
    %803 = vmatpush2.msra.mxu0 0.0
    %804 = vmatprep.subr.mxu0 0.0
    %805 = vmatpush2.msra.mxu0 0.0
    %806 = vmatprep.subr.mxu0 0.0
    %807 = vmatpush2.msra.mxu0 0.0
    %808 = vmatprep.subr.mxu0 0.0
    %809 = vmatpush2.msra.mxu0 0.0
    %810 = vmatprep.subr.mxu0 0.0
    %811 = vmatpush2.msra.mxu0 0.0
    %812 = vmatprep.subr.mxu0 0.0
    %813 = vmatpush2.msra.mxu0 0.0
    %814 = vmatprep.subr.mxu0 0.0
    %815 = vmatpush2.msra.mxu0 0.0
    %816 = vmatprep.subr.mxu0 0.0
    %817 = vmatpush2.msra.mxu0 0.0
    %818 = vmatprep.subr.mxu0 0.0
    %819 = vmatpush2.msra.mxu0 0.0
    %820 = vmatprep.mubr.f32.mxu0 0.0
    %821 = vmatmul.mubr.f32.gmra.mxu0 %v620
    %v822 = vpop.f32.mrf.mxu0
    %v823 = vadd.f32 %v748, %v822
    %v824 = vpop.f32.mrf.mxu0
    %825 = vmatprep.mubr.f32.mxu0 0.0
    %826 = vmatmul.mubr.f32.gmra.mxu0 %v625
    %v827 = vpop.f32.mrf.mxu0
    %v828 = vadd.f32 %v753, %v827
    %v829 = vpop.f32.mrf.mxu0
    %830 = vdwg.mxu0
    %s831 = scalar_lea.vmem %s3, 256
    %v832 = vld [vmem:[%s831] sm:$0xff]
    %v833 = vld [vmem:[%s831 + $0x8] sm:$0xff]
    %v834 = vld [vmem:[%s831 + $0x10] sm:$0xff]
    %v835 = vld [vmem:[%s831 + $0x18] sm:$0xff]
    %v836 = vld [vmem:[%s831 + $0x20] sm:$0xff]
    %v837 = vld [vmem:[%s831 + $0x28] sm:$0xff]
    %v838 = vld [vmem:[%s831 + $0x30] sm:$0xff]
    %v839 = vld [vmem:[%s831 + $0x38] sm:$0xff]
    %v840 = vld [vmem:[%s831 + $0x40] sm:$0xff]
    %v841 = vld [vmem:[%s831 + $0x48] sm:$0xff]
    %v842 = vld [vmem:[%s831 + $0x50] sm:$0xff]
    %v843 = vld [vmem:[%s831 + $0x58] sm:$0xff]
    %v844 = vld [vmem:[%s831 + $0x60] sm:$0xff]
    %v845 = vld [vmem:[%s831 + $0x68] sm:$0xff]
    %v846 = vld [vmem:[%s831 + $0x70] sm:$0xff]
    %v847 = vld [vmem:[%s831 + $0x78] sm:$0xff]
    %848 = vmatprep.subr.mxu0 0.0
    %849 = vmatpush1.msra.mxu0 %v847
    %850 = vmatprep.subr.mxu0 0.0
    %851 = vmatpush1.msra.mxu0 %v846
    %852 = vmatprep.subr.mxu0 0.0
    %853 = vmatpush1.msra.mxu0 %v845
    %854 = vmatprep.subr.mxu0 0.0
    %855 = vmatpush1.msra.mxu0 %v844
    %856 = vmatprep.subr.mxu0 0.0
    %857 = vmatpush1.msra.mxu0 %v843
    %858 = vmatprep.subr.mxu0 0.0
    %859 = vmatpush1.msra.mxu0 %v842
    %860 = vmatprep.subr.mxu0 0.0
    %861 = vmatpush1.msra.mxu0 %v841
    %862 = vmatprep.subr.mxu0 0.0
    %863 = vmatpush1.msra.mxu0 %v840
    %864 = vmatprep.subr.mxu0 0.0
    %865 = vmatpush1.msra.mxu0 %v839
    %866 = vmatprep.subr.mxu0 0.0
    %867 = vmatpush1.msra.mxu0 %v838
    %868 = vmatprep.subr.mxu0 0.0
    %869 = vmatpush1.msra.mxu0 %v837
    %870 = vmatprep.subr.mxu0 0.0
    %871 = vmatpush1.msra.mxu0 %v836
    %872 = vmatprep.subr.mxu0 0.0
    %873 = vmatpush1.msra.mxu0 %v835
    %874 = vmatprep.subr.mxu0 0.0
    %875 = vmatpush1.msra.mxu0 %v834
    %876 = vmatprep.subr.mxu0 0.0
    %877 = vmatpush1.msra.mxu0 %v833
    %878 = vmatprep.subr.mxu0 0.0
    %879 = vmatpush1.msra.mxu0 %v832
    %880 = vmatprep.subr.mxu0 0.0
    %881 = vmatpush2.msra.mxu0 0.0
    %882 = vmatprep.subr.mxu0 0.0
    %883 = vmatpush2.msra.mxu0 0.0
    %884 = vmatprep.subr.mxu0 0.0
    %885 = vmatpush2.msra.mxu0 0.0
    %886 = vmatprep.subr.mxu0 0.0
    %887 = vmatpush2.msra.mxu0 0.0
    %888 = vmatprep.subr.mxu0 0.0
    %889 = vmatpush2.msra.mxu0 0.0
    %890 = vmatprep.subr.mxu0 0.0
    %891 = vmatpush2.msra.mxu0 0.0
    %892 = vmatprep.subr.mxu0 0.0
    %893 = vmatpush2.msra.mxu0 0.0
    %894 = vmatprep.subr.mxu0 0.0
    %895 = vmatpush2.msra.mxu0 0.0
    %896 = vmatprep.subr.mxu0 0.0
    %897 = vmatpush2.msra.mxu0 0.0
    %898 = vmatprep.subr.mxu0 0.0
    %899 = vmatpush2.msra.mxu0 0.0
    %900 = vmatprep.subr.mxu0 0.0
    %901 = vmatpush2.msra.mxu0 0.0
    %902 = vmatprep.subr.mxu0 0.0
    %903 = vmatpush2.msra.mxu0 0.0
    %904 = vmatprep.subr.mxu0 0.0
    %905 = vmatpush2.msra.mxu0 0.0
    %906 = vmatprep.subr.mxu0 0.0
    %907 = vmatpush2.msra.mxu0 0.0
    %908 = vmatprep.subr.mxu0 0.0
    %909 = vmatpush2.msra.mxu0 0.0
    %910 = vmatprep.subr.mxu0 0.0
    %911 = vmatpush2.msra.mxu0 0.0
    %912 = vmatprep.mubr.f32.mxu0 0.0
    %913 = vmatmul.mubr.f32.gmra.mxu0 %v640
    %v914 = vpop.f32.mrf.mxu0
    %v915 = vadd.f32 0.0, %v914
    %v916 = vpop.f32.mrf.mxu0
    %917 = vmatprep.mubr.f32.mxu0 0.0
    %918 = vmatmul.mubr.f32.gmra.mxu0 %v645
    %v919 = vpop.f32.mrf.mxu0
    %v920 = vadd.f32 0.0, %v919
    %v921 = vpop.f32.mrf.mxu0
    %922 = vdwg.mxu0
    %v923 = vadd.f32 %v823, %v915
    %v924 = vadd.f32 %v828, %v920
    %v925 = vmax.f32 %v923, 0.0
    %v926 = vmax.f32 %v924, 0.0
    %v927 = vld [vmem:[%s1 + $0x90] sm:$0xff]
    %v928 = vld [vmem:[%s1 + $0x98] sm:$0xff]
    %v929 = vld [vmem:[%s1 + $0xa0] sm:$0xff]
    %vm930 = vcmask 130048
    %v932 = vsel %vm930, %v927, 0
    %v935 = vsel %vm930, %v928, 0
    %v938 = vsel %vm930, %v929, 0
    %940 = vmatprep.subr.mxu0 0.0
    %941 = vmatpush1.msra.mxu0 0.0
    %942 = vmatprep.subr.mxu0 0.0
    %943 = vmatpush1.msra.mxu0 0.0
    %944 = vmatprep.subr.mxu0 0.0
    %945 = vmatpush1.msra.mxu0 0.0
    %946 = vmatprep.subr.mxu0 0.0
    %947 = vmatpush1.msra.mxu0 0.0
    %948 = vmatprep.subr.mxu0 0.0
    %949 = vmatpush1.msra.mxu0 0.0
    %950 = vmatprep.subr.mxu0 0.0
    %951 = vmatpush1.msra.mxu0 0.0
    %952 = vmatprep.subr.mxu0 0.0
    %953 = vmatpush1.msra.mxu0 0.0
    %954 = vmatprep.subr.mxu0 0.0
    %955 = vmatpush1.msra.mxu0 0.0
    %956 = vmatprep.subr.mxu0 0.0
    %957 = vmatpush1.msra.mxu0 0.0
    %958 = vmatprep.subr.mxu0 0.0
    %959 = vmatpush1.msra.mxu0 0.0
    %960 = vmatprep.subr.mxu0 0.0
    %961 = vmatpush1.msra.mxu0 0.0
    %962 = vmatprep.subr.mxu0 0.0
    %963 = vmatpush1.msra.mxu0 0.0
    %964 = vmatprep.subr.mxu0 0.0
    %965 = vmatpush1.msra.mxu0 0.0
    %966 = vmatprep.subr.mxu0 0.0
    %967 = vmatpush1.msra.mxu0 0.0
    %968 = vmatprep.subr.mxu0 0.0
    %969 = vmatpush1.msra.mxu0 %v926
    %970 = vmatprep.subr.mxu0 0.0
    %971 = vmatpush1.msra.mxu0 %v925
    %972 = vmatprep.subr.mxu0 0.0
    %973 = vmatpush2.msra.mxu0 0.0
    %974 = vmatprep.subr.mxu0 0.0
    %975 = vmatpush2.msra.mxu0 0.0
    %976 = vmatprep.subr.mxu0 0.0
    %977 = vmatpush2.msra.mxu0 0.0
    %978 = vmatprep.subr.mxu0 0.0
    %979 = vmatpush2.msra.mxu0 0.0
    %980 = vmatprep.subr.mxu0 0.0
    %981 = vmatpush2.msra.mxu0 0.0
    %982 = vmatprep.subr.mxu0 0.0
    %983 = vmatpush2.msra.mxu0 0.0
    %984 = vmatprep.subr.mxu0 0.0
    %985 = vmatpush2.msra.mxu0 0.0
    %986 = vmatprep.subr.mxu0 0.0
    %987 = vmatpush2.msra.mxu0 0.0
    %988 = vmatprep.subr.mxu0 0.0
    %989 = vmatpush2.msra.mxu0 0.0
    %990 = vmatprep.subr.mxu0 0.0
    %991 = vmatpush2.msra.mxu0 0.0
    %992 = vmatprep.subr.mxu0 0.0
    %993 = vmatpush2.msra.mxu0 0.0
    %994 = vmatprep.subr.mxu0 0.0
    %995 = vmatpush2.msra.mxu0 0.0
    %996 = vmatprep.subr.mxu0 0.0
    %997 = vmatpush2.msra.mxu0 0.0
    %998 = vmatprep.subr.mxu0 0.0
    %999 = vmatpush2.msra.mxu0 0.0
    %1000 = vmatprep.subr.mxu0 0.0
    %1001 = vmatpush2.msra.mxu0 0.0
    %1002 = vmatprep.subr.mxu0 0.0
    %1003 = vmatpush2.msra.mxu0 0.0
    %1004 = vmatprep.mubr.f32.mxu0 0.0
    %1005 = vmatmul.mubr.f32.gmra.mxu0 %v932
    %v1006 = vpop.f32.mrf.mxu0
    %v1007 = vadd.f32 0.0, %v1006
    %v1008 = vpop.f32.mrf.mxu0
    %1009 = vmatprep.mubr.f32.mxu0 0.0
    %1010 = vmatmul.mubr.f32.gmra.mxu0 %v935
    %v1011 = vpop.f32.mrf.mxu0
    %v1012 = vadd.f32 0.0, %v1011
    %v1013 = vpop.f32.mrf.mxu0
    %1014 = vmatprep.mubr.f32.mxu0 0.0
    %1015 = vmatmul.mubr.f32.gmra.mxu0 %v938
    %v1016 = vpop.f32.mrf.mxu0
    %v1017 = vadd.f32 0.0, %v1016
    %v1018 = vpop.f32.mrf.mxu0
    %1019 = vdwg.mxu0
    %v1020 = vld [vmem:[%s4] sm:$0xff]
    %v1021 = vld [vmem:[%s4 + $0x8] sm:$0xff]
    %v1022 = vld [vmem:[%s4 + $0x10] sm:$0xff]
    %v1023 = vld [vmem:[%s4 + $0x18] sm:$0xff]
    %v1024 = vld [vmem:[%s4 + $0x20] sm:$0xff]
    %v1025 = vld [vmem:[%s4 + $0x28] sm:$0xff]
    %v1026 = vld [vmem:[%s4 + $0x30] sm:$0xff]
    %v1027 = vld [vmem:[%s4 + $0x38] sm:$0xff]
    %s1028 = scalar_lea.vmem %s4, 64
    %v1029 = vld [vmem:[%s1028] sm:$0xff]
    %v1030 = vld [vmem:[%s1028 + $0x8] sm:$0xff]
    %v1031 = vld [vmem:[%s1028 + $0x10] sm:$0xff]
    %v1032 = vld [vmem:[%s1028 + $0x18] sm:$0xff]
    %v1033 = vld [vmem:[%s1028 + $0x20] sm:$0xff]
    %v1034 = vld [vmem:[%s1028 + $0x28] sm:$0xff]
    %v1035 = vld [vmem:[%s1028 + $0x30] sm:$0xff]
    %v1036 = vld [vmem:[%s1028 + $0x38] sm:$0xff]
    %v1038 = vsel %vm53, %v1012, 0
    %1040 = vmatprep.subr.mxu0 0.0
    %1041 = vmatpush1.msra.mxu0 0.0
    %1042 = vmatprep.subr.mxu0 0.0
    %1043 = vmatpush1.msra.mxu0 0.0
    %1044 = vmatprep.subr.mxu0 0.0
    %1045 = vmatpush1.msra.mxu0 0.0
    %1046 = vmatprep.subr.mxu0 0.0
    %1047 = vmatpush1.msra.mxu0 0.0
    %1048 = vmatprep.subr.mxu0 0.0
    %1049 = vmatpush1.msra.mxu0 0.0
    %1050 = vmatprep.subr.mxu0 0.0
    %1051 = vmatpush1.msra.mxu0 0.0
    %1052 = vmatprep.subr.mxu0 0.0
    %1053 = vmatpush1.msra.mxu0 0.0
    %1054 = vmatprep.subr.mxu0 0.0
    %1055 = vmatpush1.msra.mxu0 0.0
    %1056 = vmatprep.subr.mxu0 0.0
    %1057 = vmatpush1.msra.mxu0 %v1036
    %1058 = vmatprep.subr.mxu0 0.0
    %1059 = vmatpush1.msra.mxu0 %v1035
    %1060 = vmatprep.subr.mxu0 0.0
    %1061 = vmatpush1.msra.mxu0 %v1034
    %1062 = vmatprep.subr.mxu0 0.0
    %1063 = vmatpush1.msra.mxu0 %v1033
    %1064 = vmatprep.subr.mxu0 0.0
    %1065 = vmatpush1.msra.mxu0 %v1032
    %1066 = vmatprep.subr.mxu0 0.0
    %1067 = vmatpush1.msra.mxu0 %v1031
    %1068 = vmatprep.subr.mxu0 0.0
    %1069 = vmatpush1.msra.mxu0 %v1030
    %1070 = vmatprep.subr.mxu0 0.0
    %1071 = vmatpush1.msra.mxu0 %v1029
    %1072 = vmatprep.subr.mxu0 0.0
    %1073 = vmatpush2.msra.mxu0 0.0
    %1074 = vmatprep.subr.mxu0 0.0
    %1075 = vmatpush2.msra.mxu0 0.0
    %1076 = vmatprep.subr.mxu0 0.0
    %1077 = vmatpush2.msra.mxu0 0.0
    %1078 = vmatprep.subr.mxu0 0.0
    %1079 = vmatpush2.msra.mxu0 0.0
    %1080 = vmatprep.subr.mxu0 0.0
    %1081 = vmatpush2.msra.mxu0 0.0
    %1082 = vmatprep.subr.mxu0 0.0
    %1083 = vmatpush2.msra.mxu0 0.0
    %1084 = vmatprep.subr.mxu0 0.0
    %1085 = vmatpush2.msra.mxu0 0.0
    %1086 = vmatprep.subr.mxu0 0.0
    %1087 = vmatpush2.msra.mxu0 0.0
    %1088 = vmatprep.subr.mxu0 0.0
    %1089 = vmatpush2.msra.mxu0 0.0
    %1090 = vmatprep.subr.mxu0 0.0
    %1091 = vmatpush2.msra.mxu0 0.0
    %1092 = vmatprep.subr.mxu0 0.0
    %1093 = vmatpush2.msra.mxu0 0.0
    %1094 = vmatprep.subr.mxu0 0.0
    %1095 = vmatpush2.msra.mxu0 0.0
    %1096 = vmatprep.subr.mxu0 0.0
    %1097 = vmatpush2.msra.mxu0 0.0
    %1098 = vmatprep.subr.mxu0 0.0
    %1099 = vmatpush2.msra.mxu0 0.0
    %1100 = vmatprep.subr.mxu0 0.0
    %1101 = vmatpush2.msra.mxu0 0.0
    %1102 = vmatprep.subr.mxu0 0.0
    %1103 = vmatpush2.msra.mxu0 0.0
    %1104 = vmatprep.mubr.f32.mxu0 0.0
    %1105 = vmatmul.mubr.f32.gmra.mxu0 %v1038
    %v1106 = vpop.f32.mrf.mxu0
    %v1107 = vadd.f32 0.0, %v1106
    %v1108 = vpop.f32.mrf.mxu0
    %1109 = vdwg.mxu0
    %v1111 = vsel %vm53, %v1007, 0
    %1113 = vmatprep.subr.mxu0 0.0
    %1114 = vmatpush1.msra.mxu0 0.0
    %1115 = vmatprep.subr.mxu0 0.0
    %1116 = vmatpush1.msra.mxu0 0.0
    %1117 = vmatprep.subr.mxu0 0.0
    %1118 = vmatpush1.msra.mxu0 0.0
    %1119 = vmatprep.subr.mxu0 0.0
    %1120 = vmatpush1.msra.mxu0 0.0
    %1121 = vmatprep.subr.mxu0 0.0
    %1122 = vmatpush1.msra.mxu0 0.0
    %1123 = vmatprep.subr.mxu0 0.0
    %1124 = vmatpush1.msra.mxu0 0.0
    %1125 = vmatprep.subr.mxu0 0.0
    %1126 = vmatpush1.msra.mxu0 0.0
    %1127 = vmatprep.subr.mxu0 0.0
    %1128 = vmatpush1.msra.mxu0 0.0
    %1129 = vmatprep.subr.mxu0 0.0
    %1130 = vmatpush1.msra.mxu0 %v1027
    %1131 = vmatprep.subr.mxu0 0.0
    %1132 = vmatpush1.msra.mxu0 %v1026
    %1133 = vmatprep.subr.mxu0 0.0
    %1134 = vmatpush1.msra.mxu0 %v1025
    %1135 = vmatprep.subr.mxu0 0.0
    %1136 = vmatpush1.msra.mxu0 %v1024
    %1137 = vmatprep.subr.mxu0 0.0
    %1138 = vmatpush1.msra.mxu0 %v1023
    %1139 = vmatprep.subr.mxu0 0.0
    %1140 = vmatpush1.msra.mxu0 %v1022
    %1141 = vmatprep.subr.mxu0 0.0
    %1142 = vmatpush1.msra.mxu0 %v1021
    %1143 = vmatprep.subr.mxu0 0.0
    %1144 = vmatpush1.msra.mxu0 %v1020
    %1145 = vmatprep.subr.mxu0 0.0
    %1146 = vmatpush2.msra.mxu0 0.0
    %1147 = vmatprep.subr.mxu0 0.0
    %1148 = vmatpush2.msra.mxu0 0.0
    %1149 = vmatprep.subr.mxu0 0.0
    %1150 = vmatpush2.msra.mxu0 0.0
    %1151 = vmatprep.subr.mxu0 0.0
    %1152 = vmatpush2.msra.mxu0 0.0
    %1153 = vmatprep.subr.mxu0 0.0
    %1154 = vmatpush2.msra.mxu0 0.0
    %1155 = vmatprep.subr.mxu0 0.0
    %1156 = vmatpush2.msra.mxu0 0.0
    %1157 = vmatprep.subr.mxu0 0.0
    %1158 = vmatpush2.msra.mxu0 0.0
    %1159 = vmatprep.subr.mxu0 0.0
    %1160 = vmatpush2.msra.mxu0 0.0
    %1161 = vmatprep.subr.mxu0 0.0
    %1162 = vmatpush2.msra.mxu0 0.0
    %1163 = vmatprep.subr.mxu0 0.0
    %1164 = vmatpush2.msra.mxu0 0.0
    %1165 = vmatprep.subr.mxu0 0.0
    %1166 = vmatpush2.msra.mxu0 0.0
    %1167 = vmatprep.subr.mxu0 0.0
    %1168 = vmatpush2.msra.mxu0 0.0
    %1169 = vmatprep.subr.mxu0 0.0
    %1170 = vmatpush2.msra.mxu0 0.0
    %1171 = vmatprep.subr.mxu0 0.0
    %1172 = vmatpush2.msra.mxu0 0.0
    %1173 = vmatprep.subr.mxu0 0.0
    %1174 = vmatpush2.msra.mxu0 0.0
    %1175 = vmatprep.subr.mxu0 0.0
    %1176 = vmatpush2.msra.mxu0 0.0
    %1177 = vmatprep.mubr.f32.mxu0 0.0
    %1178 = vmatmul.mubr.f32.gmra.mxu0 %v1111
    %v1179 = vpop.f32.mrf.mxu0
    %v1180 = vadd.f32 %v1107, %v1179
    %v1181 = vpop.f32.mrf.mxu0
    %1182 = vdwg.mxu0
    %s1183 = scalar_lea.vmem %s4, 128
    %v1184 = vld [vmem:[%s1183] sm:$0xff]
    %v1185 = vld [vmem:[%s1183 + $0x8] sm:$0xff]
    %v1186 = vld [vmem:[%s1183 + $0x10] sm:$0xff]
    %v1187 = vld [vmem:[%s1183 + $0x18] sm:$0xff]
    %v1188 = vld [vmem:[%s1183 + $0x20] sm:$0xff]
    %v1189 = vld [vmem:[%s1183 + $0x28] sm:$0xff]
    %v1190 = vld [vmem:[%s1183 + $0x30] sm:$0xff]
    %v1191 = vld [vmem:[%s1183 + $0x38] sm:$0xff]
    %v1193 = vsel %vm53, %v1017, 0
    %1195 = vmatprep.subr.mxu0 0.0
    %1196 = vmatpush1.msra.mxu0 0.0
    %1197 = vmatprep.subr.mxu0 0.0
    %1198 = vmatpush1.msra.mxu0 0.0
    %1199 = vmatprep.subr.mxu0 0.0
    %1200 = vmatpush1.msra.mxu0 0.0
    %1201 = vmatprep.subr.mxu0 0.0
    %1202 = vmatpush1.msra.mxu0 0.0
    %1203 = vmatprep.subr.mxu0 0.0
    %1204 = vmatpush1.msra.mxu0 0.0
    %1205 = vmatprep.subr.mxu0 0.0
    %1206 = vmatpush1.msra.mxu0 0.0
    %1207 = vmatprep.subr.mxu0 0.0
    %1208 = vmatpush1.msra.mxu0 0.0
    %1209 = vmatprep.subr.mxu0 0.0
    %1210 = vmatpush1.msra.mxu0 0.0
    %1211 = vmatprep.subr.mxu0 0.0
    %1212 = vmatpush1.msra.mxu0 %v1191
    %1213 = vmatprep.subr.mxu0 0.0
    %1214 = vmatpush1.msra.mxu0 %v1190
    %1215 = vmatprep.subr.mxu0 0.0
    %1216 = vmatpush1.msra.mxu0 %v1189
    %1217 = vmatprep.subr.mxu0 0.0
    %1218 = vmatpush1.msra.mxu0 %v1188
    %1219 = vmatprep.subr.mxu0 0.0
    %1220 = vmatpush1.msra.mxu0 %v1187
    %1221 = vmatprep.subr.mxu0 0.0
    %1222 = vmatpush1.msra.mxu0 %v1186
    %1223 = vmatprep.subr.mxu0 0.0
    %1224 = vmatpush1.msra.mxu0 %v1185
    %1225 = vmatprep.subr.mxu0 0.0
    %1226 = vmatpush1.msra.mxu0 %v1184
    %1227 = vmatprep.subr.mxu0 0.0
    %1228 = vmatpush2.msra.mxu0 0.0
    %1229 = vmatprep.subr.mxu0 0.0
    %1230 = vmatpush2.msra.mxu0 0.0
    %1231 = vmatprep.subr.mxu0 0.0
    %1232 = vmatpush2.msra.mxu0 0.0
    %1233 = vmatprep.subr.mxu0 0.0
    %1234 = vmatpush2.msra.mxu0 0.0
    %1235 = vmatprep.subr.mxu0 0.0
    %1236 = vmatpush2.msra.mxu0 0.0
    %1237 = vmatprep.subr.mxu0 0.0
    %1238 = vmatpush2.msra.mxu0 0.0
    %1239 = vmatprep.subr.mxu0 0.0
    %1240 = vmatpush2.msra.mxu0 0.0
    %1241 = vmatprep.subr.mxu0 0.0
    %1242 = vmatpush2.msra.mxu0 0.0
    %1243 = vmatprep.subr.mxu0 0.0
    %1244 = vmatpush2.msra.mxu0 0.0
    %1245 = vmatprep.subr.mxu0 0.0
    %1246 = vmatpush2.msra.mxu0 0.0
    %1247 = vmatprep.subr.mxu0 0.0
    %1248 = vmatpush2.msra.mxu0 0.0
    %1249 = vmatprep.subr.mxu0 0.0
    %1250 = vmatpush2.msra.mxu0 0.0
    %1251 = vmatprep.subr.mxu0 0.0
    %1252 = vmatpush2.msra.mxu0 0.0
    %1253 = vmatprep.subr.mxu0 0.0
    %1254 = vmatpush2.msra.mxu0 0.0
    %1255 = vmatprep.subr.mxu0 0.0
    %1256 = vmatpush2.msra.mxu0 0.0
    %1257 = vmatprep.subr.mxu0 0.0
    %1258 = vmatpush2.msra.mxu0 0.0
    %1259 = vmatprep.mubr.f32.mxu0 0.0
    %1260 = vmatmul.mubr.f32.gmra.mxu0 %v1193
    %v1261 = vpop.f32.mrf.mxu0
    %v1262 = vadd.f32 0.0, %v1261
    %v1263 = vpop.f32.mrf.mxu0
    %1264 = vdwg.mxu0
    %v1265 = vadd.f32 %v1180, %v1262
    %v1266 = vmax.f32 %v1265, 0.0
    %v1267 = vld [vmem:[%s1 + $0xa8] sm:$0xff]
    %v1268 = vld [vmem:[%s1 + $0xb0] sm:$0xf]
    %vm1269 = vcmask 64512
    %v1271 = vsel %vm1269, %v1267, 0
    %v1274 = vsel %vm1269, %v1268, 0
    %1276 = vmatprep.subr.mxu0 0.0
    %1277 = vmatpush1.msra.mxu0 0.0
    %1278 = vmatprep.subr.mxu0 0.0
    %1279 = vmatpush1.msra.mxu0 0.0
    %1280 = vmatprep.subr.mxu0 0.0
    %1281 = vmatpush1.msra.mxu0 0.0
    %1282 = vmatprep.subr.mxu0 0.0
    %1283 = vmatpush1.msra.mxu0 0.0
    %1284 = vmatprep.subr.mxu0 0.0
    %1285 = vmatpush1.msra.mxu0 0.0
    %1286 = vmatprep.subr.mxu0 0.0
    %1287 = vmatpush1.msra.mxu0 0.0
    %1288 = vmatprep.subr.mxu0 0.0
    %1289 = vmatpush1.msra.mxu0 0.0
    %1290 = vmatprep.subr.mxu0 0.0
    %1291 = vmatpush1.msra.mxu0 0.0
    %1292 = vmatprep.subr.mxu0 0.0
    %1293 = vmatpush1.msra.mxu0 0.0
    %1294 = vmatprep.subr.mxu0 0.0
    %1295 = vmatpush1.msra.mxu0 0.0
    %1296 = vmatprep.subr.mxu0 0.0
    %1297 = vmatpush1.msra.mxu0 0.0
    %1298 = vmatprep.subr.mxu0 0.0
    %1299 = vmatpush1.msra.mxu0 0.0
    %1300 = vmatprep.subr.mxu0 0.0
    %1301 = vmatpush1.msra.mxu0 0.0
    %1302 = vmatprep.subr.mxu0 0.0
    %1303 = vmatpush1.msra.mxu0 0.0
    %1304 = vmatprep.subr.mxu0 0.0
    %1305 = vmatpush1.msra.mxu0 0.0
    %1306 = vmatprep.subr.mxu0 0.0
    %1307 = vmatpush1.msra.mxu0 %v1266
    %1308 = vmatprep.subr.mxu0 0.0
    %1309 = vmatpush2.msra.mxu0 0.0
    %1310 = vmatprep.subr.mxu0 0.0
    %1311 = vmatpush2.msra.mxu0 0.0
    %1312 = vmatprep.subr.mxu0 0.0
    %1313 = vmatpush2.msra.mxu0 0.0
    %1314 = vmatprep.subr.mxu0 0.0
    %1315 = vmatpush2.msra.mxu0 0.0
    %1316 = vmatprep.subr.mxu0 0.0
    %1317 = vmatpush2.msra.mxu0 0.0
    %1318 = vmatprep.subr.mxu0 0.0
    %1319 = vmatpush2.msra.mxu0 0.0
    %1320 = vmatprep.subr.mxu0 0.0
    %1321 = vmatpush2.msra.mxu0 0.0
    %1322 = vmatprep.subr.mxu0 0.0
    %1323 = vmatpush2.msra.mxu0 0.0
    %1324 = vmatprep.subr.mxu0 0.0
    %1325 = vmatpush2.msra.mxu0 0.0
    %1326 = vmatprep.subr.mxu0 0.0
    %1327 = vmatpush2.msra.mxu0 0.0
    %1328 = vmatprep.subr.mxu0 0.0
    %1329 = vmatpush2.msra.mxu0 0.0
    %1330 = vmatprep.subr.mxu0 0.0
    %1331 = vmatpush2.msra.mxu0 0.0
    %1332 = vmatprep.subr.mxu0 0.0
    %1333 = vmatpush2.msra.mxu0 0.0
    %1334 = vmatprep.subr.mxu0 0.0
    %1335 = vmatpush2.msra.mxu0 0.0
    %1336 = vmatprep.subr.mxu0 0.0
    %1337 = vmatpush2.msra.mxu0 0.0
    %1338 = vmatprep.subr.mxu0 0.0
    %1339 = vmatpush2.msra.mxu0 0.0
    %1340 = vmatprep.mubr.f32.mxu0 0.0
    %1341 = vmatmul.mubr.f32.gmra.mxu0 %v1271
    %v1342 = vpop.f32.mrf.mxu0
    %v1343 = vadd.f32 0.0, %v1342
    %v1344 = vpop.f32.mrf.mxu0
    %1345 = vmatprep.mubr.f32.mxu0 0.0
    %1346 = vmatmul.mubr.f32.gmra.mxu0 %v1274
    %v1347 = vpop.f32.mrf.mxu0
    %v1348 = vadd.f32 0.0, %v1347
    %v1349 = vpop.f32.mrf.mxu0
    %1350 = vdwg.mxu0
    %v1351 = vld [vmem:[%s5] sm:$0xff]
    %v1352 = vld [vmem:[%s5 + $0x8] sm:$0xff]
    %v1353 = vld [vmem:[%s5 + $0x10] sm:$0xff]
    %v1354 = vld [vmem:[%s5 + $0x18] sm:$0xff]
    %v1355 = vld [vmem:[%s5 + $0x20] sm:$0xff]
    %v1356 = vld [vmem:[%s5 + $0x28] sm:$0xff]
    %v1357 = vld [vmem:[%s5 + $0x30] sm:$0xff]
    %v1358 = vld [vmem:[%s5 + $0x38] sm:$0xff]
    %s1359 = scalar_lea.vmem %s5, 64
    %v1360 = vld [vmem:[%s1359] sm:$0xff]
    %v1361 = vld [vmem:[%s1359 + $0x8] sm:$0xff]
    %v1362 = vld [vmem:[%s1359 + $0x10] sm:$0xff]
    %v1363 = vld [vmem:[%s1359 + $0x18] sm:$0xff]
    %v1364 = vld [vmem:[%s1359 + $0x20] sm:$0xff]
    %v1365 = vld [vmem:[%s1359 + $0x28] sm:$0xff]
    %v1366 = vld [vmem:[%s1359 + $0x30] sm:$0xff]
    %v1367 = vld [vmem:[%s1359 + $0x38] sm:$0xff]
    %v1369 = vrot.slane %v1343, 4
    %v1370 = vsel %vm53, %v1369, 0
    %1372 = vmatprep.subr.mxu0 0.0
    %1373 = vmatpush1.msra.mxu0 0.0
    %1374 = vmatprep.subr.mxu0 0.0
    %1375 = vmatpush1.msra.mxu0 0.0
    %1376 = vmatprep.subr.mxu0 0.0
    %1377 = vmatpush1.msra.mxu0 0.0
    %1378 = vmatprep.subr.mxu0 0.0
    %1379 = vmatpush1.msra.mxu0 0.0
    %1380 = vmatprep.subr.mxu0 0.0
    %1381 = vmatpush1.msra.mxu0 0.0
    %1382 = vmatprep.subr.mxu0 0.0
    %1383 = vmatpush1.msra.mxu0 0.0
    %1384 = vmatprep.subr.mxu0 0.0
    %1385 = vmatpush1.msra.mxu0 0.0
    %1386 = vmatprep.subr.mxu0 0.0
    %1387 = vmatpush1.msra.mxu0 0.0
    %1388 = vmatprep.subr.mxu0 0.0
    %1389 = vmatpush1.msra.mxu0 %v1367
    %1390 = vmatprep.subr.mxu0 0.0
    %1391 = vmatpush1.msra.mxu0 %v1366
    %1392 = vmatprep.subr.mxu0 0.0
    %1393 = vmatpush1.msra.mxu0 %v1365
    %1394 = vmatprep.subr.mxu0 0.0
    %1395 = vmatpush1.msra.mxu0 %v1364
    %1396 = vmatprep.subr.mxu0 0.0
    %1397 = vmatpush1.msra.mxu0 %v1363
    %1398 = vmatprep.subr.mxu0 0.0
    %1399 = vmatpush1.msra.mxu0 %v1362
    %1400 = vmatprep.subr.mxu0 0.0
    %1401 = vmatpush1.msra.mxu0 %v1361
    %1402 = vmatprep.subr.mxu0 0.0
    %1403 = vmatpush1.msra.mxu0 %v1360
    %1404 = vmatprep.subr.mxu0 0.0
    %1405 = vmatpush2.msra.mxu0 0.0
    %1406 = vmatprep.subr.mxu0 0.0
    %1407 = vmatpush2.msra.mxu0 0.0
    %1408 = vmatprep.subr.mxu0 0.0
    %1409 = vmatpush2.msra.mxu0 0.0
    %1410 = vmatprep.subr.mxu0 0.0
    %1411 = vmatpush2.msra.mxu0 0.0
    %1412 = vmatprep.subr.mxu0 0.0
    %1413 = vmatpush2.msra.mxu0 0.0
    %1414 = vmatprep.subr.mxu0 0.0
    %1415 = vmatpush2.msra.mxu0 0.0
    %1416 = vmatprep.subr.mxu0 0.0
    %1417 = vmatpush2.msra.mxu0 0.0
    %1418 = vmatprep.subr.mxu0 0.0
    %1419 = vmatpush2.msra.mxu0 0.0
    %1420 = vmatprep.subr.mxu0 0.0
    %1421 = vmatpush2.msra.mxu0 0.0
    %1422 = vmatprep.subr.mxu0 0.0
    %1423 = vmatpush2.msra.mxu0 0.0
    %1424 = vmatprep.subr.mxu0 0.0
    %1425 = vmatpush2.msra.mxu0 0.0
    %1426 = vmatprep.subr.mxu0 0.0
    %1427 = vmatpush2.msra.mxu0 0.0
    %1428 = vmatprep.subr.mxu0 0.0
    %1429 = vmatpush2.msra.mxu0 0.0
    %1430 = vmatprep.subr.mxu0 0.0
    %1431 = vmatpush2.msra.mxu0 0.0
    %1432 = vmatprep.subr.mxu0 0.0
    %1433 = vmatpush2.msra.mxu0 0.0
    %1434 = vmatprep.subr.mxu0 0.0
    %1435 = vmatpush2.msra.mxu0 0.0
    %1436 = vmatprep.mubr.f32.mxu0 0.0
    %1437 = vmatmul.mubr.f32.gmra.mxu0 %v1370
    %v1438 = vpop.f32.mrf.mxu0
    %v1439 = vadd.f32 0.0, %v1438
    %v1440 = vpop.f32.mrf.mxu0
    %1441 = vdwg.mxu0
    %v1442 = vsel %vm53, %v1343, 0
    %1444 = vmatprep.subr.mxu0 0.0
    %1445 = vmatpush1.msra.mxu0 0.0
    %1446 = vmatprep.subr.mxu0 0.0
    %1447 = vmatpush1.msra.mxu0 0.0
    %1448 = vmatprep.subr.mxu0 0.0
    %1449 = vmatpush1.msra.mxu0 0.0
    %1450 = vmatprep.subr.mxu0 0.0
    %1451 = vmatpush1.msra.mxu0 0.0
    %1452 = vmatprep.subr.mxu0 0.0
    %1453 = vmatpush1.msra.mxu0 0.0
    %1454 = vmatprep.subr.mxu0 0.0
    %1455 = vmatpush1.msra.mxu0 0.0
    %1456 = vmatprep.subr.mxu0 0.0
    %1457 = vmatpush1.msra.mxu0 0.0
    %1458 = vmatprep.subr.mxu0 0.0
    %1459 = vmatpush1.msra.mxu0 0.0
    %1460 = vmatprep.subr.mxu0 0.0
    %1461 = vmatpush1.msra.mxu0 %v1358
    %1462 = vmatprep.subr.mxu0 0.0
    %1463 = vmatpush1.msra.mxu0 %v1357
    %1464 = vmatprep.subr.mxu0 0.0
    %1465 = vmatpush1.msra.mxu0 %v1356
    %1466 = vmatprep.subr.mxu0 0.0
    %1467 = vmatpush1.msra.mxu0 %v1355
    %1468 = vmatprep.subr.mxu0 0.0
    %1469 = vmatpush1.msra.mxu0 %v1354
    %1470 = vmatprep.subr.mxu0 0.0
    %1471 = vmatpush1.msra.mxu0 %v1353
    %1472 = vmatprep.subr.mxu0 0.0
    %1473 = vmatpush1.msra.mxu0 %v1352
    %1474 = vmatprep.subr.mxu0 0.0
    %1475 = vmatpush1.msra.mxu0 %v1351
    %1476 = vmatprep.subr.mxu0 0.0
    %1477 = vmatpush2.msra.mxu0 0.0
    %1478 = vmatprep.subr.mxu0 0.0
    %1479 = vmatpush2.msra.mxu0 0.0
    %1480 = vmatprep.subr.mxu0 0.0
    %1481 = vmatpush2.msra.mxu0 0.0
    %1482 = vmatprep.subr.mxu0 0.0
    %1483 = vmatpush2.msra.mxu0 0.0
    %1484 = vmatprep.subr.mxu0 0.0
    %1485 = vmatpush2.msra.mxu0 0.0
    %1486 = vmatprep.subr.mxu0 0.0
    %1487 = vmatpush2.msra.mxu0 0.0
    %1488 = vmatprep.subr.mxu0 0.0
    %1489 = vmatpush2.msra.mxu0 0.0
    %1490 = vmatprep.subr.mxu0 0.0
    %1491 = vmatpush2.msra.mxu0 0.0
    %1492 = vmatprep.subr.mxu0 0.0
    %1493 = vmatpush2.msra.mxu0 0.0
    %1494 = vmatprep.subr.mxu0 0.0
    %1495 = vmatpush2.msra.mxu0 0.0
    %1496 = vmatprep.subr.mxu0 0.0
    %1497 = vmatpush2.msra.mxu0 0.0
    %1498 = vmatprep.subr.mxu0 0.0
    %1499 = vmatpush2.msra.mxu0 0.0
    %1500 = vmatprep.subr.mxu0 0.0
    %1501 = vmatpush2.msra.mxu0 0.0
    %1502 = vmatprep.subr.mxu0 0.0
    %1503 = vmatpush2.msra.mxu0 0.0
    %1504 = vmatprep.subr.mxu0 0.0
    %1505 = vmatpush2.msra.mxu0 0.0
    %1506 = vmatprep.subr.mxu0 0.0
    %1507 = vmatpush2.msra.mxu0 0.0
    %1508 = vmatprep.mubr.f32.mxu0 0.0
    %1509 = vmatmul.mubr.f32.gmra.mxu0 %v1442
    %v1510 = vpop.f32.mrf.mxu0
    %v1511 = vadd.f32 %v1439, %v1510
    %v1512 = vpop.f32.mrf.mxu0
    %1513 = vdwg.mxu0
    %s1514 = scalar_lea.vmem %s5, 128
    %v1515 = vld [vmem:[%s1514] sm:$0xff]
    %v1516 = vld [vmem:[%s1514 + $0x8] sm:$0xff]
    %v1517 = vld [vmem:[%s1514 + $0x10] sm:$0xff]
    %v1518 = vld [vmem:[%s1514 + $0x18] sm:$0xff]
    %v1519 = vld [vmem:[%s1514 + $0x20] sm:$0xff]
    %v1520 = vld [vmem:[%s1514 + $0x28] sm:$0xff]
    %v1521 = vld [vmem:[%s1514 + $0x30] sm:$0xff]
    %v1522 = vld [vmem:[%s1514 + $0x38] sm:$0xff]
    %v1524 = vsel %vm53, %v1348, 0
    %1526 = vmatprep.subr.mxu0 0.0
    %1527 = vmatpush1.msra.mxu0 0.0
    %1528 = vmatprep.subr.mxu0 0.0
    %1529 = vmatpush1.msra.mxu0 0.0
    %1530 = vmatprep.subr.mxu0 0.0
    %1531 = vmatpush1.msra.mxu0 0.0
    %1532 = vmatprep.subr.mxu0 0.0
    %1533 = vmatpush1.msra.mxu0 0.0
    %1534 = vmatprep.subr.mxu0 0.0
    %1535 = vmatpush1.msra.mxu0 0.0
    %1536 = vmatprep.subr.mxu0 0.0
    %1537 = vmatpush1.msra.mxu0 0.0
    %1538 = vmatprep.subr.mxu0 0.0
    %1539 = vmatpush1.msra.mxu0 0.0
    %1540 = vmatprep.subr.mxu0 0.0
    %1541 = vmatpush1.msra.mxu0 0.0
    %1542 = vmatprep.subr.mxu0 0.0
    %1543 = vmatpush1.msra.mxu0 %v1522
    %1544 = vmatprep.subr.mxu0 0.0
    %1545 = vmatpush1.msra.mxu0 %v1521
    %1546 = vmatprep.subr.mxu0 0.0
    %1547 = vmatpush1.msra.mxu0 %v1520
    %1548 = vmatprep.subr.mxu0 0.0
    %1549 = vmatpush1.msra.mxu0 %v1519
    %1550 = vmatprep.subr.mxu0 0.0
    %1551 = vmatpush1.msra.mxu0 %v1518
    %1552 = vmatprep.subr.mxu0 0.0
    %1553 = vmatpush1.msra.mxu0 %v1517
    %1554 = vmatprep.subr.mxu0 0.0
    %1555 = vmatpush1.msra.mxu0 %v1516
    %1556 = vmatprep.subr.mxu0 0.0
    %1557 = vmatpush1.msra.mxu0 %v1515
    %1558 = vmatprep.subr.mxu0 0.0
    %1559 = vmatpush2.msra.mxu0 0.0
    %1560 = vmatprep.subr.mxu0 0.0
    %1561 = vmatpush2.msra.mxu0 0.0
    %1562 = vmatprep.subr.mxu0 0.0
    %1563 = vmatpush2.msra.mxu0 0.0
    %1564 = vmatprep.subr.mxu0 0.0
    %1565 = vmatpush2.msra.mxu0 0.0
    %1566 = vmatprep.subr.mxu0 0.0
    %1567 = vmatpush2.msra.mxu0 0.0
    %1568 = vmatprep.subr.mxu0 0.0
    %1569 = vmatpush2.msra.mxu0 0.0
    %1570 = vmatprep.subr.mxu0 0.0
    %1571 = vmatpush2.msra.mxu0 0.0
    %1572 = vmatprep.subr.mxu0 0.0
    %1573 = vmatpush2.msra.mxu0 0.0
    %1574 = vmatprep.subr.mxu0 0.0
    %1575 = vmatpush2.msra.mxu0 0.0
    %1576 = vmatprep.subr.mxu0 0.0
    %1577 = vmatpush2.msra.mxu0 0.0
    %1578 = vmatprep.subr.mxu0 0.0
    %1579 = vmatpush2.msra.mxu0 0.0
    %1580 = vmatprep.subr.mxu0 0.0
    %1581 = vmatpush2.msra.mxu0 0.0
    %1582 = vmatprep.subr.mxu0 0.0
    %1583 = vmatpush2.msra.mxu0 0.0
    %1584 = vmatprep.subr.mxu0 0.0
    %1585 = vmatpush2.msra.mxu0 0.0
    %1586 = vmatprep.subr.mxu0 0.0
    %1587 = vmatpush2.msra.mxu0 0.0
    %1588 = vmatprep.subr.mxu0 0.0
    %1589 = vmatpush2.msra.mxu0 0.0
    %1590 = vmatprep.mubr.f32.mxu0 0.0
    %1591 = vmatmul.mubr.f32.gmra.mxu0 %v1524
    %v1592 = vpop.f32.mrf.mxu0
    %v1593 = vadd.f32 0.0, %v1592
    %v1594 = vpop.f32.mrf.mxu0
    %1595 = vdwg.mxu0
    %v1596 = vadd.f32 %v1511, %v1593
    %v1597 = vmax.f32 %v1596, 0.0
    %v1598 = vld [vmem:[%s6] sm:$0xff]
    %v1599 = vld [vmem:[%s6 + $0x8] sm:$0xff]
    %v1600 = vld [vmem:[%s6 + $0x10] sm:$0xff]
    %v1601 = vld [vmem:[%s6 + $0x18] sm:$0xff]
    %v1602 = vld [vmem:[%s6 + $0x20] sm:$0xff]
    %v1603 = vld [vmem:[%s6 + $0x28] sm:$0xff]
    %v1604 = vld [vmem:[%s6 + $0x30] sm:$0xff]
    %v1605 = vld [vmem:[%s6 + $0x38] sm:$0xff]
    %v1606 = vld [vmem:[%s6 + $0x40] sm:$0xff]
    %v1607 = vld [vmem:[%s6 + $0x48] sm:$0xff]
    %v1608 = vld [vmem:[%s6 + $0x50] sm:$0xff]
    %v1609 = vld [vmem:[%s6 + $0x58] sm:$0xff]
    %v1610 = vld [vmem:[%s7] sm:$0x1]
    %v1611 = vld [vmem:[%s7 + $0x1] sm:$0x1]
    %v1612 = vlaneseq
    %v1613 = vshrl.u32 %v1612, 7
    %v1614 = vsub.s32 0, %v1613
    %v1615 = vrot.slane %v1610, %v1614
    %v1617 = vsel %vm53, %v1597, 0
    %1619 = vmatprep.subr.mxu0 0.0
    %1620 = vmatpush1.msra.mxu0 0.0
    %1621 = vmatprep.subr.mxu0 0.0
    %1622 = vmatpush1.msra.mxu0 0.0
    %1623 = vmatprep.subr.mxu0 0.0
    %1624 = vmatpush1.msra.mxu0 0.0
    %1625 = vmatprep.subr.mxu0 0.0
    %1626 = vmatpush1.msra.mxu0 0.0
    %1627 = vmatprep.subr.mxu0 0.0
    %1628 = vmatpush1.msra.mxu0 0.0
    %1629 = vmatprep.subr.mxu0 0.0
    %1630 = vmatpush1.msra.mxu0 0.0
    %1631 = vmatprep.subr.mxu0 0.0
    %1632 = vmatpush1.msra.mxu0 0.0
    %1633 = vmatprep.subr.mxu0 0.0
    %1634 = vmatpush1.msra.mxu0 0.0
    %1635 = vmatprep.subr.mxu0 0.0
    %1636 = vmatpush1.msra.mxu0 %v1605
    %1637 = vmatprep.subr.mxu0 0.0
    %1638 = vmatpush1.msra.mxu0 %v1604
    %1639 = vmatprep.subr.mxu0 0.0
    %1640 = vmatpush1.msra.mxu0 %v1603
    %1641 = vmatprep.subr.mxu0 0.0
    %1642 = vmatpush1.msra.mxu0 %v1602
    %1643 = vmatprep.subr.mxu0 0.0
    %1644 = vmatpush1.msra.mxu0 %v1601
    %1645 = vmatprep.subr.mxu0 0.0
    %1646 = vmatpush1.msra.mxu0 %v1600
    %1647 = vmatprep.subr.mxu0 0.0
    %1648 = vmatpush1.msra.mxu0 %v1599
    %1649 = vmatprep.subr.mxu0 0.0
    %1650 = vmatpush1.msra.mxu0 %v1598
    %1651 = vmatprep.subr.mxu0 0.0
    %1652 = vmatpush2.msra.mxu0 0.0
    %1653 = vmatprep.subr.mxu0 0.0
    %1654 = vmatpush2.msra.mxu0 0.0
    %1655 = vmatprep.subr.mxu0 0.0
    %1656 = vmatpush2.msra.mxu0 0.0
    %1657 = vmatprep.subr.mxu0 0.0
    %1658 = vmatpush2.msra.mxu0 0.0
    %1659 = vmatprep.subr.mxu0 0.0
    %1660 = vmatpush2.msra.mxu0 0.0
    %1661 = vmatprep.subr.mxu0 0.0
    %1662 = vmatpush2.msra.mxu0 0.0
    %1663 = vmatprep.subr.mxu0 0.0
    %1664 = vmatpush2.msra.mxu0 0.0
    %1665 = vmatprep.subr.mxu0 0.0
    %1666 = vmatpush2.msra.mxu0 0.0
    %1667 = vmatprep.subr.mxu0 0.0
    %1668 = vmatpush2.msra.mxu0 0.0
    %1669 = vmatprep.subr.mxu0 0.0
    %1670 = vmatpush2.msra.mxu0 0.0
    %1671 = vmatprep.subr.mxu0 0.0
    %1672 = vmatpush2.msra.mxu0 0.0
    %1673 = vmatprep.subr.mxu0 0.0
    %1674 = vmatpush2.msra.mxu0 0.0
    %1675 = vmatprep.subr.mxu0 0.0
    %1676 = vmatpush2.msra.mxu0 0.0
    %1677 = vmatprep.subr.mxu0 0.0
    %1678 = vmatpush2.msra.mxu0 0.0
    %1679 = vmatprep.subr.mxu0 0.0
    %1680 = vmatpush2.msra.mxu0 0.0
    %1681 = vmatprep.subr.mxu0 0.0
    %1682 = vmatpush2.msra.mxu0 0.0
    %1683 = vmatprep.mubr.f32.mxu0 0.0
    %1684 = vmatmul.mubr.f32.gmra.mxu0 %v1617
    %v1685 = vpop.f32.mrf.mxu0
    %v1686 = vadd.f32 %v1615, %v1685
    %v1687 = vpop.f32.mrf.mxu0
    %1688 = vdwg.mxu0
    %v1689 = vlaneseq
    %v1690 = vshrl.u32 %v1689, 7
    %v1691 = vsub.s32 0, %v1690
    %v1692 = vrot.slane %v1611, %v1691
    %v1694 = vsel %vm224, 0.0, 0
    %1696 = vmatprep.subr.mxu0 0.0
    %1697 = vmatpush1.msra.mxu0 0.0
    %1698 = vmatprep.subr.mxu0 0.0
    %1699 = vmatpush1.msra.mxu0 0.0
    %1700 = vmatprep.subr.mxu0 0.0
    %1701 = vmatpush1.msra.mxu0 0.0
    %1702 = vmatprep.subr.mxu0 0.0
    %1703 = vmatpush1.msra.mxu0 0.0
    %1704 = vmatprep.subr.mxu0 0.0
    %1705 = vmatpush1.msra.mxu0 0.0
    %1706 = vmatprep.subr.mxu0 0.0
    %1707 = vmatpush1.msra.mxu0 0.0
    %1708 = vmatprep.subr.mxu0 0.0
    %1709 = vmatpush1.msra.mxu0 0.0
    %1710 = vmatprep.subr.mxu0 0.0
    %1711 = vmatpush1.msra.mxu0 0.0
    %1712 = vmatprep.subr.mxu0 0.0
    %1713 = vmatpush1.msra.mxu0 0.0
    %1714 = vmatprep.subr.mxu0 0.0
    %1715 = vmatpush1.msra.mxu0 0.0
    %1716 = vmatprep.subr.mxu0 0.0
    %1717 = vmatpush1.msra.mxu0 0.0
    %1718 = vmatprep.subr.mxu0 0.0
    %1719 = vmatpush1.msra.mxu0 0.0
    %1720 = vmatprep.subr.mxu0 0.0
    %1721 = vmatpush1.msra.mxu0 %v1609
    %1722 = vmatprep.subr.mxu0 0.0
    %1723 = vmatpush1.msra.mxu0 %v1608
    %1724 = vmatprep.subr.mxu0 0.0
    %1725 = vmatpush1.msra.mxu0 %v1607
    %1726 = vmatprep.subr.mxu0 0.0
    %1727 = vmatpush1.msra.mxu0 %v1606
    %1728 = vmatprep.subr.mxu0 0.0
    %1729 = vmatpush2.msra.mxu0 0.0
    %1730 = vmatprep.subr.mxu0 0.0
    %1731 = vmatpush2.msra.mxu0 0.0
    %1732 = vmatprep.subr.mxu0 0.0
    %1733 = vmatpush2.msra.mxu0 0.0
    %1734 = vmatprep.subr.mxu0 0.0
    %1735 = vmatpush2.msra.mxu0 0.0
    %1736 = vmatprep.subr.mxu0 0.0
    %1737 = vmatpush2.msra.mxu0 0.0
    %1738 = vmatprep.subr.mxu0 0.0
    %1739 = vmatpush2.msra.mxu0 0.0
    %1740 = vmatprep.subr.mxu0 0.0
    %1741 = vmatpush2.msra.mxu0 0.0
    %1742 = vmatprep.subr.mxu0 0.0
    %1743 = vmatpush2.msra.mxu0 0.0
    %1744 = vmatprep.subr.mxu0 0.0
    %1745 = vmatpush2.msra.mxu0 0.0
    %1746 = vmatprep.subr.mxu0 0.0
    %1747 = vmatpush2.msra.mxu0 0.0
    %1748 = vmatprep.subr.mxu0 0.0
    %1749 = vmatpush2.msra.mxu0 0.0
    %1750 = vmatprep.subr.mxu0 0.0
    %1751 = vmatpush2.msra.mxu0 0.0
    %1752 = vmatprep.subr.mxu0 0.0
    %1753 = vmatpush2.msra.mxu0 0.0
    %1754 = vmatprep.subr.mxu0 0.0
    %1755 = vmatpush2.msra.mxu0 0.0
    %1756 = vmatprep.subr.mxu0 0.0
    %1757 = vmatpush2.msra.mxu0 0.0
    %1758 = vmatprep.subr.mxu0 0.0
    %1759 = vmatpush2.msra.mxu0 0.0
    %1760 = vmatprep.mubr.f32.mxu0 0.0
    %1761 = vmatmul.mubr.f32.gmra.mxu0 %v1694
    %v1762 = vpop.f32.mrf.mxu0
    %v1763 = vadd.f32 %v1692, %v1762
    %v1764 = vpop.f32.mrf.mxu0
    %1765 = vdwg.mxu0
    %v1766 = vadd.f32 %v1686, %v1763
    %v1767 = vxor.u32 %v1766, 2147483648
    %v1768 = vmul.f32 %v1767, 1.442695
    %v1769 = vpow.pop %v1768
    %v1770 = vadd.f32 %v1769, 1.0
    %v1771 = vrcp.pop %v1770
    %v1772 = vmul.f32 1.0, %v1771
    %1774 = vrot.lane.b32.xlu0 %v1763, 64
    %v1775 = vpop.permute.xlu0 %1774
    %v1777 = vmul.f32 %v1772, %v1775
    %1779 = vrot.lane.b32.xlu0 %v1777, 64
    %v1780 = vpop.permute.xlu0 %1779
    %v1782 = vadd.f32 %v1686, %v1780
    %v1783 = vtanh.pop %v1782
    %v1784 = vsub.f32 1.0, %v1772
    %1786 = vrot.lane.b32.xlu0 %v1783, 96
    %v1787 = vpop.permute.xlu0 %1786
    %v1789 = vmul.f32 %v1784, %v1787
    %v1790 = vmul.f32 %v1772, 0.0
    %v1791 = vadd.f32 %v1789, %v1790
    %1793 = vrot.lane.b32.xlu0 %v1791, 96
    %v1794 = vpop.permute.xlu0 %1793
    %v1795 = vsel %vm224, %v1794, 0
    %1797 = vmatprep.subr.mxu0 0.0
    %1798 = vmatpush1.msra.mxu0 0.0
    %1799 = vmatprep.subr.mxu0 0.0
    %1800 = vmatpush1.msra.mxu0 0.0
    %1801 = vmatprep.subr.mxu0 0.0
    %1802 = vmatpush1.msra.mxu0 0.0
    %1803 = vmatprep.subr.mxu0 0.0
    %1804 = vmatpush1.msra.mxu0 0.0
    %1805 = vmatprep.subr.mxu0 0.0
    %1806 = vmatpush1.msra.mxu0 0.0
    %1807 = vmatprep.subr.mxu0 0.0
    %1808 = vmatpush1.msra.mxu0 0.0
    %1809 = vmatprep.subr.mxu0 0.0
    %1810 = vmatpush1.msra.mxu0 0.0
    %1811 = vmatprep.subr.mxu0 0.0
    %1812 = vmatpush1.msra.mxu0 0.0
    %1813 = vmatprep.subr.mxu0 0.0
    %1814 = vmatpush1.msra.mxu0 0.0
    %1815 = vmatprep.subr.mxu0 0.0
    %1816 = vmatpush1.msra.mxu0 0.0
    %1817 = vmatprep.subr.mxu0 0.0
    %1818 = vmatpush1.msra.mxu0 0.0
    %1819 = vmatprep.subr.mxu0 0.0
    %1820 = vmatpush1.msra.mxu0 0.0
    %1821 = vmatprep.subr.mxu0 0.0
    %1822 = vmatpush1.msra.mxu0 %v1609
    %1823 = vmatprep.subr.mxu0 0.0
    %1824 = vmatpush1.msra.mxu0 %v1608
    %1825 = vmatprep.subr.mxu0 0.0
    %1826 = vmatpush1.msra.mxu0 %v1607
    %1827 = vmatprep.subr.mxu0 0.0
    %1828 = vmatpush1.msra.mxu0 %v1606
    %1829 = vmatprep.subr.mxu0 0.0
    %1830 = vmatpush2.msra.mxu0 0.0
    %1831 = vmatprep.subr.mxu0 0.0
    %1832 = vmatpush2.msra.mxu0 0.0
    %1833 = vmatprep.subr.mxu0 0.0
    %1834 = vmatpush2.msra.mxu0 0.0
    %1835 = vmatprep.subr.mxu0 0.0
    %1836 = vmatpush2.msra.mxu0 0.0
    %1837 = vmatprep.subr.mxu0 0.0
    %1838 = vmatpush2.msra.mxu0 0.0
    %1839 = vmatprep.subr.mxu0 0.0
    %1840 = vmatpush2.msra.mxu0 0.0
    %1841 = vmatprep.subr.mxu0 0.0
    %1842 = vmatpush2.msra.mxu0 0.0
    %1843 = vmatprep.subr.mxu0 0.0
    %1844 = vmatpush2.msra.mxu0 0.0
    %1845 = vmatprep.subr.mxu0 0.0
    %1846 = vmatpush2.msra.mxu0 0.0
    %1847 = vmatprep.subr.mxu0 0.0
    %1848 = vmatpush2.msra.mxu0 0.0
    %1849 = vmatprep.subr.mxu0 0.0
    %1850 = vmatpush2.msra.mxu0 0.0
    %1851 = vmatprep.subr.mxu0 0.0
    %1852 = vmatpush2.msra.mxu0 0.0
    %1853 = vmatprep.subr.mxu0 0.0
    %1854 = vmatpush2.msra.mxu0 0.0
    %1855 = vmatprep.subr.mxu0 0.0
    %1856 = vmatpush2.msra.mxu0 0.0
    %1857 = vmatprep.subr.mxu0 0.0
    %1858 = vmatpush2.msra.mxu0 0.0
    %1859 = vmatprep.subr.mxu0 0.0
    %1860 = vmatpush2.msra.mxu0 0.0
    %1861 = vmatprep.mubr.f32.mxu0 0.0
    %1862 = vmatmul.mubr.f32.gmra.mxu0 %v1795
    %v1863 = vpop.f32.mrf.mxu0
    %v1864 = vadd.f32 %v1692, %v1863
    %v1865 = vpop.f32.mrf.mxu0
    %1866 = vdwg.mxu0
    %v1868 = vrot.slane %v1864, 6
    %v1870 = vadd.f32 %v1686, %v1868
    %v1871 = vxor.u32 %v1870, 2147483648
    %v1872 = vmul.f32 %v1871, 1.442695
    %v1873 = vpow.pop %v1872
    %v1874 = vadd.f32 %v1873, 1.0
    %v1875 = vrcp.pop %v1874
    %v1876 = vmul.f32 1.0, %v1875
    %1877 = vrot.lane.b32.xlu0 %v1868, 64
    %v1878 = vpop.permute.xlu0 %1877
    %v1880 = vmul.f32 %v1876, %v1878
    %1882 = vrot.lane.b32.xlu0 %v1880, 64
    %v1883 = vpop.permute.xlu0 %1882
    %v1885 = vadd.f32 %v1686, %v1883
    %v1886 = vtanh.pop %v1885
    %v1887 = vsub.f32 1.0, %v1876
    %1889 = vrot.lane.b32.xlu0 %v1886, 96
    %v1890 = vpop.permute.xlu0 %1889
    %v1892 = vmul.f32 %v1887, %v1890
    %v1893 = vrot.slane %v1791, 6
    %v1895 = vmul.f32 %v1876, %v1893
    %v1896 = vadd.f32 %v1892, %v1895
    %v1897 = vld [vmem:[%s8] sm:$0xff]
    %v1898 = vld [vmem:[%s8 + $0x8] sm:$0xff]
    %v1899 = vld [vmem:[%s8 + $0x10] sm:$0xff]
    %v1900 = vld [vmem:[%s8 + $0x18] sm:$0xff]
    %v1901 = vld [vmem:[%s7 + $0x2] sm:$0x1]
    %v1902 = vlaneseq
    %v1903 = vshrl.u32 %v1902, 7
    %v1904 = vsub.s32 0, %v1903
    %v1905 = vrot.slane %v1901, %v1904
    %v1907 = vrot.slane %v1896, 2
    %1908 = vrot.lane.b32.xlu0 %v1907, 96
    %v1909 = vpop.permute.xlu0 %1908
    %v1910 = vsel %vm224, %v1909, 0
    %1912 = vmatprep.subr.mxu0 0.0
    %1913 = vmatpush1.msra.mxu0 0.0
    %1914 = vmatprep.subr.mxu0 0.0
    %1915 = vmatpush1.msra.mxu0 0.0
    %1916 = vmatprep.subr.mxu0 0.0
    %1917 = vmatpush1.msra.mxu0 0.0
    %1918 = vmatprep.subr.mxu0 0.0
    %1919 = vmatpush1.msra.mxu0 0.0
    %1920 = vmatprep.subr.mxu0 0.0
    %1921 = vmatpush1.msra.mxu0 0.0
    %1922 = vmatprep.subr.mxu0 0.0
    %1923 = vmatpush1.msra.mxu0 0.0
    %1924 = vmatprep.subr.mxu0 0.0
    %1925 = vmatpush1.msra.mxu0 0.0
    %1926 = vmatprep.subr.mxu0 0.0
    %1927 = vmatpush1.msra.mxu0 0.0
    %1928 = vmatprep.subr.mxu0 0.0
    %1929 = vmatpush1.msra.mxu0 0.0
    %1930 = vmatprep.subr.mxu0 0.0
    %1931 = vmatpush1.msra.mxu0 0.0
    %1932 = vmatprep.subr.mxu0 0.0
    %1933 = vmatpush1.msra.mxu0 0.0
    %1934 = vmatprep.subr.mxu0 0.0
    %1935 = vmatpush1.msra.mxu0 0.0
    %1936 = vmatprep.subr.mxu0 0.0
    %1937 = vmatpush1.msra.mxu0 %v1900
    %1938 = vmatprep.subr.mxu0 0.0
    %1939 = vmatpush1.msra.mxu0 %v1899
    %1940 = vmatprep.subr.mxu0 0.0
    %1941 = vmatpush1.msra.mxu0 %v1898
    %1942 = vmatprep.subr.mxu0 0.0
    %1943 = vmatpush1.msra.mxu0 %v1897
    %1944 = vmatprep.subr.mxu0 0.0
    %1945 = vmatpush2.msra.mxu0 0.0
    %1946 = vmatprep.subr.mxu0 0.0
    %1947 = vmatpush2.msra.mxu0 0.0
    %1948 = vmatprep.subr.mxu0 0.0
    %1949 = vmatpush2.msra.mxu0 0.0
    %1950 = vmatprep.subr.mxu0 0.0
    %1951 = vmatpush2.msra.mxu0 0.0
    %1952 = vmatprep.subr.mxu0 0.0
    %1953 = vmatpush2.msra.mxu0 0.0
    %1954 = vmatprep.subr.mxu0 0.0
    %1955 = vmatpush2.msra.mxu0 0.0
    %1956 = vmatprep.subr.mxu0 0.0
    %1957 = vmatpush2.msra.mxu0 0.0
    %1958 = vmatprep.subr.mxu0 0.0
    %1959 = vmatpush2.msra.mxu0 0.0
    %1960 = vmatprep.subr.mxu0 0.0
    %1961 = vmatpush2.msra.mxu0 0.0
    %1962 = vmatprep.subr.mxu0 0.0
    %1963 = vmatpush2.msra.mxu0 0.0
    %1964 = vmatprep.subr.mxu0 0.0
    %1965 = vmatpush2.msra.mxu0 0.0
    %1966 = vmatprep.subr.mxu0 0.0
    %1967 = vmatpush2.msra.mxu0 0.0
    %1968 = vmatprep.subr.mxu0 0.0
    %1969 = vmatpush2.msra.mxu0 0.0
    %1970 = vmatprep.subr.mxu0 0.0
    %1971 = vmatpush2.msra.mxu0 0.0
    %1972 = vmatprep.subr.mxu0 0.0
    %1973 = vmatpush2.msra.mxu0 0.0
    %1974 = vmatprep.subr.mxu0 0.0
    %1975 = vmatpush2.msra.mxu0 0.0
    %1976 = vmatprep.mubr.f32.mxu0 0.0
    %1977 = vmatmul.mubr.f32.gmra.mxu0 %v1910
    %v1978 = vpop.f32.mrf.mxu0
    %v1979 = vadd.f32 %v1905, %v1978
    %v1980 = vpop.f32.mrf.mxu0
    %1981 = vdwg.mxu0
    %v1982 = vtanh.pop %v1979
    %v1983 = vld [vmem:[%s8 + $0x20] sm:$0xff]
    %v1984 = vld [vmem:[%s8 + $0x28] sm:$0xff]
    %v1985 = vld [vmem:[%s8 + $0x30] sm:$0xff]
    %v1986 = vld [vmem:[%s8 + $0x38] sm:$0xff]
    %v1987 = vld [vmem:[%s7 + $0x3] sm:$0x1]
    %v1988 = vlaneseq
    %v1989 = vshrl.u32 %v1988, 7
    %v1990 = vsub.s32 0, %v1989
    %v1991 = vrot.slane %v1987, %v1990
    %v1993 = vsel %vm224, %v1982, 0
    %1995 = vmatprep.subr.mxu0 0.0
    %1996 = vmatpush1.msra.mxu0 0.0
    %1997 = vmatprep.subr.mxu0 0.0
    %1998 = vmatpush1.msra.mxu0 0.0
    %1999 = vmatprep.subr.mxu0 0.0
    %2000 = vmatpush1.msra.mxu0 0.0
    %2001 = vmatprep.subr.mxu0 0.0
    %2002 = vmatpush1.msra.mxu0 0.0
    %2003 = vmatprep.subr.mxu0 0.0
    %2004 = vmatpush1.msra.mxu0 0.0
    %2005 = vmatprep.subr.mxu0 0.0
    %2006 = vmatpush1.msra.mxu0 0.0
    %2007 = vmatprep.subr.mxu0 0.0
    %2008 = vmatpush1.msra.mxu0 0.0
    %2009 = vmatprep.subr.mxu0 0.0
    %2010 = vmatpush1.msra.mxu0 0.0
    %2011 = vmatprep.subr.mxu0 0.0
    %2012 = vmatpush1.msra.mxu0 0.0
    %2013 = vmatprep.subr.mxu0 0.0
    %2014 = vmatpush1.msra.mxu0 0.0
    %2015 = vmatprep.subr.mxu0 0.0
    %2016 = vmatpush1.msra.mxu0 0.0
    %2017 = vmatprep.subr.mxu0 0.0
    %2018 = vmatpush1.msra.mxu0 0.0
    %2019 = vmatprep.subr.mxu0 0.0
    %2020 = vmatpush1.msra.mxu0 %v1986
    %2021 = vmatprep.subr.mxu0 0.0
    %2022 = vmatpush1.msra.mxu0 %v1985
    %2023 = vmatprep.subr.mxu0 0.0
    %2024 = vmatpush1.msra.mxu0 %v1984
    %2025 = vmatprep.subr.mxu0 0.0
    %2026 = vmatpush1.msra.mxu0 %v1983
    %2027 = vmatprep.subr.mxu0 0.0
    %2028 = vmatpush2.msra.mxu0 0.0
    %2029 = vmatprep.subr.mxu0 0.0
    %2030 = vmatpush2.msra.mxu0 0.0
    %2031 = vmatprep.subr.mxu0 0.0
    %2032 = vmatpush2.msra.mxu0 0.0
    %2033 = vmatprep.subr.mxu0 0.0
    %2034 = vmatpush2.msra.mxu0 0.0
    %2035 = vmatprep.subr.mxu0 0.0
    %2036 = vmatpush2.msra.mxu0 0.0
    %2037 = vmatprep.subr.mxu0 0.0
    %2038 = vmatpush2.msra.mxu0 0.0
    %2039 = vmatprep.subr.mxu0 0.0
    %2040 = vmatpush2.msra.mxu0 0.0
    %2041 = vmatprep.subr.mxu0 0.0
    %2042 = vmatpush2.msra.mxu0 0.0
    %2043 = vmatprep.subr.mxu0 0.0
    %2044 = vmatpush2.msra.mxu0 0.0
    %2045 = vmatprep.subr.mxu0 0.0
    %2046 = vmatpush2.msra.mxu0 0.0
    %2047 = vmatprep.subr.mxu0 0.0
    %2048 = vmatpush2.msra.mxu0 0.0
    %2049 = vmatprep.subr.mxu0 0.0
    %2050 = vmatpush2.msra.mxu0 0.0
    %2051 = vmatprep.subr.mxu0 0.0
    %2052 = vmatpush2.msra.mxu0 0.0
    %2053 = vmatprep.subr.mxu0 0.0
    %2054 = vmatpush2.msra.mxu0 0.0
    %2055 = vmatprep.subr.mxu0 0.0
    %2056 = vmatpush2.msra.mxu0 0.0
    %2057 = vmatprep.subr.mxu0 0.0
    %2058 = vmatpush2.msra.mxu0 0.0
    %2059 = vmatprep.mubr.f32.mxu0 0.0
    %2060 = vmatmul.mubr.f32.gmra.mxu0 %v1993
    %v2061 = vpop.f32.mrf.mxu0
    %v2062 = vadd.f32 %v1991, %v2061
    %v2063 = vpop.f32.mrf.mxu0
    %2064 = vdwg.mxu0
    %v2065 = vtanh.pop %v2062
    %v2066 = vld [vmem:[%s8 + $0x40] sm:$0xff]
    %v2068 = vsel %vm224, %v2065, 0
    %v2071 = vsel %vm224, %v2066, 0
    %2073 = vmatprep.subr.mxu0 0.0
    %2074 = vmatpush1.xpose.msra.mxu0 0.0
    %2075 = vmatprep.subr.mxu0 0.0
    %2076 = vmatpush1.xpose.msra.mxu0 0.0
    %2077 = vmatprep.subr.mxu0 0.0
    %2078 = vmatpush1.xpose.msra.mxu0 0.0
    %2079 = vmatprep.subr.mxu0 0.0
    %2080 = vmatpush1.xpose.msra.mxu0 0.0
    %2081 = vmatprep.subr.mxu0 0.0
    %2082 = vmatpush1.xpose.msra.mxu0 0.0
    %2083 = vmatprep.subr.mxu0 0.0
    %2084 = vmatpush1.xpose.msra.mxu0 0.0
    %2085 = vmatprep.subr.mxu0 0.0
    %2086 = vmatpush1.xpose.msra.mxu0 0.0
    %2087 = vmatprep.subr.mxu0 0.0
    %2088 = vmatpush1.xpose.msra.mxu0 0.0
    %2089 = vmatprep.subr.mxu0 0.0
    %2090 = vmatpush1.xpose.msra.mxu0 0.0
    %2091 = vmatprep.subr.mxu0 0.0
    %2092 = vmatpush1.xpose.msra.mxu0 0.0
    %2093 = vmatprep.subr.mxu0 0.0
    %2094 = vmatpush1.xpose.msra.mxu0 0.0
    %2095 = vmatprep.subr.mxu0 0.0
    %2096 = vmatpush1.xpose.msra.mxu0 0.0
    %2097 = vmatprep.subr.mxu0 0.0
    %2098 = vmatpush1.xpose.msra.mxu0 0.0
    %2099 = vmatprep.subr.mxu0 0.0
    %2100 = vmatpush1.xpose.msra.mxu0 0.0
    %2101 = vmatprep.subr.mxu0 0.0
    %2102 = vmatpush1.xpose.msra.mxu0 0.0
    %2103 = vmatprep.subr.mxu0 0.0
    %2104 = vmatpush1.xpose.msra.mxu0 %v2071
    %2105 = vmatprep.subr.mxu0 0.0
    %2106 = vmatpush2.xpose.msra.mxu0 0.0
    %2107 = vmatprep.subr.mxu0 0.0
    %2108 = vmatpush2.xpose.msra.mxu0 0.0
    %2109 = vmatprep.subr.mxu0 0.0
    %2110 = vmatpush2.xpose.msra.mxu0 0.0
    %2111 = vmatprep.subr.mxu0 0.0
    %2112 = vmatpush2.xpose.msra.mxu0 0.0
    %2113 = vmatprep.subr.mxu0 0.0
    %2114 = vmatpush2.xpose.msra.mxu0 0.0
    %2115 = vmatprep.subr.mxu0 0.0
    %2116 = vmatpush2.xpose.msra.mxu0 0.0
    %2117 = vmatprep.subr.mxu0 0.0
    %2118 = vmatpush2.xpose.msra.mxu0 0.0
    %2119 = vmatprep.subr.mxu0 0.0
    %2120 = vmatpush2.xpose.msra.mxu0 0.0
    %2121 = vmatprep.subr.mxu0 0.0
    %2122 = vmatpush2.xpose.msra.mxu0 0.0
    %2123 = vmatprep.subr.mxu0 0.0
    %2124 = vmatpush2.xpose.msra.mxu0 0.0
    %2125 = vmatprep.subr.mxu0 0.0
    %2126 = vmatpush2.xpose.msra.mxu0 0.0
    %2127 = vmatprep.subr.mxu0 0.0
    %2128 = vmatpush2.xpose.msra.mxu0 0.0
    %2129 = vmatprep.subr.mxu0 0.0
    %2130 = vmatpush2.xpose.msra.mxu0 0.0
    %2131 = vmatprep.subr.mxu0 0.0
    %2132 = vmatpush2.xpose.msra.mxu0 0.0
    %2133 = vmatprep.subr.mxu0 0.0
    %2134 = vmatpush2.xpose.msra.mxu0 0.0
    %2135 = vmatprep.subr.mxu0 0.0
    %2136 = vmatpush2.xpose.msra.mxu0 0.0
    %2137 = vmatprep.mubr.f32.mxu0 0.0
    %2138 = vmatmul.mubr.f32.gmra.mxu0 %v2068
    %v2139 = vpop.f32.mrf.mxu0
    %v2140 = vadd.f32 0.0, %v2139
    %v2141 = vpop.f32.mrf.mxu0
    %2142 = vdwg.mxu0
    %2143 = vrot.lane.b32.xlu0 %v2065, 96
    %v2144 = vpop.permute.xlu0 %2143
    %2145 = vrot.lane.b32.xlu0 %v2066, 96
    %v2146 = vpop.permute.xlu0 %2145
    %v2147 = vsel %vm224, %v2144, 0
    %v2149 = vsel %vm224, %v2146, 0
    %2151 = vmatprep.subr.mxu0 0.0
    %2152 = vmatpush1.xpose.msra.mxu0 0.0
    %2153 = vmatprep.subr.mxu0 0.0
    %2154 = vmatpush1.xpose.msra.mxu0 0.0
    %2155 = vmatprep.subr.mxu0 0.0
    %2156 = vmatpush1.xpose.msra.mxu0 0.0
    %2157 = vmatprep.subr.mxu0 0.0
    %2158 = vmatpush1.xpose.msra.mxu0 0.0
    %2159 = vmatprep.subr.mxu0 0.0
    %2160 = vmatpush1.xpose.msra.mxu0 0.0
    %2161 = vmatprep.subr.mxu0 0.0
    %2162 = vmatpush1.xpose.msra.mxu0 0.0
    %2163 = vmatprep.subr.mxu0 0.0
    %2164 = vmatpush1.xpose.msra.mxu0 0.0
    %2165 = vmatprep.subr.mxu0 0.0
    %2166 = vmatpush1.xpose.msra.mxu0 0.0
    %2167 = vmatprep.subr.mxu0 0.0
    %2168 = vmatpush1.xpose.msra.mxu0 0.0
    %2169 = vmatprep.subr.mxu0 0.0
    %2170 = vmatpush1.xpose.msra.mxu0 0.0
    %2171 = vmatprep.subr.mxu0 0.0
    %2172 = vmatpush1.xpose.msra.mxu0 0.0
    %2173 = vmatprep.subr.mxu0 0.0
    %2174 = vmatpush1.xpose.msra.mxu0 0.0
    %2175 = vmatprep.subr.mxu0 0.0
    %2176 = vmatpush1.xpose.msra.mxu0 0.0
    %2177 = vmatprep.subr.mxu0 0.0
    %2178 = vmatpush1.xpose.msra.mxu0 0.0
    %2179 = vmatprep.subr.mxu0 0.0
    %2180 = vmatpush1.xpose.msra.mxu0 0.0
    %2181 = vmatprep.subr.mxu0 0.0
    %2182 = vmatpush1.xpose.msra.mxu0 %v2149
    %2183 = vmatprep.subr.mxu0 0.0
    %2184 = vmatpush2.xpose.msra.mxu0 0.0
    %2185 = vmatprep.subr.mxu0 0.0
    %2186 = vmatpush2.xpose.msra.mxu0 0.0
    %2187 = vmatprep.subr.mxu0 0.0
    %2188 = vmatpush2.xpose.msra.mxu0 0.0
    %2189 = vmatprep.subr.mxu0 0.0
    %2190 = vmatpush2.xpose.msra.mxu0 0.0
    %2191 = vmatprep.subr.mxu0 0.0
    %2192 = vmatpush2.xpose.msra.mxu0 0.0
    %2193 = vmatprep.subr.mxu0 0.0
    %2194 = vmatpush2.xpose.msra.mxu0 0.0
    %2195 = vmatprep.subr.mxu0 0.0
    %2196 = vmatpush2.xpose.msra.mxu0 0.0
    %2197 = vmatprep.subr.mxu0 0.0
    %2198 = vmatpush2.xpose.msra.mxu0 0.0
    %2199 = vmatprep.subr.mxu0 0.0
    %2200 = vmatpush2.xpose.msra.mxu0 0.0
    %2201 = vmatprep.subr.mxu0 0.0
    %2202 = vmatpush2.xpose.msra.mxu0 0.0
    %2203 = vmatprep.subr.mxu0 0.0
    %2204 = vmatpush2.xpose.msra.mxu0 0.0
    %2205 = vmatprep.subr.mxu0 0.0
    %2206 = vmatpush2.xpose.msra.mxu0 0.0
    %2207 = vmatprep.subr.mxu0 0.0
    %2208 = vmatpush2.xpose.msra.mxu0 0.0
    %2209 = vmatprep.subr.mxu0 0.0
    %2210 = vmatpush2.xpose.msra.mxu0 0.0
    %2211 = vmatprep.subr.mxu0 0.0
    %2212 = vmatpush2.xpose.msra.mxu0 0.0
    %2213 = vmatprep.subr.mxu0 0.0
    %2214 = vmatpush2.xpose.msra.mxu0 0.0
    %2215 = vmatprep.mubr.f32.mxu0 0.0
    %2216 = vmatmul.mubr.f32.gmra.mxu0 %v2147
    %v2217 = vpop.f32.mrf.mxu0
    %v2218 = vadd.f32 0.0, %v2217
    %v2219 = vpop.f32.mrf.mxu0
    %2220 = vdwg.mxu0
    %2221 = vrot.lane.b32.xlu0 %v2065, 64
    %v2222 = vpop.permute.xlu0 %2221
    %2223 = vrot.lane.b32.xlu0 %v2066, 64
    %v2224 = vpop.permute.xlu0 %2223
    %v2225 = vsel %vm224, %v2222, 0
    %v2227 = vsel %vm224, %v2224, 0
    %2229 = vmatprep.subr.mxu0 0.0
    %2230 = vmatpush1.xpose.msra.mxu0 0.0
    %2231 = vmatprep.subr.mxu0 0.0
    %2232 = vmatpush1.xpose.msra.mxu0 0.0
    %2233 = vmatprep.subr.mxu0 0.0
    %2234 = vmatpush1.xpose.msra.mxu0 0.0
    %2235 = vmatprep.subr.mxu0 0.0
    %2236 = vmatpush1.xpose.msra.mxu0 0.0
    %2237 = vmatprep.subr.mxu0 0.0
    %2238 = vmatpush1.xpose.msra.mxu0 0.0
    %2239 = vmatprep.subr.mxu0 0.0
    %2240 = vmatpush1.xpose.msra.mxu0 0.0
    %2241 = vmatprep.subr.mxu0 0.0
    %2242 = vmatpush1.xpose.msra.mxu0 0.0
    %2243 = vmatprep.subr.mxu0 0.0
    %2244 = vmatpush1.xpose.msra.mxu0 0.0
    %2245 = vmatprep.subr.mxu0 0.0
    %2246 = vmatpush1.xpose.msra.mxu0 0.0
    %2247 = vmatprep.subr.mxu0 0.0
    %2248 = vmatpush1.xpose.msra.mxu0 0.0
    %2249 = vmatprep.subr.mxu0 0.0
    %2250 = vmatpush1.xpose.msra.mxu0 0.0
    %2251 = vmatprep.subr.mxu0 0.0
    %2252 = vmatpush1.xpose.msra.mxu0 0.0
    %2253 = vmatprep.subr.mxu0 0.0
    %2254 = vmatpush1.xpose.msra.mxu0 0.0
    %2255 = vmatprep.subr.mxu0 0.0
    %2256 = vmatpush1.xpose.msra.mxu0 0.0
    %2257 = vmatprep.subr.mxu0 0.0
    %2258 = vmatpush1.xpose.msra.mxu0 0.0
    %2259 = vmatprep.subr.mxu0 0.0
    %2260 = vmatpush1.xpose.msra.mxu0 %v2227
    %2261 = vmatprep.subr.mxu0 0.0
    %2262 = vmatpush2.xpose.msra.mxu0 0.0
    %2263 = vmatprep.subr.mxu0 0.0
    %2264 = vmatpush2.xpose.msra.mxu0 0.0
    %2265 = vmatprep.subr.mxu0 0.0
    %2266 = vmatpush2.xpose.msra.mxu0 0.0
    %2267 = vmatprep.subr.mxu0 0.0
    %2268 = vmatpush2.xpose.msra.mxu0 0.0
    %2269 = vmatprep.subr.mxu0 0.0
    %2270 = vmatpush2.xpose.msra.mxu0 0.0
    %2271 = vmatprep.subr.mxu0 0.0
    %2272 = vmatpush2.xpose.msra.mxu0 0.0
    %2273 = vmatprep.subr.mxu0 0.0
    %2274 = vmatpush2.xpose.msra.mxu0 0.0
    %2275 = vmatprep.subr.mxu0 0.0
    %2276 = vmatpush2.xpose.msra.mxu0 0.0
    %2277 = vmatprep.subr.mxu0 0.0
    %2278 = vmatpush2.xpose.msra.mxu0 0.0
    %2279 = vmatprep.subr.mxu0 0.0
    %2280 = vmatpush2.xpose.msra.mxu0 0.0
    %2281 = vmatprep.subr.mxu0 0.0
    %2282 = vmatpush2.xpose.msra.mxu0 0.0
    %2283 = vmatprep.subr.mxu0 0.0
    %2284 = vmatpush2.xpose.msra.mxu0 0.0
    %2285 = vmatprep.subr.mxu0 0.0
    %2286 = vmatpush2.xpose.msra.mxu0 0.0
    %2287 = vmatprep.subr.mxu0 0.0
    %2288 = vmatpush2.xpose.msra.mxu0 0.0
    %2289 = vmatprep.subr.mxu0 0.0
    %2290 = vmatpush2.xpose.msra.mxu0 0.0
    %2291 = vmatprep.subr.mxu0 0.0
    %2292 = vmatpush2.xpose.msra.mxu0 0.0
    %2293 = vmatprep.mubr.f32.mxu0 0.0
    %2294 = vmatmul.mubr.f32.gmra.mxu0 %v2225
    %v2295 = vpop.f32.mrf.mxu0
    %v2296 = vadd.f32 0.0, %v2295
    %v2297 = vpop.f32.mrf.mxu0
    %2298 = vdwg.mxu0
    %2299 = vrot.lane.b32.xlu0 %v2065, 32
    %v2300 = vpop.permute.xlu0 %2299
    %2301 = vrot.lane.b32.xlu0 %v2066, 32
    %v2302 = vpop.permute.xlu0 %2301
    %v2303 = vsel %vm224, %v2300, 0
    %v2305 = vsel %vm224, %v2302, 0
    %2307 = vmatprep.subr.mxu0 0.0
    %2308 = vmatpush1.xpose.msra.mxu0 0.0
    %2309 = vmatprep.subr.mxu0 0.0
    %2310 = vmatpush1.xpose.msra.mxu0 0.0
    %2311 = vmatprep.subr.mxu0 0.0
    %2312 = vmatpush1.xpose.msra.mxu0 0.0
    %2313 = vmatprep.subr.mxu0 0.0
    %2314 = vmatpush1.xpose.msra.mxu0 0.0
    %2315 = vmatprep.subr.mxu0 0.0
    %2316 = vmatpush1.xpose.msra.mxu0 0.0
    %2317 = vmatprep.subr.mxu0 0.0
    %2318 = vmatpush1.xpose.msra.mxu0 0.0
    %2319 = vmatprep.subr.mxu0 0.0
    %2320 = vmatpush1.xpose.msra.mxu0 0.0
    %2321 = vmatprep.subr.mxu0 0.0
    %2322 = vmatpush1.xpose.msra.mxu0 0.0
    %2323 = vmatprep.subr.mxu0 0.0
    %2324 = vmatpush1.xpose.msra.mxu0 0.0
    %2325 = vmatprep.subr.mxu0 0.0
    %2326 = vmatpush1.xpose.msra.mxu0 0.0
    %2327 = vmatprep.subr.mxu0 0.0
    %2328 = vmatpush1.xpose.msra.mxu0 0.0
    %2329 = vmatprep.subr.mxu0 0.0
    %2330 = vmatpush1.xpose.msra.mxu0 0.0
    %2331 = vmatprep.subr.mxu0 0.0
    %2332 = vmatpush1.xpose.msra.mxu0 0.0
    %2333 = vmatprep.subr.mxu0 0.0
    %2334 = vmatpush1.xpose.msra.mxu0 0.0
    %2335 = vmatprep.subr.mxu0 0.0
    %2336 = vmatpush1.xpose.msra.mxu0 0.0
    %2337 = vmatprep.subr.mxu0 0.0
    %2338 = vmatpush1.xpose.msra.mxu0 %v2305
    %2339 = vmatprep.subr.mxu0 0.0
    %2340 = vmatpush2.xpose.msra.mxu0 0.0
    %2341 = vmatprep.subr.mxu0 0.0
    %2342 = vmatpush2.xpose.msra.mxu0 0.0
    %2343 = vmatprep.subr.mxu0 0.0
    %2344 = vmatpush2.xpose.msra.mxu0 0.0
    %2345 = vmatprep.subr.mxu0 0.0
    %2346 = vmatpush2.xpose.msra.mxu0 0.0
    %2347 = vmatprep.subr.mxu0 0.0
    %2348 = vmatpush2.xpose.msra.mxu0 0.0
    %2349 = vmatprep.subr.mxu0 0.0
    %2350 = vmatpush2.xpose.msra.mxu0 0.0
    %2351 = vmatprep.subr.mxu0 0.0
    %2352 = vmatpush2.xpose.msra.mxu0 0.0
    %2353 = vmatprep.subr.mxu0 0.0
    %2354 = vmatpush2.xpose.msra.mxu0 0.0
    %2355 = vmatprep.subr.mxu0 0.0
    %2356 = vmatpush2.xpose.msra.mxu0 0.0
    %2357 = vmatprep.subr.mxu0 0.0
    %2358 = vmatpush2.xpose.msra.mxu0 0.0
    %2359 = vmatprep.subr.mxu0 0.0
    %2360 = vmatpush2.xpose.msra.mxu0 0.0
    %2361 = vmatprep.subr.mxu0 0.0
    %2362 = vmatpush2.xpose.msra.mxu0 0.0
    %2363 = vmatprep.subr.mxu0 0.0
    %2364 = vmatpush2.xpose.msra.mxu0 0.0
    %2365 = vmatprep.subr.mxu0 0.0
    %2366 = vmatpush2.xpose.msra.mxu0 0.0
    %2367 = vmatprep.subr.mxu0 0.0
    %2368 = vmatpush2.xpose.msra.mxu0 0.0
    %2369 = vmatprep.subr.mxu0 0.0
    %2370 = vmatpush2.xpose.msra.mxu0 0.0
    %2371 = vmatprep.mubr.f32.mxu0 0.0
    %2372 = vmatmul.mubr.f32.gmra.mxu0 %v2303
    %v2373 = vpop.f32.mrf.mxu0
    %v2374 = vadd.f32 0.0, %v2373
    %v2375 = vpop.f32.mrf.mxu0
    %2376 = vdwg.mxu0
    %v2378 = vrot.slane %v2218, 6
    %v2381 = vrot.slane %v2296, 4
    %v2384 = vrot.slane %v2374, 2
    %vm2386 = vcmask 1041408
    %v2387 = vsel %vm2386, %v2140, %v2378
    %vm2388 = vcmask 1043456
    %v2389 = vsel %vm2388, %v2387, %v2381
    %vm2390 = vcmask 1045504
    %v2391 = vsel %vm2390, %v2389, %v2384
    %v2392 = vsel %vm1269, %v2391, -inf
    %2393 = vmax.xlane.f32.xlu0 %v2392
    %v2394 = vpop.xlane.xlu0 %2393
    %v2395 = vsub.f32 %v2391, %v2394
    %v2396 = vmul.f32 %v2395, 1.442695
    %v2397 = vpow.pop %v2396
    %v2398 = vsel %vm1269, %v2397, 0.0
    %2399 = vadd.xlane.f32.xlu0 %v2398
    %v2400 = vpop.xlane.xlu0 %2399
    %v2401 = vrcp.pop %v2400
    %v2402 = vmul.f32 %v2397, %v2401
    %v2403 = vld [vmem:[%s8 + $0x48] sm:$0xff]
    %v2404 = vld [vmem:[%s8 + $0x50] sm:$0xff]
    %v2405 = vld [vmem:[%s8 + $0x58] sm:$0xff]
    %v2406 = vld [vmem:[%s8 + $0x60] sm:$0xff]
    %v2408 = vrot.slane %v2402, 2
    %v2409 = vsel %vm1269, %v2408, 0
    %2411 = vmatprep.subr.mxu0 0.0
    %2412 = vmatpush1.msra.mxu0 0.0
    %2413 = vmatprep.subr.mxu0 0.0
    %2414 = vmatpush1.msra.mxu0 0.0
    %2415 = vmatprep.subr.mxu0 0.0
    %2416 = vmatpush1.msra.mxu0 0.0
    %2417 = vmatprep.subr.mxu0 0.0
    %2418 = vmatpush1.msra.mxu0 0.0
    %2419 = vmatprep.subr.mxu0 0.0
    %2420 = vmatpush1.msra.mxu0 0.0
    %2421 = vmatprep.subr.mxu0 0.0
    %2422 = vmatpush1.msra.mxu0 0.0
    %2423 = vmatprep.subr.mxu0 0.0
    %2424 = vmatpush1.msra.mxu0 0.0
    %2425 = vmatprep.subr.mxu0 0.0
    %2426 = vmatpush1.msra.mxu0 0.0
    %2427 = vmatprep.subr.mxu0 0.0
    %2428 = vmatpush1.msra.mxu0 0.0
    %2429 = vmatprep.subr.mxu0 0.0
    %2430 = vmatpush1.msra.mxu0 0.0
    %2431 = vmatprep.subr.mxu0 0.0
    %2432 = vmatpush1.msra.mxu0 0.0
    %2433 = vmatprep.subr.mxu0 0.0
    %2434 = vmatpush1.msra.mxu0 0.0
    %2435 = vmatprep.subr.mxu0 0.0
    %2436 = vmatpush1.msra.mxu0 0.0
    %2437 = vmatprep.subr.mxu0 0.0
    %2438 = vmatpush1.msra.mxu0 0.0
    %2439 = vmatprep.subr.mxu0 0.0
    %2440 = vmatpush1.msra.mxu0 0.0
    %2441 = vmatprep.subr.mxu0 0.0
    %2442 = vmatpush1.msra.mxu0 %v2404
    %2443 = vmatprep.subr.mxu0 0.0
    %2444 = vmatpush2.msra.mxu0 0.0
    %2445 = vmatprep.subr.mxu0 0.0
    %2446 = vmatpush2.msra.mxu0 0.0
    %2447 = vmatprep.subr.mxu0 0.0
    %2448 = vmatpush2.msra.mxu0 0.0
    %2449 = vmatprep.subr.mxu0 0.0
    %2450 = vmatpush2.msra.mxu0 0.0
    %2451 = vmatprep.subr.mxu0 0.0
    %2452 = vmatpush2.msra.mxu0 0.0
    %2453 = vmatprep.subr.mxu0 0.0
    %2454 = vmatpush2.msra.mxu0 0.0
    %2455 = vmatprep.subr.mxu0 0.0
    %2456 = vmatpush2.msra.mxu0 0.0
    %2457 = vmatprep.subr.mxu0 0.0
    %2458 = vmatpush2.msra.mxu0 0.0
    %2459 = vmatprep.subr.mxu0 0.0
    %2460 = vmatpush2.msra.mxu0 0.0
    %2461 = vmatprep.subr.mxu0 0.0
    %2462 = vmatpush2.msra.mxu0 0.0
    %2463 = vmatprep.subr.mxu0 0.0
    %2464 = vmatpush2.msra.mxu0 0.0
    %2465 = vmatprep.subr.mxu0 0.0
    %2466 = vmatpush2.msra.mxu0 0.0
    %2467 = vmatprep.subr.mxu0 0.0
    %2468 = vmatpush2.msra.mxu0 0.0
    %2469 = vmatprep.subr.mxu0 0.0
    %2470 = vmatpush2.msra.mxu0 0.0
    %2471 = vmatprep.subr.mxu0 0.0
    %2472 = vmatpush2.msra.mxu0 0.0
    %2473 = vmatprep.subr.mxu0 0.0
    %2474 = vmatpush2.msra.mxu0 0.0
    %2475 = vmatprep.mubr.f32.mxu0 0.0
    %2476 = vmatmul.mubr.f32.gmra.mxu0 %v2409
    %v2477 = vpop.f32.mrf.mxu0
    %v2478 = vadd.f32 0.0, %v2477
    %v2479 = vpop.f32.mrf.mxu0
    %2480 = vdwg.mxu0
    %v2481 = vsel %vm1269, %v2402, 0
    %2483 = vmatprep.subr.mxu0 0.0
    %2484 = vmatpush1.msra.mxu0 0.0
    %2485 = vmatprep.subr.mxu0 0.0
    %2486 = vmatpush1.msra.mxu0 0.0
    %2487 = vmatprep.subr.mxu0 0.0
    %2488 = vmatpush1.msra.mxu0 0.0
    %2489 = vmatprep.subr.mxu0 0.0
    %2490 = vmatpush1.msra.mxu0 0.0
    %2491 = vmatprep.subr.mxu0 0.0
    %2492 = vmatpush1.msra.mxu0 0.0
    %2493 = vmatprep.subr.mxu0 0.0
    %2494 = vmatpush1.msra.mxu0 0.0
    %2495 = vmatprep.subr.mxu0 0.0
    %2496 = vmatpush1.msra.mxu0 0.0
    %2497 = vmatprep.subr.mxu0 0.0
    %2498 = vmatpush1.msra.mxu0 0.0
    %2499 = vmatprep.subr.mxu0 0.0
    %2500 = vmatpush1.msra.mxu0 0.0
    %2501 = vmatprep.subr.mxu0 0.0
    %2502 = vmatpush1.msra.mxu0 0.0
    %2503 = vmatprep.subr.mxu0 0.0
    %2504 = vmatpush1.msra.mxu0 0.0
    %2505 = vmatprep.subr.mxu0 0.0
    %2506 = vmatpush1.msra.mxu0 0.0
    %2507 = vmatprep.subr.mxu0 0.0
    %2508 = vmatpush1.msra.mxu0 0.0
    %2509 = vmatprep.subr.mxu0 0.0
    %2510 = vmatpush1.msra.mxu0 0.0
    %2511 = vmatprep.subr.mxu0 0.0
    %2512 = vmatpush1.msra.mxu0 0.0
    %2513 = vmatprep.subr.mxu0 0.0
    %2514 = vmatpush1.msra.mxu0 %v2403
    %2515 = vmatprep.subr.mxu0 0.0
    %2516 = vmatpush2.msra.mxu0 0.0
    %2517 = vmatprep.subr.mxu0 0.0
    %2518 = vmatpush2.msra.mxu0 0.0
    %2519 = vmatprep.subr.mxu0 0.0
    %2520 = vmatpush2.msra.mxu0 0.0
    %2521 = vmatprep.subr.mxu0 0.0
    %2522 = vmatpush2.msra.mxu0 0.0
    %2523 = vmatprep.subr.mxu0 0.0
    %2524 = vmatpush2.msra.mxu0 0.0
    %2525 = vmatprep.subr.mxu0 0.0
    %2526 = vmatpush2.msra.mxu0 0.0
    %2527 = vmatprep.subr.mxu0 0.0
    %2528 = vmatpush2.msra.mxu0 0.0
    %2529 = vmatprep.subr.mxu0 0.0
    %2530 = vmatpush2.msra.mxu0 0.0
    %2531 = vmatprep.subr.mxu0 0.0
    %2532 = vmatpush2.msra.mxu0 0.0
    %2533 = vmatprep.subr.mxu0 0.0
    %2534 = vmatpush2.msra.mxu0 0.0
    %2535 = vmatprep.subr.mxu0 0.0
    %2536 = vmatpush2.msra.mxu0 0.0
    %2537 = vmatprep.subr.mxu0 0.0
    %2538 = vmatpush2.msra.mxu0 0.0
    %2539 = vmatprep.subr.mxu0 0.0
    %2540 = vmatpush2.msra.mxu0 0.0
    %2541 = vmatprep.subr.mxu0 0.0
    %2542 = vmatpush2.msra.mxu0 0.0
    %2543 = vmatprep.subr.mxu0 0.0
    %2544 = vmatpush2.msra.mxu0 0.0
    %2545 = vmatprep.subr.mxu0 0.0
    %2546 = vmatpush2.msra.mxu0 0.0
    %2547 = vmatprep.mubr.f32.mxu0 0.0
    %2548 = vmatmul.mubr.f32.gmra.mxu0 %v2481
    %v2549 = vpop.f32.mrf.mxu0
    %v2550 = vadd.f32 %v2478, %v2549
    %v2551 = vpop.f32.mrf.mxu0
    %2552 = vdwg.mxu0
    %v2553 = vrot.slane %v2402, 4
    %v2554 = vsel %vm1269, %v2553, 0
    %2556 = vmatprep.subr.mxu0 0.0
    %2557 = vmatpush1.msra.mxu0 0.0
    %2558 = vmatprep.subr.mxu0 0.0
    %2559 = vmatpush1.msra.mxu0 0.0
    %2560 = vmatprep.subr.mxu0 0.0
    %2561 = vmatpush1.msra.mxu0 0.0
    %2562 = vmatprep.subr.mxu0 0.0
    %2563 = vmatpush1.msra.mxu0 0.0
    %2564 = vmatprep.subr.mxu0 0.0
    %2565 = vmatpush1.msra.mxu0 0.0
    %2566 = vmatprep.subr.mxu0 0.0
    %2567 = vmatpush1.msra.mxu0 0.0
    %2568 = vmatprep.subr.mxu0 0.0
    %2569 = vmatpush1.msra.mxu0 0.0
    %2570 = vmatprep.subr.mxu0 0.0
    %2571 = vmatpush1.msra.mxu0 0.0
    %2572 = vmatprep.subr.mxu0 0.0
    %2573 = vmatpush1.msra.mxu0 0.0
    %2574 = vmatprep.subr.mxu0 0.0
    %2575 = vmatpush1.msra.mxu0 0.0
    %2576 = vmatprep.subr.mxu0 0.0
    %2577 = vmatpush1.msra.mxu0 0.0
    %2578 = vmatprep.subr.mxu0 0.0
    %2579 = vmatpush1.msra.mxu0 0.0
    %2580 = vmatprep.subr.mxu0 0.0
    %2581 = vmatpush1.msra.mxu0 0.0
    %2582 = vmatprep.subr.mxu0 0.0
    %2583 = vmatpush1.msra.mxu0 0.0
    %2584 = vmatprep.subr.mxu0 0.0
    %2585 = vmatpush1.msra.mxu0 0.0
    %2586 = vmatprep.subr.mxu0 0.0
    %2587 = vmatpush1.msra.mxu0 %v2405
    %2588 = vmatprep.subr.mxu0 0.0
    %2589 = vmatpush2.msra.mxu0 0.0
    %2590 = vmatprep.subr.mxu0 0.0
    %2591 = vmatpush2.msra.mxu0 0.0
    %2592 = vmatprep.subr.mxu0 0.0
    %2593 = vmatpush2.msra.mxu0 0.0
    %2594 = vmatprep.subr.mxu0 0.0
    %2595 = vmatpush2.msra.mxu0 0.0
    %2596 = vmatprep.subr.mxu0 0.0
    %2597 = vmatpush2.msra.mxu0 0.0
    %2598 = vmatprep.subr.mxu0 0.0
    %2599 = vmatpush2.msra.mxu0 0.0
    %2600 = vmatprep.subr.mxu0 0.0
    %2601 = vmatpush2.msra.mxu0 0.0
    %2602 = vmatprep.subr.mxu0 0.0
    %2603 = vmatpush2.msra.mxu0 0.0
    %2604 = vmatprep.subr.mxu0 0.0
    %2605 = vmatpush2.msra.mxu0 0.0
    %2606 = vmatprep.subr.mxu0 0.0
    %2607 = vmatpush2.msra.mxu0 0.0
    %2608 = vmatprep.subr.mxu0 0.0
    %2609 = vmatpush2.msra.mxu0 0.0
    %2610 = vmatprep.subr.mxu0 0.0
    %2611 = vmatpush2.msra.mxu0 0.0
    %2612 = vmatprep.subr.mxu0 0.0
    %2613 = vmatpush2.msra.mxu0 0.0
    %2614 = vmatprep.subr.mxu0 0.0
    %2615 = vmatpush2.msra.mxu0 0.0
    %2616 = vmatprep.subr.mxu0 0.0
    %2617 = vmatpush2.msra.mxu0 0.0
    %2618 = vmatprep.subr.mxu0 0.0
    %2619 = vmatpush2.msra.mxu0 0.0
    %2620 = vmatprep.mubr.f32.mxu0 0.0
    %2621 = vmatmul.mubr.f32.gmra.mxu0 %v2554
    %v2622 = vpop.f32.mrf.mxu0
    %v2623 = vadd.f32 0.0, %v2622
    %v2624 = vpop.f32.mrf.mxu0
    %2625 = vdwg.mxu0
    %v2626 = vadd.f32 %v2550, %v2623
    %v2627 = vrot.slane %v2402, 6
    %v2628 = vsel %vm1269, %v2627, 0
    %2630 = vmatprep.subr.mxu0 0.0
    %2631 = vmatpush1.msra.mxu0 0.0
    %2632 = vmatprep.subr.mxu0 0.0
    %2633 = vmatpush1.msra.mxu0 0.0
    %2634 = vmatprep.subr.mxu0 0.0
    %2635 = vmatpush1.msra.mxu0 0.0
    %2636 = vmatprep.subr.mxu0 0.0
    %2637 = vmatpush1.msra.mxu0 0.0
    %2638 = vmatprep.subr.mxu0 0.0
    %2639 = vmatpush1.msra.mxu0 0.0
    %2640 = vmatprep.subr.mxu0 0.0
    %2641 = vmatpush1.msra.mxu0 0.0
    %2642 = vmatprep.subr.mxu0 0.0
    %2643 = vmatpush1.msra.mxu0 0.0
    %2644 = vmatprep.subr.mxu0 0.0
    %2645 = vmatpush1.msra.mxu0 0.0
    %2646 = vmatprep.subr.mxu0 0.0
    %2647 = vmatpush1.msra.mxu0 0.0
    %2648 = vmatprep.subr.mxu0 0.0
    %2649 = vmatpush1.msra.mxu0 0.0
    %2650 = vmatprep.subr.mxu0 0.0
    %2651 = vmatpush1.msra.mxu0 0.0
    %2652 = vmatprep.subr.mxu0 0.0
    %2653 = vmatpush1.msra.mxu0 0.0
    %2654 = vmatprep.subr.mxu0 0.0
    %2655 = vmatpush1.msra.mxu0 0.0
    %2656 = vmatprep.subr.mxu0 0.0
    %2657 = vmatpush1.msra.mxu0 0.0
    %2658 = vmatprep.subr.mxu0 0.0
    %2659 = vmatpush1.msra.mxu0 0.0
    %2660 = vmatprep.subr.mxu0 0.0
    %2661 = vmatpush1.msra.mxu0 %v2406
    %2662 = vmatprep.subr.mxu0 0.0
    %2663 = vmatpush2.msra.mxu0 0.0
    %2664 = vmatprep.subr.mxu0 0.0
    %2665 = vmatpush2.msra.mxu0 0.0
    %2666 = vmatprep.subr.mxu0 0.0
    %2667 = vmatpush2.msra.mxu0 0.0
    %2668 = vmatprep.subr.mxu0 0.0
    %2669 = vmatpush2.msra.mxu0 0.0
    %2670 = vmatprep.subr.mxu0 0.0
    %2671 = vmatpush2.msra.mxu0 0.0
    %2672 = vmatprep.subr.mxu0 0.0
    %2673 = vmatpush2.msra.mxu0 0.0
    %2674 = vmatprep.subr.mxu0 0.0
    %2675 = vmatpush2.msra.mxu0 0.0
    %2676 = vmatprep.subr.mxu0 0.0
    %2677 = vmatpush2.msra.mxu0 0.0
    %2678 = vmatprep.subr.mxu0 0.0
    %2679 = vmatpush2.msra.mxu0 0.0
    %2680 = vmatprep.subr.mxu0 0.0
    %2681 = vmatpush2.msra.mxu0 0.0
    %2682 = vmatprep.subr.mxu0 0.0
    %2683 = vmatpush2.msra.mxu0 0.0
    %2684 = vmatprep.subr.mxu0 0.0
    %2685 = vmatpush2.msra.mxu0 0.0
    %2686 = vmatprep.subr.mxu0 0.0
    %2687 = vmatpush2.msra.mxu0 0.0
    %2688 = vmatprep.subr.mxu0 0.0
    %2689 = vmatpush2.msra.mxu0 0.0
    %2690 = vmatprep.subr.mxu0 0.0
    %2691 = vmatpush2.msra.mxu0 0.0
    %2692 = vmatprep.subr.mxu0 0.0
    %2693 = vmatpush2.msra.mxu0 0.0
    %2694 = vmatprep.mubr.f32.mxu0 0.0
    %2695 = vmatmul.mubr.f32.gmra.mxu0 %v2628
    %v2696 = vpop.f32.mrf.mxu0
    %v2697 = vadd.f32 0.0, %v2696
    %v2698 = vpop.f32.mrf.mxu0
    %2699 = vdwg.mxu0
    %v2700 = vadd.f32 %v2626, %v2697
    %v2701 = vld [vmem:[%s7 + $0x4] sm:$0x1]
    %v2702 = vlaneseq
    %v2703 = vshrl.u32 %v2702, 7
    %v2704 = vsub.s32 0, %v2703
    %v2705 = vrot.slane %v2701, %v2704
    %v2706 = vadd.f32 %v2700, %v2705
    %v2707 = vtanh.pop %v2706
    %v2708 = vld [vmem:[%s8 + $0x68] sm:$0xff]
    %vm2709 = vcmask 58368
    %v2710 = vsel %vm2709, %v2707, -inf
    %2711 = vmax.xlane.f32.xlu0 %v2710
    %v2712 = vpop.xlane.xlu0 %2711
    %v2713 = vsub.f32 %v2707, %v2712
    %v2714 = vmul.f32 %v2713, 1.442695
    %v2715 = vpow.pop %v2714
    %v2716 = vsel %vm2709, %v2715, 0.0
    %2717 = vadd.xlane.f32.xlu0 %v2716
    %v2718 = vpop.xlane.xlu0 %2717
    %v2719 = vrcp.pop %v2718
    %v2720 = vmul.f32 %v2715, %v2719
    %v2722 = vsel %vm1269, %v2720, 0
    %2724 = vmatprep.subr.mxu0 0.0
    %2725 = vmatpush1.msra.mxu0 0.0
    %2726 = vmatprep.subr.mxu0 0.0
    %2727 = vmatpush1.msra.mxu0 0.0
    %2728 = vmatprep.subr.mxu0 0.0
    %2729 = vmatpush1.msra.mxu0 0.0
    %2730 = vmatprep.subr.mxu0 0.0
    %2731 = vmatpush1.msra.mxu0 0.0
    %2732 = vmatprep.subr.mxu0 0.0
    %2733 = vmatpush1.msra.mxu0 0.0
    %2734 = vmatprep.subr.mxu0 0.0
    %2735 = vmatpush1.msra.mxu0 0.0
    %2736 = vmatprep.subr.mxu0 0.0
    %2737 = vmatpush1.msra.mxu0 0.0
    %2738 = vmatprep.subr.mxu0 0.0
    %2739 = vmatpush1.msra.mxu0 0.0
    %2740 = vmatprep.subr.mxu0 0.0
    %2741 = vmatpush1.msra.mxu0 0.0
    %2742 = vmatprep.subr.mxu0 0.0
    %2743 = vmatpush1.msra.mxu0 0.0
    %2744 = vmatprep.subr.mxu0 0.0
    %2745 = vmatpush1.msra.mxu0 0.0
    %2746 = vmatprep.subr.mxu0 0.0
    %2747 = vmatpush1.msra.mxu0 0.0
    %2748 = vmatprep.subr.mxu0 0.0
    %2749 = vmatpush1.msra.mxu0 0.0
    %2750 = vmatprep.subr.mxu0 0.0
    %2751 = vmatpush1.msra.mxu0 0.0
    %2752 = vmatprep.subr.mxu0 0.0
    %2753 = vmatpush1.msra.mxu0 0.0
    %2754 = vmatprep.subr.mxu0 0.0
    %2755 = vmatpush1.msra.mxu0 %v2708
    %2756 = vmatprep.subr.mxu0 0.0
    %2757 = vmatpush2.msra.mxu0 0.0
    %2758 = vmatprep.subr.mxu0 0.0
    %2759 = vmatpush2.msra.mxu0 0.0
    %2760 = vmatprep.subr.mxu0 0.0
    %2761 = vmatpush2.msra.mxu0 0.0
    %2762 = vmatprep.subr.mxu0 0.0
    %2763 = vmatpush2.msra.mxu0 0.0
    %2764 = vmatprep.subr.mxu0 0.0
    %2765 = vmatpush2.msra.mxu0 0.0
    %2766 = vmatprep.subr.mxu0 0.0
    %2767 = vmatpush2.msra.mxu0 0.0
    %2768 = vmatprep.subr.mxu0 0.0
    %2769 = vmatpush2.msra.mxu0 0.0
    %2770 = vmatprep.subr.mxu0 0.0
    %2771 = vmatpush2.msra.mxu0 0.0
    %2772 = vmatprep.subr.mxu0 0.0
    %2773 = vmatpush2.msra.mxu0 0.0
    %2774 = vmatprep.subr.mxu0 0.0
    %2775 = vmatpush2.msra.mxu0 0.0
    %2776 = vmatprep.subr.mxu0 0.0
    %2777 = vmatpush2.msra.mxu0 0.0
    %2778 = vmatprep.subr.mxu0 0.0
    %2779 = vmatpush2.msra.mxu0 0.0
    %2780 = vmatprep.subr.mxu0 0.0
    %2781 = vmatpush2.msra.mxu0 0.0
    %2782 = vmatprep.subr.mxu0 0.0
    %2783 = vmatpush2.msra.mxu0 0.0
    %2784 = vmatprep.subr.mxu0 0.0
    %2785 = vmatpush2.msra.mxu0 0.0
    %2786 = vmatprep.subr.mxu0 0.0
    %2787 = vmatpush2.msra.mxu0 0.0
    %2788 = vmatprep.mubr.f32.mxu0 0.0
    %2789 = vmatmul.mubr.f32.gmra.mxu0 %v2722
    %v2790 = vpop.f32.mrf.mxu0
    %v2791 = vadd.f32 0.0, %v2790
    %v2792 = vpop.f32.mrf.mxu0
    %2793 = vdwg.mxu0
    %v2794 = vtanh.pop %v2791
    %vm2795 = vcmask 254976
    %2796 = vst.msk [vmem:[#allocation2] sm:$0x3] %vm2795, %v2794
    // Predicated region
    $region38: #{gst_forward.1} parent=1 // pred_check
      _
    $region39: #{gst_forward.1} parent=1 // pred_check_branch
      %2798 = sbr.rel (0) target = $region41
    $region40: #{gst_forward.1} parent=1 // pred_region
      %s2800 = ssub.s32 32, 32
      %2801 = vsyncadd [#allocation3], %s2800
      %s2803 = sshll.u32 [#allocation2], 4
      %s2804 = int_to_ptr.vmem [resolvable:$true] %s2803
      %2806 = dma.vmem_to_hbm [thread:$0]  %s2804, 32, %s9, [#allocation3]
    $region41: #{gst_forward.1} parent=1 // pred_fallthru
      _
    // Predicated region
    $region42: #{gst_forward.1} parent=1 // pred_check
      _
    $region43: #{gst_forward.1} parent=1 // pred_check_branch
      %2808 = sbr.rel (0) target = $region45
    $region44: #{gst_forward.1} parent=1 // pred_region
      %2809 = dma.done [#allocation3], 32
    $region45: #{gst_forward.1} parent=1 // pred_fallthru
      _
    %2810 = vsyncpa [#allocation3], 1

</llo_original>
